<compile_context>
chip_gen: v7x
topology: tpu7x:2x2x1
jax: 0.10.0
libtpu: 0.0.40
codegen_flags: <defaults>
</compile_context>

<pallas_src>
import jax
import jax.numpy as jnp
from jax import lax
from jax.experimental import pallas as pl
from jax.experimental.pallas import tpu as pltpu


def _pick_batch_tile(batch):
    """Largest tile (<= 8) dividing `batch` that still leaves >= 2 grid steps."""
    for bt in (8, 4, 2):
        if batch % bt == 0 and batch // bt >= 2:
            return bt
    return 1


def _affine_relu_pool(y, scale, shift, bt, h, w, cout):
    """Folded-BN affine + ReLU + 2x2 max-pool on a flat conv output.

    y: (bt*h*w, cout) f32 matmul result.  Returns (bt, h//2, w//2, cout).
    """
    ho, wo = h // 2, w // 2
    y = y * scale + shift                      # folded BatchNorm (affine)
    y = jnp.maximum(y, 0.0)                    # ReLU
    y = y.reshape(bt * ho, 2, wo, 2, cout)     # MaxPool2d(2, 2)
    y = jnp.max(y, axis=3)
    y = jnp.max(y, axis=1)
    return y.reshape(bt, ho, wo, cout)


def _conv_block(x, w_ref, scale_ref, shift_ref, padw_ref):
    """conv3x3 'same' -> folded BN -> ReLU -> maxpool2x2, fully on-chip.

    x:        (bt, h, w, cin)    activation value (vregs/VMEM)
    w_ref:    (9*cin, cout)      conv weights with the 3x3 taps folded into K
    scale_ref/shift_ref: (1, cout) folded BN affine
    padw_ref: (bt, h, w+2, cin)  persistent VMEM scratch, W-halo only
    returns:  (bt, h//2, w//2, cout)
    """
    bt, h, w, cin = x.shape
    cout = w_ref.shape[1]

    # Re-zero only the two W-halo columns each call (cheap, and correct even
    # when the batch grid axis is split across TensorCores -- a
    # program_id==0-gated init would be skipped by the second core).
    zcol = jnp.zeros((bt, h, 1, cin), jnp.float32)
    padw_ref[:, :, 0:1, :] = zcol
    padw_ref[:, :, w + 1:w + 2, :] = zcol
    padw_ref[:, :, 1:w + 1, :] = x

    # 3 W-shifted taps come from the halo buffer; the 3 H shifts are done on
    # values (leading-dim slice + one zero row -> vreg re-indexing, no extra
    # VMEM round trip).  Tap order (dh, dw, cin) matches w_ref's K ordering.
    zrow = jnp.zeros((bt, 1, w, cin), jnp.float32)
    wtaps = [padw_ref[:, :, dw:dw + w, :] for dw in range(3)]
    taps = []
    for dh in range(3):
        for dw in range(3):
            t = wtaps[dw]
            if dh == 0:    # out[i] = x[i-1], zero at i == 0
                t = jnp.concatenate([zrow, t[:, :h - 1, :, :]], axis=1)
            elif dh == 2:  # out[i] = x[i+1], zero at i == h-1
                t = jnp.concatenate([t[:, 1:, :, :], zrow], axis=1)
            taps.append(t)

    # Single deep-K MXU matmul: K = 9*cin.
    col = jnp.concatenate(taps, axis=-1).reshape(bt * h * w, 9 * cin)
    y = jnp.dot(col, w_ref[...], preferred_element_type=jnp.float32)
    return _affine_relu_pool(y, scale_ref[...], shift_ref[...], bt, h, w, cout)


def make_params(key, num_images):
    """Deterministic synthetic parameters: 4 conv/BN blocks."""
    channels = [num_images, 32, 64, 64, 128]
    params = []
    for i in range(4):
        cin, cout = channels[i], channels[i + 1]
        key, k1, k2, k3, k4 = jax.random.split(key, 5)
        fan_in = cin * 9
        w = jax.random.normal(k1, (3, 3, cin, cout), jnp.float32) / jnp.sqrt(fan_in)
        b = 0.01 * jax.random.normal(k2, (cout,), jnp.float32)
        gamma = 1.0 + 0.1 * jax.random.normal(k3, (cout,), jnp.float32)
        beta = 0.1 * jax.random.normal(k4, (cout,), jnp.float32)
        mean = jnp.zeros((cout,), jnp.float32)   # running_mean
        var = jnp.ones((cout,), jnp.float32)     # running_var
        params.append((w, b, gamma, beta, mean, var))
    return params


def cnn_forward(x_nchw, params, eps=1e-5):
    x = jnp.transpose(x_nchw, (0, 2, 3, 1))                 # NCHW -> NHWC
    B, H, W, c0 = x.shape
    assert H % 16 == 0 and W % 16 == 0, "four 2x2 pools need H, W % 16 == 0"

    # Fold BN (eval-mode running stats) + conv bias into a per-channel affine
    # and fold the 3x3 taps into the matmul K axis: (3,3,Cin,Cout)->(9*Cin,Cout).
    k1 = 9 * c0
    k1p = ((k1 + 127) // 128) * 128              # layer-1 K padded lane-dense
    chans = [c0]
    flat_args = []
    for li, (w, b, gamma, beta, mean, var) in enumerate(params):
        cin, cout = w.shape[2], w.shape[3]
        scale = gamma / jnp.sqrt(var + eps)
        shift = (b - mean) * scale + beta
        wk = w.reshape(9 * cin, cout)
        if li == 0:
            wk = jnp.pad(wk, ((0, k1p - k1), (0, 0)))
        flat_args += [wk, scale[None, :], shift[None, :]]
        chans.append(cout)

    # Layer-1 im2col built lane-dense in the wrapper (Cin=4 would be 9 tiny
    # 4-lane shuffles per step in-kernel).  Zero-padded lanes contribute 0 to
    # the matmul.  (At very large batch*resolution this trades extra layer-1
    # input HBM bytes; switch back to in-kernel taps if that ever dominates.)
    xp = jnp.pad(x, ((0, 0), (1, 1), (1, 1), (0, 0)))
    col1 = jnp.concatenate(
        [xp[:, dh:dh + H, dw:dw + W, :] for dh in range(3) for dw in range(3)],
        axis=-1).reshape(B, H * W, k1)
    col1 = jnp.pad(col1, ((0, 0), (0, 0), (0, k1p - k1)))

    hs = [H // (2 ** i) for i in range(5)]
    ws = [W // (2 ** i) for i in range(5)]
    hf, wf, cf = hs[4], ws[4], chans[4]

    bt = _pick_batch_tile(B)

    in_specs = [pl.BlockSpec((bt, H * W, k1p), lambda b: (b, 0, 0))]
    for i in range(4):
        cin, cout = chans[i], chans[i + 1]
        kdim = k1p if i == 0 else 9 * cin
        # NOTE: these params are grid-invariant; pipeline_mode=pl.Buffered(1)
        # would drop their second pipeline buffer (~0.5 MiB) -- left at the
        # default here since total VMEM use is ~1.5 MiB at this size.
        in_specs += [
            pl.BlockSpec((kdim, cout), lambda b: (0, 0)),    # conv weights
            pl.BlockSpec((1, cout), lambda b: (0, 0)),       # BN scale
            pl.BlockSpec((1, cout), lambda b: (0, 0)),       # BN shift
        ]

    # W-halo scratch for layers 2..4 (layer 1 uses the prebuilt im2col).
    scratch = [pltpu.VMEM((bt, hs[i], ws[i] + 2, chans[i]), jnp.float32)
               for i in range(1, 4)]

    def kernel(col1_ref,
               w1_ref, s1_ref, t1_ref,
               w2_ref, s2_ref, t2_ref,
               w3_ref, s3_ref, t3_ref,
               w4_ref, s4_ref, t4_ref,
               o_ref,
               pad2, pad3, pad4):
        # Layer 1: lane-dense im2col streamed straight from HBM -> one matmul.
        col = col1_ref[...].reshape(bt * H * W, k1p)
        y = jnp.dot(col, w1_ref[...], preferred_element_type=jnp.float32)
        a = _affine_relu_pool(y, s1_ref[...], t1_ref[...], bt, H, W, chans[1])
        # Layers 2..4: fused on-chip; activations never leave VMEM/vregs.
        a = _conv_block(a, w2_ref, s2_ref, t2_ref, pad2)
        a = _conv_block(a, w3_ref, s3_ref, t3_ref, pad3)
        a = _conv_block(a, w4_ref, s4_ref, t4_ref, pad4)
        o_ref[...] = a.astype(o_ref.dtype)      # lane-dense (bt, hf, wf, 128)

    out = pl.pallas_call(
        kernel,
        out_shape=jax.ShapeDtypeStruct((B, hf, wf, cf), x.dtype),
        grid_spec=pltpu.PrefetchScalarGridSpec(
            num_scalar_prefetch=0,
            grid=(B // bt,),
            in_specs=in_specs,
            out_specs=pl.BlockSpec((bt, hf, wf, cf), lambda b: (b, 0, 0, 0)),
            scratch_shapes=scratch),
        compiler_params=pltpu.CompilerParams(
            # Batch tiles are independent; "parallel" lets megacore parts
            # split the axis and is a no-op on single-TC v5e/v6e.
            # TODO(synk): on v7x, verify real 2-TC sharding (CORE_PARALLEL).
            dimension_semantics=("parallel",)),
    )(col1, *flat_args)

    # Flatten in NCHW order to match torch.nn.Flatten on a (B, C, H, W) map.
    out = jnp.transpose(out, (0, 3, 1, 2))
    return out.reshape(B, -1)


def cnn_reference(x_nchw, params, eps=1e-5):
    """Pure-JAX (XLA) reference of the same forward pass."""
    x = jnp.transpose(x_nchw, (0, 2, 3, 1))
    for (w, b, gamma, beta, mean, var) in params:
        y = lax.conv_general_dilated(
            x, w, window_strides=(1, 1), padding="SAME",
            dimension_numbers=("NHWC", "HWIO", "NHWC"))
        y = y + b
        y = (y - mean) / jnp.sqrt(var + eps) * gamma + beta
        y = jnp.maximum(y, 0.0)
        y = lax.reduce_window(y, -jnp.inf, lax.max,
                              (1, 2, 2, 1), (1, 2, 2, 1), "VALID")
        x = y
    x = jnp.transpose(x, (0, 3, 1, 2))
    return x.reshape(x.shape[0], -1)


if __name__ == "__main__":
    key = jax.random.PRNGKey(0)
    num_images = 4          # stacked frames (in_channels of conv_1)
    B, H, W = 2, 16, 16     # small spatial size; 4 pools -> 1x1x128 features

    kx, kp = jax.random.split(key)
    x = jax.random.normal(kx, (B, num_images, H, W), jnp.float32)
    params = make_params(kp, num_images)

    out = jax.jit(cnn_forward)(x, params)
    out = jax.block_until_ready(out)

    assert out.shape == (B, 128), out.shape
    ref = cnn_reference(x, params)
    err = float(jnp.max(jnp.abs(out - ref)))
    if err > 1e-3:
        raise AssertionError(f"Pallas/XLA mismatch, max abs err = {err}")
    print("KERNEL_OK")
</pallas_src>

<mosaic_0001>
module attributes {stable_mosaic.version = 11 : i64} {
  func.func @kernel(%arg0: i32, %arg1: memref<1x256x128xf32, #tpu.memory_space<vmem>>, %arg2: memref<128x32xf32, #tpu.memory_space<vmem>>, %arg3: memref<1x32xf32, #tpu.memory_space<vmem>>, %arg4: memref<1x32xf32, #tpu.memory_space<vmem>>, %arg5: memref<288x64xf32, #tpu.memory_space<vmem>>, %arg6: memref<1x64xf32, #tpu.memory_space<vmem>>, %arg7: memref<1x64xf32, #tpu.memory_space<vmem>>, %arg8: memref<576x64xf32, #tpu.memory_space<vmem>>, %arg9: memref<1x64xf32, #tpu.memory_space<vmem>>, %arg10: memref<1x64xf32, #tpu.memory_space<vmem>>, %arg11: memref<576x128xf32, #tpu.memory_space<vmem>>, %arg12: memref<1x128xf32, #tpu.memory_space<vmem>>, %arg13: memref<1x128xf32, #tpu.memory_space<vmem>>, %arg14: memref<1x1x1x128xf32, #tpu.memory_space<vmem>>, %arg15: memref<1x8x10x32xf32, #tpu.memory_space<vmem>>, %arg16: memref<1x4x6x64xf32, #tpu.memory_space<vmem>>, %arg17: memref<1x2x4x64xf32, #tpu.memory_space<vmem>>) attributes {dimension_semantics = [#tpu.dimension_semantics<parallel>], iteration_bounds = array<i64: 2>, scalar_prefetch = 0 : i64, scratch_operands = 3 : i64, tpu.core_type = #tpu.core_type<tc>, window_params = [{transform_indices = @transform_0, window_bounds = array<i64: 1, 256, 128>}, {pipeline_mode = #tpu.pipeline_mode<synchronous>, transform_indices = @transform_1, window_bounds = array<i64: 128, 32>}, {pipeline_mode = #tpu.pipeline_mode<synchronous>, transform_indices = @transform_2, window_bounds = array<i64: 1, 32>}, {pipeline_mode = #tpu.pipeline_mode<synchronous>, transform_indices = @transform_3, window_bounds = array<i64: 1, 32>}, {pipeline_mode = #tpu.pipeline_mode<synchronous>, transform_indices = @transform_4, window_bounds = array<i64: 288, 64>}, {pipeline_mode = #tpu.pipeline_mode<synchronous>, transform_indices = @transform_5, window_bounds = array<i64: 1, 64>}, {pipeline_mode = #tpu.pipeline_mode<synchronous>, transform_indices = @transform_6, window_bounds = array<i64: 1, 64>}, {pipeline_mode = #tpu.pipeline_mode<synchronous>, transform_indices = @transform_7, window_bounds = array<i64: 576, 64>}, {pipeline_mode = #tpu.pipeline_mode<synchronous>, transform_indices = @transform_8, window_bounds = array<i64: 1, 64>}, {pipeline_mode = #tpu.pipeline_mode<synchronous>, transform_indices = @transform_9, window_bounds = array<i64: 1, 64>}, {pipeline_mode = #tpu.pipeline_mode<synchronous>, transform_indices = @transform_10, window_bounds = array<i64: 576, 128>}, {pipeline_mode = #tpu.pipeline_mode<synchronous>, transform_indices = @transform_11, window_bounds = array<i64: 1, 128>}, {pipeline_mode = #tpu.pipeline_mode<synchronous>, transform_indices = @transform_12, window_bounds = array<i64: 1, 128>}, {transform_indices = @transform_13, window_bounds = array<i64: 1, 1, 1, 128>}]} {
    %c0 = arith.constant 0 : index
    %c0_0 = arith.constant 0 : index
    %c0_1 = arith.constant 0 : index
    %0 = vector.load %arg1[%c0, %c0_0, %c0_1] : memref<1x256x128xf32, #tpu.memory_space<vmem>>, vector<1x256x128xf32>
    %1 = vector.shape_cast %0 : vector<1x256x128xf32> to vector<256x128xf32>
    %c0_2 = arith.constant 0 : index
    %c0_3 = arith.constant 0 : index
    %2 = vector.load %arg2[%c0_2, %c0_3] : memref<128x32xf32, #tpu.memory_space<vmem>>, vector<128x32xf32>
    %cst = arith.constant dense<0.000000e+00> : vector<256x32xf32>
    %3 = tpu.matmul %1, %2, %cst {dimension_numbers = #tpu.dot_dimension_numbers<[1], [0], [0], [1], [0, 0, 1, 1], [], []>} : vector<256x128xf32>, vector<128x32xf32>, vector<256x32xf32> -> vector<256x32xf32>
    %c0_4 = arith.constant 0 : index
    %c0_5 = arith.constant 0 : index
    %4 = vector.load %arg3[%c0_4, %c0_5] : memref<1x32xf32, #tpu.memory_space<vmem>>, vector<1x32xf32>
    %c0_6 = arith.constant 0 : index
    %c0_7 = arith.constant 0 : index
    %5 = vector.load %arg4[%c0_6, %c0_7] : memref<1x32xf32, #tpu.memory_space<vmem>>, vector<1x32xf32>
    %6 = vector.broadcast %4 : vector<1x32xf32> to vector<256x32xf32>
    %7 = arith.mulf %3, %6 : vector<256x32xf32>
    %8 = vector.broadcast %5 : vector<1x32xf32> to vector<256x32xf32>
    %9 = arith.addf %7, %8 : vector<256x32xf32>
    %cst_8 = arith.constant 0.000000e+00 : f32
    %10 = vector.broadcast %cst_8 : f32 to vector<256x32xf32>
    %11 = arith.maximumf %9, %10 : vector<256x32xf32>
    %12 = vector.shape_cast %11 : vector<256x32xf32> to vector<8x2x8x2x32xf32>
    %cst_9 = arith.constant dense<0xFF800000> : vector<8x2x8x32xf32>
    %13 = vector.multi_reduction <maximumf>, %12, %cst_9 [3] : vector<8x2x8x2x32xf32> to vector<8x2x8x32xf32>
    %cst_10 = arith.constant dense<0xFF800000> : vector<8x8x32xf32>
    %14 = vector.multi_reduction <maximumf>, %13, %cst_10 [1] : vector<8x2x8x32xf32> to vector<8x8x32xf32>
    %15 = vector.shape_cast %14 : vector<8x8x32xf32> to vector<1x8x8x32xf32>
    %cst_11 = arith.constant 0.000000e+00 : f32
    %16 = vector.broadcast %cst_11 : f32 to vector<1x8x1x32xf32>
    %c0_12 = arith.constant 0 : index
    %c0_13 = arith.constant 0 : index
    %c0_14 = arith.constant 0 : index
    %c0_15 = arith.constant 0 : index
    %17 = vector.load %arg15[%c0_12, %c0_13, %c0_14, %c0_15] : memref<1x8x10x32xf32, #tpu.memory_space<vmem>>, vector<1x8x1x32xf32>
    tpu.vector_store %arg15[%c0_12, %c0_13, %c0_14, %c0_15], %16 {strides = array<i32>} : memref<1x8x10x32xf32, #tpu.memory_space<vmem>>, vector<1x8x1x32xf32>,
    %c0_16 = arith.constant 0 : index
    %c0_17 = arith.constant 0 : index
    %c9 = arith.constant 9 : index
    %c0_18 = arith.constant 0 : index
    %18 = vector.load %arg15[%c0_16, %c0_17, %c9, %c0_18] : memref<1x8x10x32xf32, #tpu.memory_space<vmem>>, vector<1x8x1x32xf32>
    tpu.vector_store %arg15[%c0_16, %c0_17, %c9, %c0_18], %16 {strides = array<i32>} : memref<1x8x10x32xf32, #tpu.memory_space<vmem>>, vector<1x8x1x32xf32>,
    %c0_19 = arith.constant 0 : index
    %c0_20 = arith.constant 0 : index
    %c1 = arith.constant 1 : index
    %c0_21 = arith.constant 0 : index
    %19 = vector.load %arg15[%c0_19, %c0_20, %c1, %c0_21] : memref<1x8x10x32xf32, #tpu.memory_space<vmem>>, vector<1x8x8x32xf32>
    tpu.vector_store %arg15[%c0_19, %c0_20, %c1, %c0_21], %15 {strides = array<i32>} : memref<1x8x10x32xf32, #tpu.memory_space<vmem>>, vector<1x8x8x32xf32>,
    %cst_22 = arith.constant 0.000000e+00 : f32
    %20 = vector.broadcast %cst_22 : f32 to vector<1x1x8x32xf32>
    %c0_23 = arith.constant 0 : index
    %c0_24 = arith.constant 0 : index
    %c0_25 = arith.constant 0 : index
    %c0_26 = arith.constant 0 : index
    %21 = vector.load %arg15[%c0_23, %c0_24, %c0_25, %c0_26] : memref<1x8x10x32xf32, #tpu.memory_space<vmem>>, vector<1x8x8x32xf32>
    %c0_27 = arith.constant 0 : index
    %c0_28 = arith.constant 0 : index
    %c1_29 = arith.constant 1 : index
    %c0_30 = arith.constant 0 : index
    %22 = vector.load %arg15[%c0_27, %c0_28, %c1_29, %c0_30] : memref<1x8x10x32xf32, #tpu.memory_space<vmem>>, vector<1x8x8x32xf32>
    %c0_31 = arith.constant 0 : index
    %c0_32 = arith.constant 0 : index
    %c2 = arith.constant 2 : index
    %c0_33 = arith.constant 0 : index
    %23 = vector.load %arg15[%c0_31, %c0_32, %c2, %c0_33] : memref<1x8x10x32xf32, #tpu.memory_space<vmem>>, vector<1x8x8x32xf32>
    %24 = vector.extract_strided_slice %21 {offsets = [0, 0, 0, 0], sizes = [1, 7, 8, 32], strides = [1, 1, 1, 1]} : vector<1x8x8x32xf32> to vector<1x7x8x32xf32>
    %25 = tpu.concatenate %20, %24 in 1 : vector<1x1x8x32xf32>, vector<1x7x8x32xf32> -> vector<1x8x8x32xf32>
    %26 = vector.extract_strided_slice %22 {offsets = [0, 0, 0, 0], sizes = [1, 7, 8, 32], strides = [1, 1, 1, 1]} : vector<1x8x8x32xf32> to vector<1x7x8x32xf32>
    %27 = tpu.concatenate %20, %26 in 1 : vector<1x1x8x32xf32>, vector<1x7x8x32xf32> -> vector<1x8x8x32xf32>
    %28 = vector.extract_strided_slice %23 {offsets = [0, 0, 0, 0], sizes = [1, 7, 8, 32], strides = [1, 1, 1, 1]} : vector<1x8x8x32xf32> to vector<1x7x8x32xf32>
    %29 = tpu.concatenate %20, %28 in 1 : vector<1x1x8x32xf32>, vector<1x7x8x32xf32> -> vector<1x8x8x32xf32>
    %30 = vector.extract_strided_slice %21 {offsets = [0, 1, 0, 0], sizes = [1, 7, 8, 32], strides = [1, 1, 1, 1]} : vector<1x8x8x32xf32> to vector<1x7x8x32xf32>
    %31 = tpu.concatenate %30, %20 in 1 : vector<1x7x8x32xf32>, vector<1x1x8x32xf32> -> vector<1x8x8x32xf32>
    %32 = vector.extract_strided_slice %22 {offsets = [0, 1, 0, 0], sizes = [1, 7, 8, 32], strides = [1, 1, 1, 1]} : vector<1x8x8x32xf32> to vector<1x7x8x32xf32>
    %33 = tpu.concatenate %32, %20 in 1 : vector<1x7x8x32xf32>, vector<1x1x8x32xf32> -> vector<1x8x8x32xf32>
    %34 = vector.extract_strided_slice %23 {offsets = [0, 1, 0, 0], sizes = [1, 7, 8, 32], strides = [1, 1, 1, 1]} : vector<1x8x8x32xf32> to vector<1x7x8x32xf32>
    %35 = tpu.concatenate %34, %20 in 1 : vector<1x7x8x32xf32>, vector<1x1x8x32xf32> -> vector<1x8x8x32xf32>
    %36 = tpu.concatenate %25, %27, %29, %21, %22, %23, %31, %33, %35 in 3 : vector<1x8x8x32xf32>, vector<1x8x8x32xf32>, vector<1x8x8x32xf32>, vector<1x8x8x32xf32>, vector<1x8x8x32xf32>, vector<1x8x8x32xf32>, vector<1x8x8x32xf32>, vector<1x8x8x32xf32>, vector<1x8x8x32xf32> -> vector<1x8x8x288xf32>
    %37 = vector.shape_cast %36 : vector<1x8x8x288xf32> to vector<64x288xf32>
    %c0_34 = arith.constant 0 : index
    %c0_35 = arith.constant 0 : index
    %38 = vector.load %arg5[%c0_34, %c0_35] : memref<288x64xf32, #tpu.memory_space<vmem>>, vector<288x64xf32>
    %cst_36 = arith.constant dense<0.000000e+00> : vector<64x64xf32>
    %39 = tpu.matmul %37, %38, %cst_36 {dimension_numbers = #tpu.dot_dimension_numbers<[1], [0], [0], [1], [0, 0, 1, 1], [], []>} : vector<64x288xf32>, vector<288x64xf32>, vector<64x64xf32> -> vector<64x64xf32>
    %c0_37 = arith.constant 0 : index
    %c0_38 = arith.constant 0 : index
    %40 = vector.load %arg6[%c0_37, %c0_38] : memref<1x64xf32, #tpu.memory_space<vmem>>, vector<1x64xf32>
    %c0_39 = arith.constant 0 : index
    %c0_40 = arith.constant 0 : index
    %41 = vector.load %arg7[%c0_39, %c0_40] : memref<1x64xf32, #tpu.memory_space<vmem>>, vector<1x64xf32>
    %42 = vector.broadcast %40 : vector<1x64xf32> to vector<64x64xf32>
    %43 = arith.mulf %39, %42 : vector<64x64xf32>
    %44 = vector.broadcast %41 : vector<1x64xf32> to vector<64x64xf32>
    %45 = arith.addf %43, %44 : vector<64x64xf32>
    %cst_41 = arith.constant 0.000000e+00 : f32
    %46 = vector.broadcast %cst_41 : f32 to vector<64x64xf32>
    %47 = arith.maximumf %45, %46 : vector<64x64xf32>
    %48 = vector.shape_cast %47 : vector<64x64xf32> to vector<4x2x4x2x64xf32>
    %cst_42 = arith.constant dense<0xFF800000> : vector<4x2x4x64xf32>
    %49 = vector.multi_reduction <maximumf>, %48, %cst_42 [3] : vector<4x2x4x2x64xf32> to vector<4x2x4x64xf32>
    %cst_43 = arith.constant dense<0xFF800000> : vector<4x4x64xf32>
    %50 = vector.multi_reduction <maximumf>, %49, %cst_43 [1] : vector<4x2x4x64xf32> to vector<4x4x64xf32>
    %51 = vector.shape_cast %50 : vector<4x4x64xf32> to vector<1x4x4x64xf32>
    %cst_44 = arith.constant 0.000000e+00 : f32
    %52 = vector.broadcast %cst_44 : f32 to vector<1x4x1x64xf32>
    %c0_45 = arith.constant 0 : index
    %c0_46 = arith.constant 0 : index
    %c0_47 = arith.constant 0 : index
    %c0_48 = arith.constant 0 : index
    %53 = vector.load %arg16[%c0_45, %c0_46, %c0_47, %c0_48] : memref<1x4x6x64xf32, #tpu.memory_space<vmem>>, vector<1x4x1x64xf32>
    tpu.vector_store %arg16[%c0_45, %c0_46, %c0_47, %c0_48], %52 {strides = array<i32>} : memref<1x4x6x64xf32, #tpu.memory_space<vmem>>, vector<1x4x1x64xf32>,
    %c0_49 = arith.constant 0 : index
    %c0_50 = arith.constant 0 : index
    %c5 = arith.constant 5 : index
    %c0_51 = arith.constant 0 : index
    %54 = vector.load %arg16[%c0_49, %c0_50, %c5, %c0_51] : memref<1x4x6x64xf32, #tpu.memory_space<vmem>>, vector<1x4x1x64xf32>
    tpu.vector_store %arg16[%c0_49, %c0_50, %c5, %c0_51], %52 {strides = array<i32>} : memref<1x4x6x64xf32, #tpu.memory_space<vmem>>, vector<1x4x1x64xf32>,
    %c0_52 = arith.constant 0 : index
    %c0_53 = arith.constant 0 : index
    %c1_54 = arith.constant 1 : index
    %c0_55 = arith.constant 0 : index
    %55 = vector.load %arg16[%c0_52, %c0_53, %c1_54, %c0_55] : memref<1x4x6x64xf32, #tpu.memory_space<vmem>>, vector<1x4x4x64xf32>
    tpu.vector_store %arg16[%c0_52, %c0_53, %c1_54, %c0_55], %51 {strides = array<i32>} : memref<1x4x6x64xf32, #tpu.memory_space<vmem>>, vector<1x4x4x64xf32>,
    %cst_56 = arith.constant 0.000000e+00 : f32
    %56 = vector.broadcast %cst_56 : f32 to vector<1x1x4x64xf32>
    %c0_57 = arith.constant 0 : index
    %c0_58 = arith.constant 0 : index
    %c0_59 = arith.constant 0 : index
    %c0_60 = arith.constant 0 : index
    %57 = vector.load %arg16[%c0_57, %c0_58, %c0_59, %c0_60] : memref<1x4x6x64xf32, #tpu.memory_space<vmem>>, vector<1x4x4x64xf32>
    %c0_61 = arith.constant 0 : index
    %c0_62 = arith.constant 0 : index
    %c1_63 = arith.constant 1 : index
    %c0_64 = arith.constant 0 : index
    %58 = vector.load %arg16[%c0_61, %c0_62, %c1_63, %c0_64] : memref<1x4x6x64xf32, #tpu.memory_space<vmem>>, vector<1x4x4x64xf32>
    %c0_65 = arith.constant 0 : index
    %c0_66 = arith.constant 0 : index
    %c2_67 = arith.constant 2 : index
    %c0_68 = arith.constant 0 : index
    %59 = vector.load %arg16[%c0_65, %c0_66, %c2_67, %c0_68] : memref<1x4x6x64xf32, #tpu.memory_space<vmem>>, vector<1x4x4x64xf32>
    %60 = vector.extract_strided_slice %57 {offsets = [0, 0, 0, 0], sizes = [1, 3, 4, 64], strides = [1, 1, 1, 1]} : vector<1x4x4x64xf32> to vector<1x3x4x64xf32>
    %61 = tpu.concatenate %56, %60 in 1 : vector<1x1x4x64xf32>, vector<1x3x4x64xf32> -> vector<1x4x4x64xf32>
    %62 = vector.extract_strided_slice %58 {offsets = [0, 0, 0, 0], sizes = [1, 3, 4, 64], strides = [1, 1, 1, 1]} : vector<1x4x4x64xf32> to vector<1x3x4x64xf32>
    %63 = tpu.concatenate %56, %62 in 1 : vector<1x1x4x64xf32>, vector<1x3x4x64xf32> -> vector<1x4x4x64xf32>
    %64 = vector.extract_strided_slice %59 {offsets = [0, 0, 0, 0], sizes = [1, 3, 4, 64], strides = [1, 1, 1, 1]} : vector<1x4x4x64xf32> to vector<1x3x4x64xf32>
    %65 = tpu.concatenate %56, %64 in 1 : vector<1x1x4x64xf32>, vector<1x3x4x64xf32> -> vector<1x4x4x64xf32>
    %66 = vector.extract_strided_slice %57 {offsets = [0, 1, 0, 0], sizes = [1, 3, 4, 64], strides = [1, 1, 1, 1]} : vector<1x4x4x64xf32> to vector<1x3x4x64xf32>
    %67 = tpu.concatenate %66, %56 in 1 : vector<1x3x4x64xf32>, vector<1x1x4x64xf32> -> vector<1x4x4x64xf32>
    %68 = vector.extract_strided_slice %58 {offsets = [0, 1, 0, 0], sizes = [1, 3, 4, 64], strides = [1, 1, 1, 1]} : vector<1x4x4x64xf32> to vector<1x3x4x64xf32>
    %69 = tpu.concatenate %68, %56 in 1 : vector<1x3x4x64xf32>, vector<1x1x4x64xf32> -> vector<1x4x4x64xf32>
    %70 = vector.extract_strided_slice %59 {offsets = [0, 1, 0, 0], sizes = [1, 3, 4, 64], strides = [1, 1, 1, 1]} : vector<1x4x4x64xf32> to vector<1x3x4x64xf32>
    %71 = tpu.concatenate %70, %56 in 1 : vector<1x3x4x64xf32>, vector<1x1x4x64xf32> -> vector<1x4x4x64xf32>
    %72 = tpu.concatenate %61, %63, %65, %57, %58, %59, %67, %69, %71 in 3 : vector<1x4x4x64xf32>, vector<1x4x4x64xf32>, vector<1x4x4x64xf32>, vector<1x4x4x64xf32>, vector<1x4x4x64xf32>, vector<1x4x4x64xf32>, vector<1x4x4x64xf32>, vector<1x4x4x64xf32>, vector<1x4x4x64xf32> -> vector<1x4x4x576xf32>
    %73 = vector.shape_cast %72 : vector<1x4x4x576xf32> to vector<16x576xf32>
    %c0_69 = arith.constant 0 : index
    %c0_70 = arith.constant 0 : index
    %74 = vector.load %arg8[%c0_69, %c0_70] : memref<576x64xf32, #tpu.memory_space<vmem>>, vector<576x64xf32>
    %cst_71 = arith.constant dense<0.000000e+00> : vector<16x64xf32>
    %75 = tpu.matmul %73, %74, %cst_71 {dimension_numbers = #tpu.dot_dimension_numbers<[1], [0], [0], [1], [0, 0, 1, 1], [], []>} : vector<16x576xf32>, vector<576x64xf32>, vector<16x64xf32> -> vector<16x64xf32>
    %c0_72 = arith.constant 0 : index
    %c0_73 = arith.constant 0 : index
    %76 = vector.load %arg9[%c0_72, %c0_73] : memref<1x64xf32, #tpu.memory_space<vmem>>, vector<1x64xf32>
    %c0_74 = arith.constant 0 : index
    %c0_75 = arith.constant 0 : index
    %77 = vector.load %arg10[%c0_74, %c0_75] : memref<1x64xf32, #tpu.memory_space<vmem>>, vector<1x64xf32>
    %78 = vector.broadcast %76 : vector<1x64xf32> to vector<16x64xf32>
    %79 = arith.mulf %75, %78 : vector<16x64xf32>
    %80 = vector.broadcast %77 : vector<1x64xf32> to vector<16x64xf32>
    %81 = arith.addf %79, %80 : vector<16x64xf32>
    %cst_76 = arith.constant 0.000000e+00 : f32
    %82 = vector.broadcast %cst_76 : f32 to vector<16x64xf32>
    %83 = arith.maximumf %81, %82 : vector<16x64xf32>
    %84 = vector.shape_cast %83 : vector<16x64xf32> to vector<2x2x2x2x64xf32>
    %cst_77 = arith.constant dense<0xFF800000> : vector<2x2x2x64xf32>
    %85 = vector.multi_reduction <maximumf>, %84, %cst_77 [3] : vector<2x2x2x2x64xf32> to vector<2x2x2x64xf32>
    %cst_78 = arith.constant dense<0xFF800000> : vector<2x2x64xf32>
    %86 = vector.multi_reduction <maximumf>, %85, %cst_78 [1] : vector<2x2x2x64xf32> to vector<2x2x64xf32>
    %87 = vector.shape_cast %86 : vector<2x2x64xf32> to vector<1x2x2x64xf32>
    %cst_79 = arith.constant 0.000000e+00 : f32
    %88 = vector.broadcast %cst_79 : f32 to vector<1x2x1x64xf32>
    %c0_80 = arith.constant 0 : index
    %c0_81 = arith.constant 0 : index
    %c0_82 = arith.constant 0 : index
    %c0_83 = arith.constant 0 : index
    %89 = vector.load %arg17[%c0_80, %c0_81, %c0_82, %c0_83] : memref<1x2x4x64xf32, #tpu.memory_space<vmem>>, vector<1x2x1x64xf32>
    tpu.vector_store %arg17[%c0_80, %c0_81, %c0_82, %c0_83], %88 {strides = array<i32>} : memref<1x2x4x64xf32, #tpu.memory_space<vmem>>, vector<1x2x1x64xf32>,
    %c0_84 = arith.constant 0 : index
    %c0_85 = arith.constant 0 : index
    %c3 = arith.constant 3 : index
    %c0_86 = arith.constant 0 : index
    %90 = vector.load %arg17[%c0_84, %c0_85, %c3, %c0_86] : memref<1x2x4x64xf32, #tpu.memory_space<vmem>>, vector<1x2x1x64xf32>
    tpu.vector_store %arg17[%c0_84, %c0_85, %c3, %c0_86], %88 {strides = array<i32>} : memref<1x2x4x64xf32, #tpu.memory_space<vmem>>, vector<1x2x1x64xf32>,
    %c0_87 = arith.constant 0 : index
    %c0_88 = arith.constant 0 : index
    %c1_89 = arith.constant 1 : index
    %c0_90 = arith.constant 0 : index
    %91 = vector.load %arg17[%c0_87, %c0_88, %c1_89, %c0_90] : memref<1x2x4x64xf32, #tpu.memory_space<vmem>>, vector<1x2x2x64xf32>
    tpu.vector_store %arg17[%c0_87, %c0_88, %c1_89, %c0_90], %87 {strides = array<i32>} : memref<1x2x4x64xf32, #tpu.memory_space<vmem>>, vector<1x2x2x64xf32>,
    %cst_91 = arith.constant 0.000000e+00 : f32
    %92 = vector.broadcast %cst_91 : f32 to vector<1x1x2x64xf32>
    %c0_92 = arith.constant 0 : index
    %c0_93 = arith.constant 0 : index
    %c0_94 = arith.constant 0 : index
    %c0_95 = arith.constant 0 : index
    %93 = vector.load %arg17[%c0_92, %c0_93, %c0_94, %c0_95] : memref<1x2x4x64xf32, #tpu.memory_space<vmem>>, vector<1x2x2x64xf32>
    %c0_96 = arith.constant 0 : index
    %c0_97 = arith.constant 0 : index
    %c1_98 = arith.constant 1 : index
    %c0_99 = arith.constant 0 : index
    %94 = vector.load %arg17[%c0_96, %c0_97, %c1_98, %c0_99] : memref<1x2x4x64xf32, #tpu.memory_space<vmem>>, vector<1x2x2x64xf32>
    %c0_100 = arith.constant 0 : index
    %c0_101 = arith.constant 0 : index
    %c2_102 = arith.constant 2 : index
    %c0_103 = arith.constant 0 : index
    %95 = vector.load %arg17[%c0_100, %c0_101, %c2_102, %c0_103] : memref<1x2x4x64xf32, #tpu.memory_space<vmem>>, vector<1x2x2x64xf32>
    %96 = vector.extract_strided_slice %93 {offsets = [0, 0, 0, 0], sizes = [1, 1, 2, 64], strides = [1, 1, 1, 1]} : vector<1x2x2x64xf32> to vector<1x1x2x64xf32>
    %97 = tpu.concatenate %92, %96 in 1 : vector<1x1x2x64xf32>, vector<1x1x2x64xf32> -> vector<1x2x2x64xf32>
    %98 = vector.extract_strided_slice %94 {offsets = [0, 0, 0, 0], sizes = [1, 1, 2, 64], strides = [1, 1, 1, 1]} : vector<1x2x2x64xf32> to vector<1x1x2x64xf32>
    %99 = tpu.concatenate %92, %98 in 1 : vector<1x1x2x64xf32>, vector<1x1x2x64xf32> -> vector<1x2x2x64xf32>
    %100 = vector.extract_strided_slice %95 {offsets = [0, 0, 0, 0], sizes = [1, 1, 2, 64], strides = [1, 1, 1, 1]} : vector<1x2x2x64xf32> to vector<1x1x2x64xf32>
    %101 = tpu.concatenate %92, %100 in 1 : vector<1x1x2x64xf32>, vector<1x1x2x64xf32> -> vector<1x2x2x64xf32>
    %102 = vector.extract_strided_slice %93 {offsets = [0, 1, 0, 0], sizes = [1, 1, 2, 64], strides = [1, 1, 1, 1]} : vector<1x2x2x64xf32> to vector<1x1x2x64xf32>
    %103 = tpu.concatenate %102, %92 in 1 : vector<1x1x2x64xf32>, vector<1x1x2x64xf32> -> vector<1x2x2x64xf32>
    %104 = vector.extract_strided_slice %94 {offsets = [0, 1, 0, 0], sizes = [1, 1, 2, 64], strides = [1, 1, 1, 1]} : vector<1x2x2x64xf32> to vector<1x1x2x64xf32>
    %105 = tpu.concatenate %104, %92 in 1 : vector<1x1x2x64xf32>, vector<1x1x2x64xf32> -> vector<1x2x2x64xf32>
    %106 = vector.extract_strided_slice %95 {offsets = [0, 1, 0, 0], sizes = [1, 1, 2, 64], strides = [1, 1, 1, 1]} : vector<1x2x2x64xf32> to vector<1x1x2x64xf32>
    %107 = tpu.concatenate %106, %92 in 1 : vector<1x1x2x64xf32>, vector<1x1x2x64xf32> -> vector<1x2x2x64xf32>
    %108 = tpu.concatenate %97, %99, %101, %93, %94, %95, %103, %105, %107 in 3 : vector<1x2x2x64xf32>, vector<1x2x2x64xf32>, vector<1x2x2x64xf32>, vector<1x2x2x64xf32>, vector<1x2x2x64xf32>, vector<1x2x2x64xf32>, vector<1x2x2x64xf32>, vector<1x2x2x64xf32>, vector<1x2x2x64xf32> -> vector<1x2x2x576xf32>
    %109 = vector.shape_cast %108 : vector<1x2x2x576xf32> to vector<4x576xf32>
    %c0_104 = arith.constant 0 : index
    %c0_105 = arith.constant 0 : index
    %110 = vector.load %arg11[%c0_104, %c0_105] : memref<576x128xf32, #tpu.memory_space<vmem>>, vector<576x128xf32>
    %cst_106 = arith.constant dense<0.000000e+00> : vector<4x128xf32>
    %111 = tpu.matmul %109, %110, %cst_106 {dimension_numbers = #tpu.dot_dimension_numbers<[1], [0], [0], [1], [0, 0, 1, 1], [], []>} : vector<4x576xf32>, vector<576x128xf32>, vector<4x128xf32> -> vector<4x128xf32>
    %c0_107 = arith.constant 0 : index
    %c0_108 = arith.constant 0 : index
    %112 = vector.load %arg12[%c0_107, %c0_108] : memref<1x128xf32, #tpu.memory_space<vmem>>, vector<1x128xf32>
    %c0_109 = arith.constant 0 : index
    %c0_110 = arith.constant 0 : index
    %113 = vector.load %arg13[%c0_109, %c0_110] : memref<1x128xf32, #tpu.memory_space<vmem>>, vector<1x128xf32>
    %114 = vector.broadcast %112 : vector<1x128xf32> to vector<4x128xf32>
    %115 = arith.mulf %111, %114 : vector<4x128xf32>
    %116 = vector.broadcast %113 : vector<1x128xf32> to vector<4x128xf32>
    %117 = arith.addf %115, %116 : vector<4x128xf32>
    %cst_111 = arith.constant 0.000000e+00 : f32
    %118 = vector.broadcast %cst_111 : f32 to vector<4x128xf32>
    %119 = arith.maximumf %117, %118 : vector<4x128xf32>
    %120 = vector.shape_cast %119 : vector<4x128xf32> to vector<1x2x1x2x128xf32>
    %cst_112 = arith.constant dense<0xFF800000> : vector<1x2x1x128xf32>
    %121 = vector.multi_reduction <maximumf>, %120, %cst_112 [3] : vector<1x2x1x2x128xf32> to vector<1x2x1x128xf32>
    %cst_113 = arith.constant dense<0xFF800000> : vector<1x1x128xf32>
    %122 = vector.multi_reduction <maximumf>, %121, %cst_113 [1] : vector<1x2x1x128xf32> to vector<1x1x128xf32>
    %123 = vector.shape_cast %122 : vector<1x1x128xf32> to vector<1x1x1x128xf32>
    %c0_114 = arith.constant 0 : index
    %c0_115 = arith.constant 0 : index
    %c0_116 = arith.constant 0 : index
    %c0_117 = arith.constant 0 : index
    %124 = vector.load %arg14[%c0_114, %c0_115, %c0_116, %c0_117] : memref<1x1x1x128xf32, #tpu.memory_space<vmem>>, vector<1x1x1x128xf32>
    tpu.vector_store %arg14[%c0_114, %c0_115, %c0_116, %c0_117], %123 {strides = array<i32>} : memref<1x1x1x128xf32, #tpu.memory_space<vmem>>, vector<1x1x1x128xf32>,
    return
  }
  func.func @transform_0(%arg0: i32) -> (i32, i32, i32) {
    %c0_i32 = arith.constant 0 : i32
    %c0_i32_0 = arith.constant 0 : i32
    %c0_i32_1 = arith.constant 0 : i32
    return %arg0, %c0_i32, %c0_i32_0 : i32, i32, i32
  }
  func.func @transform_1(%arg0: i32) -> (i32, i32) {
    %c0_i32 = arith.constant 0 : i32
    %c0_i32_0 = arith.constant 0 : i32
    %c0_i32_1 = arith.constant 0 : i32
    return %c0_i32, %c0_i32_0 : i32, i32
  }
  func.func @transform_2(%arg0: i32) -> (i32, i32) {
    %c0_i32 = arith.constant 0 : i32
    %c0_i32_0 = arith.constant 0 : i32
    %c0_i32_1 = arith.constant 0 : i32
    return %c0_i32, %c0_i32_0 : i32, i32
  }
  func.func @transform_3(%arg0: i32) -> (i32, i32) {
    %c0_i32 = arith.constant 0 : i32
    %c0_i32_0 = arith.constant 0 : i32
    %c0_i32_1 = arith.constant 0 : i32
    return %c0_i32, %c0_i32_0 : i32, i32
  }
  func.func @transform_4(%arg0: i32) -> (i32, i32) {
    %c0_i32 = arith.constant 0 : i32
    %c0_i32_0 = arith.constant 0 : i32
    %c0_i32_1 = arith.constant 0 : i32
    return %c0_i32, %c0_i32_0 : i32, i32
  }
  func.func @transform_5(%arg0: i32) -> (i32, i32) {
    %c0_i32 = arith.constant 0 : i32
    %c0_i32_0 = arith.constant 0 : i32
    %c0_i32_1 = arith.constant 0 : i32
    return %c0_i32, %c0_i32_0 : i32, i32
  }
  func.func @transform_6(%arg0: i32) -> (i32, i32) {
    %c0_i32 = arith.constant 0 : i32
    %c0_i32_0 = arith.constant 0 : i32
    %c0_i32_1 = arith.constant 0 : i32
    return %c0_i32, %c0_i32_0 : i32, i32
  }
  func.func @transform_7(%arg0: i32) -> (i32, i32) {
    %c0_i32 = arith.constant 0 : i32
    %c0_i32_0 = arith.constant 0 : i32
    %c0_i32_1 = arith.constant 0 : i32
    return %c0_i32, %c0_i32_0 : i32, i32
  }
  func.func @transform_8(%arg0: i32) -> (i32, i32) {
    %c0_i32 = arith.constant 0 : i32
    %c0_i32_0 = arith.constant 0 : i32
    %c0_i32_1 = arith.constant 0 : i32
    return %c0_i32, %c0_i32_0 : i32, i32
  }
  func.func @transform_9(%arg0: i32) -> (i32, i32) {
    %c0_i32 = arith.constant 0 : i32
    %c0_i32_0 = arith.constant 0 : i32
    %c0_i32_1 = arith.constant 0 : i32
    return %c0_i32, %c0_i32_0 : i32, i32
  }
  func.func @transform_10(%arg0: i32) -> (i32, i32) {
    %c0_i32 = arith.constant 0 : i32
    %c0_i32_0 = arith.constant 0 : i32
    %c0_i32_1 = arith.constant 0 : i32
    return %c0_i32, %c0_i32_0 : i32, i32
  }
  func.func @transform_11(%arg0: i32) -> (i32, i32) {
    %c0_i32 = arith.constant 0 : i32
    %c0_i32_0 = arith.constant 0 : i32
    %c0_i32_1 = arith.constant 0 : i32
    return %c0_i32, %c0_i32_0 : i32, i32
  }
  func.func @transform_12(%arg0: i32) -> (i32, i32) {
    %c0_i32 = arith.constant 0 : i32
    %c0_i32_0 = arith.constant 0 : i32
    %c0_i32_1 = arith.constant 0 : i32
    return %c0_i32, %c0_i32_0 : i32, i32
  }
  func.func @transform_13(%arg0: i32) -> (i32, i32, i32, i32) {
    %c0_i32 = arith.constant 0 : i32
    %c0_i32_0 = arith.constant 0 : i32
    %c0_i32_1 = arith.constant 0 : i32
    %c0_i32_2 = arith.constant 0 : i32
    return %arg0, %c0_i32, %c0_i32_0, %c0_i32_1 : i32, i32, i32, i32
  }
}

</mosaic_0001>

<llo_original>
// kernel: cnn_forward.1
$region0: #{cnn_forward.1}
  #allocation0 [shape = 'u32[]', space=smem, size = 0x4, offset = 0x4, fixed_abs, tag = 'smem constant byte address 0x4 - core index']
  #allocation1 [shape = 'u32[144,128]{1,0:T(1,128)}', space=vmem, size = 0x12000, scoped, tag = 'internal scratch']
  #allocation2 [shape = 'f32[1,8,10,32]{3,2,1,0:T(8,128)}', space=vmem, size = 0x10000, scoped, tag = 'scratch operand']
  #allocation3 [shape = 'f32[1,4,6,64]{3,2,1,0:T(8,128)}', space=vmem, size = 0x4000, scoped, tag = 'scratch operand']
  #allocation4 [shape = 'f32[1,2,4,64]{3,2,1,0:T(4,128)}', space=vmem, size = 0x1000, scoped, tag = 'scratch operand']
  %s0 = inlined_call_operand.vmem [shape: f32[2,256,128], index: 0, kind: input, shape index: {}]
  %s1 = inlined_call_operand.vmem [shape: f32[128,32], index: 1, kind: input, shape index: {}]
  %s2 = inlined_call_operand.vmem [shape: f32[1,32], index: 2, kind: input, shape index: {}]
  %s3 = inlined_call_operand.vmem [shape: f32[1,32], index: 3, kind: input, shape index: {}]
  %s4 = inlined_call_operand.vmem [shape: f32[288,64], index: 4, kind: input, shape index: {}]
  %s5 = inlined_call_operand.vmem [shape: f32[1,64], index: 5, kind: input, shape index: {}]
  %s6 = inlined_call_operand.vmem [shape: f32[1,64], index: 6, kind: input, shape index: {}]
  %s7 = inlined_call_operand.vmem [shape: f32[576,64], index: 7, kind: input, shape index: {}]
  %s8 = inlined_call_operand.vmem [shape: f32[1,64], index: 8, kind: input, shape index: {}]
  %s9 = inlined_call_operand.vmem [shape: f32[1,64], index: 9, kind: input, shape index: {}]
  %s10 = inlined_call_operand.vmem [shape: f32[576,128], index: 10, kind: input, shape index: {}]
  %s11 = inlined_call_operand.vmem [shape: f32[1,128], index: 11, kind: input, shape index: {}]
  %s12 = inlined_call_operand.vmem [shape: f32[1,128], index: 12, kind: input, shape index: {}]
  %s13 = inlined_call_operand.hbm [shape: f32[2,1,1,128], index: 13, kind: output, shape index: {}]
  %s14 = sld [smem:[#allocation0]]
  $region85: #{cnn_forward.1} parent=0
    _
  %s16 = ssub.s32 1, %s14
  %s17 = scalar_select 0, %s16, %s14
  $region1: #{cnn_forward.1} parent=0
    #allocation5 [shape = 'u8[1024]{0}', space=vmem, size = 0x400, scoped, tag = 'output window, operand 0']
    #allocation6 [shape = 's32[2]{0}', space=sflag, size = 0x8, scoped, tag = 'scoped memory for cnn_forward.1']
    %18 = vsyncpa [#allocation6], 0
    %s19 = scalar_lea.sflag [#allocation6], 1
    %20 = vsyncpa %s19, 0
    loop: start=0, step=1, limit=4
    $region2: #{cnn_forward.1} parent=1 // loop_pre_header
      _
    $region3: #{cnn_forward.1} parent=1 // loop_header
      %s22 = sphi 0, %s26
      %p23 = scmp.ge.s32.totalorder %s22, 4
      %s32 = sphi 0, %s34
      %s35 = sphi 0, %s32
      %s36 = sphi 0, %s35
      %s52 = sphi 0, %s36
      %s56 = sphi 0, %s56
      %s58 = sphi 0, %s56
      %s59 = sphi 0, %s58
      %s73 = sphi 0, %s59
      %s77 = sphi 0, %s77
      %s79 = sphi 0, %s77
      %s80 = sphi 0, %s79
      %s94 = sphi 0, %s80
      %s98 = sphi 0, %s98
      %s100 = sphi 0, %s98
      %s101 = sphi 0, %s100
      %s115 = sphi 0, %s101
      %s119 = sphi 0, %s119
      %s121 = sphi 0, %s119
      %s122 = sphi 0, %s121
      %s136 = sphi 0, %s122
      %s140 = sphi 0, %s140
      %s142 = sphi 0, %s140
      %s143 = sphi 0, %s142
      %s157 = sphi 0, %s143
      %s161 = sphi 0, %s161
      %s163 = sphi 0, %s161
      %s164 = sphi 0, %s163
      %s178 = sphi 0, %s164
      %s182 = sphi 0, %s182
      %s184 = sphi 0, %s182
      %s185 = sphi 0, %s184
      %s199 = sphi 0, %s185
      %s203 = sphi 0, %s203
      %s205 = sphi 0, %s203
      %s206 = sphi 0, %s205
      %s220 = sphi 0, %s206
      %s224 = sphi 0, %s224
      %s226 = sphi 0, %s224
      %s227 = sphi 0, %s226
      %s241 = sphi 0, %s227
      %s245 = sphi 0, %s245
      %s247 = sphi 0, %s245
      %s248 = sphi 0, %s247
      %s262 = sphi 0, %s248
      %s266 = sphi 0, %s266
      %s268 = sphi 0, %s266
      %s269 = sphi 0, %s268
      %s283 = sphi 0, %s269
      %s287 = sphi 0, %s287
      %s289 = sphi 0, %s287
      %s290 = sphi 0, %s289
      %s304 = sphi 0, %s290
      %s310 = sphi 0, %s312
      %s313 = sphi 0, %s310
      %s314 = sphi 0, %s313
      %s330 = sphi 0, %s314
    $region4: #{cnn_forward.1} parent=1 // loop_header_branch
      %25 = sbr.rel (%p23) target = $region8
    $region5: #{cnn_forward.1} parent=1 // loop_body
      %s27 = ssub.s32 %s22, 1
      %s28 = ssub.s32 %s22, 2
      %s29 = sadd.s32 %s22, 1
      %s30 = ssub.s32 %s22, %s29
      %p31 = scmp.eq.s32.totalorder %s30, 0
      %s33 = sadd.s32 %s32, 1
      %s34 = scalar_select %p31, %s32, %s33
      %p37 = pneg %p31
      %p38 = scmp.eq.s32.totalorder %s22, 1
      %p39 = por %p37, %p38
      %p40 = scmp.ne.s32.totalorder %s32, %s35
      %p41 = scmp.eq.s32.totalorder %s22, 0
      %p42 = por %p40, %p41
      %p43 = scmp.ne.s32.totalorder %s32, %s35
      %p44 = scmp.eq.s32.totalorder %s27, 1
      %p45 = por %p43, %p44
      %p46 = scmp.ne.s32.totalorder %s35, %s36
      %p47 = scmp.eq.s32.totalorder %s27, 0
      %p48 = por %p46, %p47
      %p49 = scmp.ne.s32.totalorder %s35, %s36
      %p50 = scmp.eq.s32.totalorder %s28, 1
      %p51 = por %p49, %p50
      %p53 = scmp.ne.s32.totalorder %s36, %s52
      %p54 = scmp.eq.s32.totalorder %s28, 0
      %p55 = por %p53, %p54
      %s57 = sadd.s32 %s56, 1
      %p60 = scmp.eq.s32.totalorder %s22, 1
      %p61 = scmp.ne.s32.totalorder %s56, %s58
      %p62 = scmp.eq.s32.totalorder %s22, 0
      %p63 = por %p61, %p62
      %p64 = scmp.ne.s32.totalorder %s56, %s58
      %p65 = scmp.eq.s32.totalorder %s27, 1
      %p66 = por %p64, %p65
      %p67 = scmp.ne.s32.totalorder %s58, %s59
      %p68 = scmp.eq.s32.totalorder %s27, 0
      %p69 = por %p67, %p68
      %p70 = scmp.ne.s32.totalorder %s58, %s59
      %p71 = scmp.eq.s32.totalorder %s28, 1
      %p72 = por %p70, %p71
      %p74 = scmp.ne.s32.totalorder %s59, %s73
      %p75 = scmp.eq.s32.totalorder %s28, 0
      %p76 = por %p74, %p75
      %s78 = sadd.s32 %s77, 1
      %p81 = scmp.eq.s32.totalorder %s22, 1
      %p82 = scmp.ne.s32.totalorder %s77, %s79
      %p83 = scmp.eq.s32.totalorder %s22, 0
      %p84 = por %p82, %p83
      %p85 = scmp.ne.s32.totalorder %s77, %s79
      %p86 = scmp.eq.s32.totalorder %s27, 1
      %p87 = por %p85, %p86
      %p88 = scmp.ne.s32.totalorder %s79, %s80
      %p89 = scmp.eq.s32.totalorder %s27, 0
      %p90 = por %p88, %p89
      %p91 = scmp.ne.s32.totalorder %s79, %s80
      %p92 = scmp.eq.s32.totalorder %s28, 1
      %p93 = por %p91, %p92
      %p95 = scmp.ne.s32.totalorder %s80, %s94
      %p96 = scmp.eq.s32.totalorder %s28, 0
      %p97 = por %p95, %p96
      %s99 = sadd.s32 %s98, 1
      %p102 = scmp.eq.s32.totalorder %s22, 1
      %p103 = scmp.ne.s32.totalorder %s98, %s100
      %p104 = scmp.eq.s32.totalorder %s22, 0
      %p105 = por %p103, %p104
      %p106 = scmp.ne.s32.totalorder %s98, %s100
      %p107 = scmp.eq.s32.totalorder %s27, 1
      %p108 = por %p106, %p107
      %p109 = scmp.ne.s32.totalorder %s100, %s101
      %p110 = scmp.eq.s32.totalorder %s27, 0
      %p111 = por %p109, %p110
      %p112 = scmp.ne.s32.totalorder %s100, %s101
      %p113 = scmp.eq.s32.totalorder %s28, 1
      %p114 = por %p112, %p113
      %p116 = scmp.ne.s32.totalorder %s101, %s115
      %p117 = scmp.eq.s32.totalorder %s28, 0
      %p118 = por %p116, %p117
      %s120 = sadd.s32 %s119, 1
      %p123 = scmp.eq.s32.totalorder %s22, 1
      %p124 = scmp.ne.s32.totalorder %s119, %s121
      %p125 = scmp.eq.s32.totalorder %s22, 0
      %p126 = por %p124, %p125
      %p127 = scmp.ne.s32.totalorder %s119, %s121
      %p128 = scmp.eq.s32.totalorder %s27, 1
      %p129 = por %p127, %p128
      %p130 = scmp.ne.s32.totalorder %s121, %s122
      %p131 = scmp.eq.s32.totalorder %s27, 0
      %p132 = por %p130, %p131
      %p133 = scmp.ne.s32.totalorder %s121, %s122
      %p134 = scmp.eq.s32.totalorder %s28, 1
      %p135 = por %p133, %p134
      %p137 = scmp.ne.s32.totalorder %s122, %s136
      %p138 = scmp.eq.s32.totalorder %s28, 0
      %p139 = por %p137, %p138
      %s141 = sadd.s32 %s140, 1
      %p144 = scmp.eq.s32.totalorder %s22, 1
      %p145 = scmp.ne.s32.totalorder %s140, %s142
      %p146 = scmp.eq.s32.totalorder %s22, 0
      %p147 = por %p145, %p146
      %p148 = scmp.ne.s32.totalorder %s140, %s142
      %p149 = scmp.eq.s32.totalorder %s27, 1
      %p150 = por %p148, %p149
      %p151 = scmp.ne.s32.totalorder %s142, %s143
      %p152 = scmp.eq.s32.totalorder %s27, 0
      %p153 = por %p151, %p152
      %p154 = scmp.ne.s32.totalorder %s142, %s143
      %p155 = scmp.eq.s32.totalorder %s28, 1
      %p156 = por %p154, %p155
      %p158 = scmp.ne.s32.totalorder %s143, %s157
      %p159 = scmp.eq.s32.totalorder %s28, 0
      %p160 = por %p158, %p159
      %s162 = sadd.s32 %s161, 1
      %p165 = scmp.eq.s32.totalorder %s22, 1
      %p166 = scmp.ne.s32.totalorder %s161, %s163
      %p167 = scmp.eq.s32.totalorder %s22, 0
      %p168 = por %p166, %p167
      %p169 = scmp.ne.s32.totalorder %s161, %s163
      %p170 = scmp.eq.s32.totalorder %s27, 1
      %p171 = por %p169, %p170
      %p172 = scmp.ne.s32.totalorder %s163, %s164
      %p173 = scmp.eq.s32.totalorder %s27, 0
      %p174 = por %p172, %p173
      %p175 = scmp.ne.s32.totalorder %s163, %s164
      %p176 = scmp.eq.s32.totalorder %s28, 1
      %p177 = por %p175, %p176
      %p179 = scmp.ne.s32.totalorder %s164, %s178
      %p180 = scmp.eq.s32.totalorder %s28, 0
      %p181 = por %p179, %p180
      %s183 = sadd.s32 %s182, 1
      %p186 = scmp.eq.s32.totalorder %s22, 1
      %p187 = scmp.ne.s32.totalorder %s182, %s184
      %p188 = scmp.eq.s32.totalorder %s22, 0
      %p189 = por %p187, %p188
      %p190 = scmp.ne.s32.totalorder %s182, %s184
      %p191 = scmp.eq.s32.totalorder %s27, 1
      %p192 = por %p190, %p191
      %p193 = scmp.ne.s32.totalorder %s184, %s185
      %p194 = scmp.eq.s32.totalorder %s27, 0
      %p195 = por %p193, %p194
      %p196 = scmp.ne.s32.totalorder %s184, %s185
      %p197 = scmp.eq.s32.totalorder %s28, 1
      %p198 = por %p196, %p197
      %p200 = scmp.ne.s32.totalorder %s185, %s199
      %p201 = scmp.eq.s32.totalorder %s28, 0
      %p202 = por %p200, %p201
      %s204 = sadd.s32 %s203, 1
      %p207 = scmp.eq.s32.totalorder %s22, 1
      %p208 = scmp.ne.s32.totalorder %s203, %s205
      %p209 = scmp.eq.s32.totalorder %s22, 0
      %p210 = por %p208, %p209
      %p211 = scmp.ne.s32.totalorder %s203, %s205
      %p212 = scmp.eq.s32.totalorder %s27, 1
      %p213 = por %p211, %p212
      %p214 = scmp.ne.s32.totalorder %s205, %s206
      %p215 = scmp.eq.s32.totalorder %s27, 0
      %p216 = por %p214, %p215
      %p217 = scmp.ne.s32.totalorder %s205, %s206
      %p218 = scmp.eq.s32.totalorder %s28, 1
      %p219 = por %p217, %p218
      %p221 = scmp.ne.s32.totalorder %s206, %s220
      %p222 = scmp.eq.s32.totalorder %s28, 0
      %p223 = por %p221, %p222
      %s225 = sadd.s32 %s224, 1
      %p228 = scmp.eq.s32.totalorder %s22, 1
      %p229 = scmp.ne.s32.totalorder %s224, %s226
      %p230 = scmp.eq.s32.totalorder %s22, 0
      %p231 = por %p229, %p230
      %p232 = scmp.ne.s32.totalorder %s224, %s226
      %p233 = scmp.eq.s32.totalorder %s27, 1
      %p234 = por %p232, %p233
      %p235 = scmp.ne.s32.totalorder %s226, %s227
      %p236 = scmp.eq.s32.totalorder %s27, 0
      %p237 = por %p235, %p236
      %p238 = scmp.ne.s32.totalorder %s226, %s227
      %p239 = scmp.eq.s32.totalorder %s28, 1
      %p240 = por %p238, %p239
      %p242 = scmp.ne.s32.totalorder %s227, %s241
      %p243 = scmp.eq.s32.totalorder %s28, 0
      %p244 = por %p242, %p243
      %s246 = sadd.s32 %s245, 1
      %p249 = scmp.eq.s32.totalorder %s22, 1
      %p250 = scmp.ne.s32.totalorder %s245, %s247
      %p251 = scmp.eq.s32.totalorder %s22, 0
      %p252 = por %p250, %p251
      %p253 = scmp.ne.s32.totalorder %s245, %s247
      %p254 = scmp.eq.s32.totalorder %s27, 1
      %p255 = por %p253, %p254
      %p256 = scmp.ne.s32.totalorder %s247, %s248
      %p257 = scmp.eq.s32.totalorder %s27, 0
      %p258 = por %p256, %p257
      %p259 = scmp.ne.s32.totalorder %s247, %s248
      %p260 = scmp.eq.s32.totalorder %s28, 1
      %p261 = por %p259, %p260
      %p263 = scmp.ne.s32.totalorder %s248, %s262
      %p264 = scmp.eq.s32.totalorder %s28, 0
      %p265 = por %p263, %p264
      %s267 = sadd.s32 %s266, 1
      %p270 = scmp.eq.s32.totalorder %s22, 1
      %p271 = scmp.ne.s32.totalorder %s266, %s268
      %p272 = scmp.eq.s32.totalorder %s22, 0
      %p273 = por %p271, %p272
      %p274 = scmp.ne.s32.totalorder %s266, %s268
      %p275 = scmp.eq.s32.totalorder %s27, 1
      %p276 = por %p274, %p275
      %p277 = scmp.ne.s32.totalorder %s268, %s269
      %p278 = scmp.eq.s32.totalorder %s27, 0
      %p279 = por %p277, %p278
      %p280 = scmp.ne.s32.totalorder %s268, %s269
      %p281 = scmp.eq.s32.totalorder %s28, 1
      %p282 = por %p280, %p281
      %p284 = scmp.ne.s32.totalorder %s269, %s283
      %p285 = scmp.eq.s32.totalorder %s28, 0
      %p286 = por %p284, %p285
      %s288 = sadd.s32 %s287, 1
      %p291 = scmp.eq.s32.totalorder %s22, 1
      %p292 = scmp.ne.s32.totalorder %s287, %s289
      %p293 = scmp.eq.s32.totalorder %s22, 0
      %p294 = por %p292, %p293
      %p295 = scmp.ne.s32.totalorder %s287, %s289
      %p296 = scmp.eq.s32.totalorder %s27, 1
      %p297 = por %p295, %p296
      %p298 = scmp.ne.s32.totalorder %s289, %s290
      %p299 = scmp.eq.s32.totalorder %s27, 0
      %p300 = por %p298, %p299
      %p301 = scmp.ne.s32.totalorder %s289, %s290
      %p302 = scmp.eq.s32.totalorder %s28, 1
      %p303 = por %p301, %p302
      %p305 = scmp.ne.s32.totalorder %s290, %s304
      %p306 = scmp.eq.s32.totalorder %s28, 0
      %p307 = por %p305, %p306
      %s308 = ssub.s32 %s22, %s29
      %p309 = scmp.eq.s32.totalorder %s308, 0
      %s311 = sadd.s32 %s310, 1
      %s312 = scalar_select %p309, %s310, %s311
      %p315 = pneg %p309
      %p316 = scmp.eq.s32.totalorder %s22, 1
      %p317 = por %p315, %p316
      %p318 = scmp.ne.s32.totalorder %s310, %s313
      %p319 = scmp.eq.s32.totalorder %s22, 0
      %p320 = por %p318, %p319
      %p321 = scmp.ne.s32.totalorder %s310, %s313
      %p322 = scmp.eq.s32.totalorder %s27, 1
      %p323 = por %p321, %p322
      %p324 = scmp.ne.s32.totalorder %s313, %s314
      %p325 = scmp.eq.s32.totalorder %s27, 0
      %p326 = por %p324, %p325
      %p327 = scmp.ne.s32.totalorder %s313, %s314
      %p328 = scmp.eq.s32.totalorder %s28, 1
      %p329 = por %p327, %p328
      %p331 = scmp.ne.s32.totalorder %s314, %s330
      %p332 = scmp.eq.s32.totalorder %s28, 0
      %p333 = por %p331, %p332
      %p334 = scmp.le.s32.totalorder 1, %s22
      %p335 = scmp.lt.s32.totalorder %s22, 3
      %p336 = pnand %p334, %p335
      %p337 = pneg %p336
      // Predicated region
      $region9: #{cnn_forward.1} parent=5 // pred_check
        _
      $region10: #{cnn_forward.1} parent=5 // pred_check_branch
        %339 = sbr.rel (%p336) target = $region12
      $region11: #{cnn_forward.1} parent=5 // pred_region
        %s340 = ssub.s32 %s22, 1
        // Predicated region
        $region13: #{cnn_forward.1} parent=11 // pred_check
          %p341 = pneg %p69
        $region14: #{cnn_forward.1} parent=11 // pred_check_branch
          %343 = sbr.rel (%p341) target = $region16
        $region15: #{cnn_forward.1} parent=11 // pred_region
          _
        $region16: #{cnn_forward.1} parent=11 // pred_fallthru
          _
        // Predicated region
        $region17: #{cnn_forward.1} parent=11 // pred_check
          %p344 = pneg %p90
        $region18: #{cnn_forward.1} parent=11 // pred_check_branch
          %346 = sbr.rel (%p344) target = $region20
        $region19: #{cnn_forward.1} parent=11 // pred_region
          _
        $region20: #{cnn_forward.1} parent=11 // pred_fallthru
          _
        // Predicated region
        $region21: #{cnn_forward.1} parent=11 // pred_check
          %p347 = pneg %p111
        $region22: #{cnn_forward.1} parent=11 // pred_check_branch
          %349 = sbr.rel (%p347) target = $region24
        $region23: #{cnn_forward.1} parent=11 // pred_region
          _
        $region24: #{cnn_forward.1} parent=11 // pred_fallthru
          _
        // Predicated region
        $region25: #{cnn_forward.1} parent=11 // pred_check
          %p350 = pneg %p132
        $region26: #{cnn_forward.1} parent=11 // pred_check_branch
          %352 = sbr.rel (%p350) target = $region28
        $region27: #{cnn_forward.1} parent=11 // pred_region
          _
        $region28: #{cnn_forward.1} parent=11 // pred_fallthru
          _
        // Predicated region
        $region29: #{cnn_forward.1} parent=11 // pred_check
          %p353 = pneg %p153
        $region30: #{cnn_forward.1} parent=11 // pred_check_branch
          %355 = sbr.rel (%p353) target = $region32
        $region31: #{cnn_forward.1} parent=11 // pred_region
          _
        $region32: #{cnn_forward.1} parent=11 // pred_fallthru
          _
        // Predicated region
        $region33: #{cnn_forward.1} parent=11 // pred_check
          %p356 = pneg %p174
        $region34: #{cnn_forward.1} parent=11 // pred_check_branch
          %358 = sbr.rel (%p356) target = $region36
        $region35: #{cnn_forward.1} parent=11 // pred_region
          _
        $region36: #{cnn_forward.1} parent=11 // pred_fallthru
          _
        // Predicated region
        $region37: #{cnn_forward.1} parent=11 // pred_check
          %p359 = pneg %p195
        $region38: #{cnn_forward.1} parent=11 // pred_check_branch
          %361 = sbr.rel (%p359) target = $region40
        $region39: #{cnn_forward.1} parent=11 // pred_region
          _
        $region40: #{cnn_forward.1} parent=11 // pred_fallthru
          _
        // Predicated region
        $region41: #{cnn_forward.1} parent=11 // pred_check
          %p362 = pneg %p216
        $region42: #{cnn_forward.1} parent=11 // pred_check_branch
          %364 = sbr.rel (%p362) target = $region44
        $region43: #{cnn_forward.1} parent=11 // pred_region
          _
        $region44: #{cnn_forward.1} parent=11 // pred_fallthru
          _
        // Predicated region
        $region45: #{cnn_forward.1} parent=11 // pred_check
          %p365 = pneg %p237
        $region46: #{cnn_forward.1} parent=11 // pred_check_branch
          %367 = sbr.rel (%p365) target = $region48
        $region47: #{cnn_forward.1} parent=11 // pred_region
          _
        $region48: #{cnn_forward.1} parent=11 // pred_fallthru
          _
        // Predicated region
        $region49: #{cnn_forward.1} parent=11 // pred_check
          %p368 = pneg %p258
        $region50: #{cnn_forward.1} parent=11 // pred_check_branch
          %370 = sbr.rel (%p368) target = $region52
        $region51: #{cnn_forward.1} parent=11 // pred_region
          _
        $region52: #{cnn_forward.1} parent=11 // pred_fallthru
          _
        // Predicated region
        $region53: #{cnn_forward.1} parent=11 // pred_check
          %p371 = pneg %p279
        $region54: #{cnn_forward.1} parent=11 // pred_check_branch
          %373 = sbr.rel (%p371) target = $region56
        $region55: #{cnn_forward.1} parent=11 // pred_region
          _
        $region56: #{cnn_forward.1} parent=11 // pred_fallthru
          _
        // Predicated region
        $region57: #{cnn_forward.1} parent=11 // pred_check
          %p374 = pneg %p300
        $region58: #{cnn_forward.1} parent=11 // pred_check_branch
          %376 = sbr.rel (%p374) target = $region60
        $region59: #{cnn_forward.1} parent=11 // pred_region
          _
        $region60: #{cnn_forward.1} parent=11 // pred_fallthru
          _
      $region12: #{cnn_forward.1} parent=5 // pred_fallthru
        _
      %p377 = scmp.lt.s32.totalorder %s22, 2
      // Predicated region
      $region61: #{cnn_forward.1} parent=5 // pred_check
        %p378 = pneg %p377
      $region62: #{cnn_forward.1} parent=5 // pred_check_branch
        %380 = sbr.rel (%p378) target = $region64
      $region63: #{cnn_forward.1} parent=5 // pred_region
        // Predicated region
        $region65: #{cnn_forward.1} parent=63 // pred_check
          %p381 = pneg %p42
        $region66: #{cnn_forward.1} parent=63 // pred_check_branch
          %383 = sbr.rel (%p381) target = $region68
        $region67: #{cnn_forward.1} parent=63 // pred_region
          %p384 = scmp.lt.s32.totalorder %s22, 1
          %s385 = scalar_select %p384, %s22, 1
          %s386 = smul.addr %s385, 32
          %s387 = smul.addr %s386, 8
          %s388 = scalar_lea.vmem %s0, %s387
        $region68: #{cnn_forward.1} parent=63 // pred_fallthru
          _
      $region64: #{cnn_forward.1} parent=5 // pred_fallthru
        _
      %p389 = scmp.le.s32.totalorder 1, %s22
      %p390 = scmp.lt.s32.totalorder %s22, 3
      %p391 = pnand %p389, %p390
      %p392 = pneg %p391
      // Predicated region
      $region69: #{cnn_forward.1} parent=5 // pred_check
        _
      $region70: #{cnn_forward.1} parent=5 // pred_check_branch
        %394 = sbr.rel (%p391) target = $region72
      $region71: #{cnn_forward.1} parent=5 // pred_region
        %s395 = ssub.s32 %s22, 1
        %p396 = scmp.lt.s32.totalorder %s27, 1
        %s397 = scalar_select %p396, %s27, 1
        %s398 = smul.addr %s397, 32
        %s399 = smul.addr %s398, 8
        %s400 = scalar_lea.vmem %s0, %s399
        %p401 = pneg %p48
        %p402 = pneg %p45
        %p403 = pneg %p69
        %p404 = pneg %p66
        %p405 = pneg %p90
        %p406 = pneg %p87
        %p407 = pneg %p111
        %p408 = pneg %p108
        %p409 = pneg %p132
        %p410 = pneg %p129
        %p411 = pneg %p153
        %p412 = pneg %p150
        %p413 = pneg %p174
        %p414 = pneg %p171
        %p415 = pneg %p195
        %p416 = pneg %p192
        %p417 = pneg %p216
        %p418 = pneg %p213
        %p419 = pneg %p237
        %p420 = pneg %p234
        %p421 = pneg %p258
        %p422 = pneg %p255
        %p423 = pneg %p279
        %p424 = pneg %p276
        %p425 = pneg %p300
        %p426 = pneg %p297
        %p427 = pneg %p326
        %p428 = pneg %p323
        %s429 = sand.u32 %s313, 1
        %s430 = scalar_lea.sflag [#allocation6], %s429
        %s431 = sand.u32 %s313, 1
        %s432 = scalar_lea.vmem [#allocation5], %s431
        %p433 = scmp.lt.s32.totalorder %s27, 1
        %s434 = scalar_select %p433, %s27, 1
        %s435 = smul.addr %s434, 32
        %s436 = smul.addr %s435, 8
        %s437 = scalar_lea.vmem %s0, %s436
        %v438 = vld [vmem:[%s437] sm:$0xff]
        %v439 = vld [vmem:[%s437 + $0x8] sm:$0xff]
        %v440 = vld [vmem:[%s437 + $0x10] sm:$0xff]
        %v441 = vld [vmem:[%s437 + $0x18] sm:$0xff]
        %v442 = vld [vmem:[%s437 + $0x20] sm:$0xff]
        %v443 = vld [vmem:[%s437 + $0x28] sm:$0xff]
        %v444 = vld [vmem:[%s437 + $0x30] sm:$0xff]
        %v445 = vld [vmem:[%s437 + $0x38] sm:$0xff]
        %v446 = vld [vmem:[%s437 + $0x40] sm:$0xff]
        %v447 = vld [vmem:[%s437 + $0x48] sm:$0xff]
        %v448 = vld [vmem:[%s437 + $0x50] sm:$0xff]
        %v449 = vld [vmem:[%s437 + $0x58] sm:$0xff]
        %v450 = vld [vmem:[%s437 + $0x60] sm:$0xff]
        %v451 = vld [vmem:[%s437 + $0x68] sm:$0xff]
        %v452 = vld [vmem:[%s437 + $0x70] sm:$0xff]
        %v453 = vld [vmem:[%s437 + $0x78] sm:$0xff]
        %v454 = vld [vmem:[%s437 + $0x80] sm:$0xff]
        %v455 = vld [vmem:[%s437 + $0x88] sm:$0xff]
        %v456 = vld [vmem:[%s437 + $0x90] sm:$0xff]
        %v457 = vld [vmem:[%s437 + $0x98] sm:$0xff]
        %v458 = vld [vmem:[%s437 + $0xa0] sm:$0xff]
        %v459 = vld [vmem:[%s437 + $0xa8] sm:$0xff]
        %v460 = vld [vmem:[%s437 + $0xb0] sm:$0xff]
        %v461 = vld [vmem:[%s437 + $0xb8] sm:$0xff]
        %v462 = vld [vmem:[%s437 + $0xc0] sm:$0xff]
        %v463 = vld [vmem:[%s437 + $0xc8] sm:$0xff]
        %v464 = vld [vmem:[%s437 + $0xd0] sm:$0xff]
        %v465 = vld [vmem:[%s437 + $0xd8] sm:$0xff]
        %v466 = vld [vmem:[%s437 + $0xe0] sm:$0xff]
        %v467 = vld [vmem:[%s437 + $0xe8] sm:$0xff]
        %v468 = vld [vmem:[%s437 + $0xf0] sm:$0xff]
        %v469 = vld [vmem:[%s437 + $0xf8] sm:$0xff]
        %v470 = vld [vmem:[%s1] sm:$0xff]
        %v471 = vld [vmem:[%s1 + $0x8] sm:$0xff]
        %v472 = vld [vmem:[%s1 + $0x10] sm:$0xff]
        %v473 = vld [vmem:[%s1 + $0x18] sm:$0xff]
        %v474 = vld [vmem:[%s1 + $0x20] sm:$0xff]
        %v475 = vld [vmem:[%s1 + $0x28] sm:$0xff]
        %v476 = vld [vmem:[%s1 + $0x30] sm:$0xff]
        %v477 = vld [vmem:[%s1 + $0x38] sm:$0xff]
        %v478 = vld [vmem:[%s1 + $0x40] sm:$0xff]
        %v479 = vld [vmem:[%s1 + $0x48] sm:$0xff]
        %v480 = vld [vmem:[%s1 + $0x50] sm:$0xff]
        %v481 = vld [vmem:[%s1 + $0x58] sm:$0xff]
        %v482 = vld [vmem:[%s1 + $0x60] sm:$0xff]
        %v483 = vld [vmem:[%s1 + $0x68] sm:$0xff]
        %v484 = vld [vmem:[%s1 + $0x70] sm:$0xff]
        %v485 = vld [vmem:[%s1 + $0x78] sm:$0xff]
        %486 = vmatprep.subr.mxu0 0.0
        %487 = vmatpush1.msra.mxu0 %v470
        %488 = vmatprep.subr.mxu0 0.0
        %489 = vmatpush1.msra.mxu0 %v471
        %490 = vmatprep.subr.mxu0 0.0
        %491 = vmatpush1.msra.mxu0 %v472
        %492 = vmatprep.subr.mxu0 0.0
        %493 = vmatpush1.msra.mxu0 %v473
        %494 = vmatprep.subr.mxu0 0.0
        %495 = vmatpush1.msra.mxu0 %v474
        %496 = vmatprep.subr.mxu0 0.0
        %497 = vmatpush1.msra.mxu0 %v475
        %498 = vmatprep.subr.mxu0 0.0
        %499 = vmatpush1.msra.mxu0 %v476
        %500 = vmatprep.subr.mxu0 0.0
        %501 = vmatpush1.msra.mxu0 %v477
        %502 = vmatprep.subr.mxu0 0.0
        %503 = vmatpush1.msra.mxu0 %v478
        %504 = vmatprep.subr.mxu0 0.0
        %505 = vmatpush1.msra.mxu0 %v479
        %506 = vmatprep.subr.mxu0 0.0
        %507 = vmatpush1.msra.mxu0 %v480
        %508 = vmatprep.subr.mxu0 0.0
        %509 = vmatpush1.msra.mxu0 %v481
        %510 = vmatprep.subr.mxu0 0.0
        %511 = vmatpush1.msra.mxu0 %v482
        %512 = vmatprep.subr.mxu0 0.0
        %513 = vmatpush1.msra.mxu0 %v483
        %514 = vmatprep.subr.mxu0 0.0
        %515 = vmatpush1.msra.mxu0 %v484
        %516 = vmatprep.subr.mxu0 0.0
        %517 = vmatpush1.msra.mxu0 %v485
        %518 = vmatprep.subr.mxu0 0.0
        %519 = vmatpush1.msra.mxu0 0.0
        %520 = vmatprep.subr.mxu0 0.0
        %521 = vmatpush1.msra.mxu0 0.0
        %522 = vmatprep.subr.mxu0 0.0
        %523 = vmatpush1.msra.mxu0 0.0
        %524 = vmatprep.subr.mxu0 0.0
        %525 = vmatpush1.msra.mxu0 0.0
        %526 = vmatprep.subr.mxu0 0.0
        %527 = vmatpush1.msra.mxu0 0.0
        %528 = vmatprep.subr.mxu0 0.0
        %529 = vmatpush1.msra.mxu0 0.0
        %530 = vmatprep.subr.mxu0 0.0
        %531 = vmatpush1.msra.mxu0 0.0
        %532 = vmatprep.subr.mxu0 0.0
        %533 = vmatpush1.msra.mxu0 0.0
        %534 = vmatprep.subr.mxu0 0.0
        %535 = vmatpush1.msra.mxu0 0.0
        %536 = vmatprep.subr.mxu0 0.0
        %537 = vmatpush1.msra.mxu0 0.0
        %538 = vmatprep.subr.mxu0 0.0
        %539 = vmatpush1.msra.mxu0 0.0
        %540 = vmatprep.subr.mxu0 0.0
        %541 = vmatpush1.msra.mxu0 0.0
        %542 = vmatprep.subr.mxu0 0.0
        %543 = vmatpush1.msra.mxu0 0.0
        %544 = vmatprep.subr.mxu0 0.0
        %545 = vmatpush1.msra.mxu0 0.0
        %546 = vmatprep.subr.mxu0 0.0
        %547 = vmatpush1.msra.mxu0 0.0
        %548 = vmatprep.subr.mxu0 0.0
        %549 = vmatpush1.msra.mxu0 0.0
        %550 = vmatprep.mubr.f32.mxu0 0.0
        %551 = vmatmul.mubr.f32.gmra.mrb[0].mxu0 %v438
        %v552 = vpop.f32.mrb[0].mxu0
        %v553 = vadd.f32 0.0, %v552
        %v554 = vpop.f32.mrb[0].mxu0
        %555 = vmatprep.mubr.f32.mxu0 0.0
        %556 = vmatmul.mubr.f32.gmra.mrb[0].mxu0 %v439
        %v557 = vpop.f32.mrb[0].mxu0
        %v558 = vadd.f32 0.0, %v557
        %v559 = vpop.f32.mrb[0].mxu0
        %560 = vmatprep.mubr.f32.mxu0 0.0
        %561 = vmatmul.mubr.f32.gmra.mrb[0].mxu0 %v440
        %v562 = vpop.f32.mrb[0].mxu0
        %v563 = vadd.f32 0.0, %v562
        %v564 = vpop.f32.mrb[0].mxu0
        %565 = vmatprep.mubr.f32.mxu0 0.0
        %566 = vmatmul.mubr.f32.gmra.mrb[0].mxu0 %v441
        %v567 = vpop.f32.mrb[0].mxu0
        %v568 = vadd.f32 0.0, %v567
        %v569 = vpop.f32.mrb[0].mxu0
        %570 = vmatprep.mubr.f32.mxu0 0.0
        %571 = vmatmul.mubr.f32.gmra.mrb[0].mxu0 %v442
        %v572 = vpop.f32.mrb[0].mxu0
        %v573 = vadd.f32 0.0, %v572
        %v574 = vpop.f32.mrb[0].mxu0
        %575 = vmatprep.mubr.f32.mxu0 0.0
        %576 = vmatmul.mubr.f32.gmra.mrb[0].mxu0 %v443
        %v577 = vpop.f32.mrb[0].mxu0
        %v578 = vadd.f32 0.0, %v577
        %v579 = vpop.f32.mrb[0].mxu0
        %580 = vmatprep.mubr.f32.mxu0 0.0
        %581 = vmatmul.mubr.f32.gmra.mrb[0].mxu0 %v444
        %v582 = vpop.f32.mrb[0].mxu0
        %v583 = vadd.f32 0.0, %v582
        %v584 = vpop.f32.mrb[0].mxu0
        %585 = vmatprep.mubr.f32.mxu0 0.0
        %586 = vmatmul.mubr.f32.gmra.mrb[0].mxu0 %v445
        %v587 = vpop.f32.mrb[0].mxu0
        %v588 = vadd.f32 0.0, %v587
        %v589 = vpop.f32.mrb[0].mxu0
        %590 = vmatprep.mubr.f32.mxu0 0.0
        %591 = vmatmul.mubr.f32.gmra.mrb[0].mxu0 %v446
        %v592 = vpop.f32.mrb[0].mxu0
        %v593 = vadd.f32 0.0, %v592
        %v594 = vpop.f32.mrb[0].mxu0
        %595 = vmatprep.mubr.f32.mxu0 0.0
        %596 = vmatmul.mubr.f32.gmra.mrb[0].mxu0 %v447
        %v597 = vpop.f32.mrb[0].mxu0
        %v598 = vadd.f32 0.0, %v597
        %v599 = vpop.f32.mrb[0].mxu0
        %600 = vmatprep.mubr.f32.mxu0 0.0
        %601 = vmatmul.mubr.f32.gmra.mrb[0].mxu0 %v448
        %v602 = vpop.f32.mrb[0].mxu0
        %v603 = vadd.f32 0.0, %v602
        %v604 = vpop.f32.mrb[0].mxu0
        %605 = vmatprep.mubr.f32.mxu0 0.0
        %606 = vmatmul.mubr.f32.gmra.mrb[0].mxu0 %v449
        %v607 = vpop.f32.mrb[0].mxu0
        %v608 = vadd.f32 0.0, %v607
        %v609 = vpop.f32.mrb[0].mxu0
        %610 = vmatprep.mubr.f32.mxu0 0.0
        %611 = vmatmul.mubr.f32.gmra.mrb[0].mxu0 %v450
        %v612 = vpop.f32.mrb[0].mxu0
        %v613 = vadd.f32 0.0, %v612
        %v614 = vpop.f32.mrb[0].mxu0
        %615 = vmatprep.mubr.f32.mxu0 0.0
        %616 = vmatmul.mubr.f32.gmra.mrb[0].mxu0 %v451
        %v617 = vpop.f32.mrb[0].mxu0
        %v618 = vadd.f32 0.0, %v617
        %v619 = vpop.f32.mrb[0].mxu0
        %620 = vmatprep.mubr.f32.mxu0 0.0
        %621 = vmatmul.mubr.f32.gmra.mrb[0].mxu0 %v452
        %v622 = vpop.f32.mrb[0].mxu0
        %v623 = vadd.f32 0.0, %v622
        %v624 = vpop.f32.mrb[0].mxu0
        %625 = vmatprep.mubr.f32.mxu0 0.0
        %626 = vmatmul.mubr.f32.gmra.mrb[0].mxu0 %v453
        %v627 = vpop.f32.mrb[0].mxu0
        %v628 = vadd.f32 0.0, %v627
        %v629 = vpop.f32.mrb[0].mxu0
        %630 = vmatprep.mubr.f32.mxu0 0.0
        %631 = vmatmul.mubr.f32.gmra.mrb[0].mxu0 %v454
        %v632 = vpop.f32.mrb[0].mxu0
        %v633 = vadd.f32 0.0, %v632
        %v634 = vpop.f32.mrb[0].mxu0
        %635 = vmatprep.mubr.f32.mxu0 0.0
        %636 = vmatmul.mubr.f32.gmra.mrb[0].mxu0 %v455
        %v637 = vpop.f32.mrb[0].mxu0
        %v638 = vadd.f32 0.0, %v637
        %v639 = vpop.f32.mrb[0].mxu0
        %640 = vmatprep.mubr.f32.mxu0 0.0
        %641 = vmatmul.mubr.f32.gmra.mrb[0].mxu0 %v456
        %v642 = vpop.f32.mrb[0].mxu0
        %v643 = vadd.f32 0.0, %v642
        %v644 = vpop.f32.mrb[0].mxu0
        %645 = vmatprep.mubr.f32.mxu0 0.0
        %646 = vmatmul.mubr.f32.gmra.mrb[0].mxu0 %v457
        %v647 = vpop.f32.mrb[0].mxu0
        %v648 = vadd.f32 0.0, %v647
        %v649 = vpop.f32.mrb[0].mxu0
        %650 = vmatprep.mubr.f32.mxu0 0.0
        %651 = vmatmul.mubr.f32.gmra.mrb[0].mxu0 %v458
        %v652 = vpop.f32.mrb[0].mxu0
        %v653 = vadd.f32 0.0, %v652
        %v654 = vpop.f32.mrb[0].mxu0
        %655 = vmatprep.mubr.f32.mxu0 0.0
        %656 = vmatmul.mubr.f32.gmra.mrb[0].mxu0 %v459
        %v657 = vpop.f32.mrb[0].mxu0
        %v658 = vadd.f32 0.0, %v657
        %v659 = vpop.f32.mrb[0].mxu0
        %660 = vmatprep.mubr.f32.mxu0 0.0
        %661 = vmatmul.mubr.f32.gmra.mrb[0].mxu0 %v460
        %v662 = vpop.f32.mrb[0].mxu0
        %v663 = vadd.f32 0.0, %v662
        %v664 = vpop.f32.mrb[0].mxu0
        %665 = vmatprep.mubr.f32.mxu0 0.0
        %666 = vmatmul.mubr.f32.gmra.mrb[0].mxu0 %v461
        %v667 = vpop.f32.mrb[0].mxu0
        %v668 = vadd.f32 0.0, %v667
        %v669 = vpop.f32.mrb[0].mxu0
        %670 = vmatprep.mubr.f32.mxu0 0.0
        %671 = vmatmul.mubr.f32.gmra.mrb[0].mxu0 %v462
        %v672 = vpop.f32.mrb[0].mxu0
        %v673 = vadd.f32 0.0, %v672
        %v674 = vpop.f32.mrb[0].mxu0
        %675 = vmatprep.mubr.f32.mxu0 0.0
        %676 = vmatmul.mubr.f32.gmra.mrb[0].mxu0 %v463
        %v677 = vpop.f32.mrb[0].mxu0
        %v678 = vadd.f32 0.0, %v677
        %v679 = vpop.f32.mrb[0].mxu0
        %680 = vmatprep.mubr.f32.mxu0 0.0
        %681 = vmatmul.mubr.f32.gmra.mrb[0].mxu0 %v464
        %v682 = vpop.f32.mrb[0].mxu0
        %v683 = vadd.f32 0.0, %v682
        %v684 = vpop.f32.mrb[0].mxu0
        %685 = vmatprep.mubr.f32.mxu0 0.0
        %686 = vmatmul.mubr.f32.gmra.mrb[0].mxu0 %v465
        %v687 = vpop.f32.mrb[0].mxu0
        %v688 = vadd.f32 0.0, %v687
        %v689 = vpop.f32.mrb[0].mxu0
        %690 = vmatprep.mubr.f32.mxu0 0.0
        %691 = vmatmul.mubr.f32.gmra.mrb[0].mxu0 %v466
        %v692 = vpop.f32.mrb[0].mxu0
        %v693 = vadd.f32 0.0, %v692
        %v694 = vpop.f32.mrb[0].mxu0
        %695 = vmatprep.mubr.f32.mxu0 0.0
        %696 = vmatmul.mubr.f32.gmra.mrb[0].mxu0 %v467
        %v697 = vpop.f32.mrb[0].mxu0
        %v698 = vadd.f32 0.0, %v697
        %v699 = vpop.f32.mrb[0].mxu0
        %700 = vmatprep.mubr.f32.mxu0 0.0
        %701 = vmatmul.mubr.f32.gmra.mrb[0].mxu0 %v468
        %v702 = vpop.f32.mrb[0].mxu0
        %v703 = vadd.f32 0.0, %v702
        %v704 = vpop.f32.mrb[0].mxu0
        %705 = vmatprep.mubr.f32.mxu0 0.0
        %706 = vmatmul.mubr.f32.gmra.mrb[0].mxu0 %v469
        %v707 = vpop.f32.mrb[0].mxu0
        %v708 = vadd.f32 0.0, %v707
        %v709 = vpop.f32.mrb[0].mxu0
        %710 = vdwg.mxu0
        %v711 = vld [vmem:[%s2] sm:$0x1]
        %v712 = vld [vmem:[%s3] sm:$0x1]
        %v714 = vlaneseq
        %v715 = vshrl.u32 %v714, 7
        %v716 = vsub.s32 0, %v715
        %v717 = vrot.slane %v711, %v716
        %v719 = vmul.f32 %v553, %v717
        %v720 = vmul.f32 %v558, %v717
        %v721 = vmul.f32 %v563, %v717
        %v722 = vmul.f32 %v568, %v717
        %v723 = vmul.f32 %v573, %v717
        %v724 = vmul.f32 %v578, %v717
        %v725 = vmul.f32 %v583, %v717
        %v726 = vmul.f32 %v588, %v717
        %v727 = vmul.f32 %v593, %v717
        %v728 = vmul.f32 %v598, %v717
        %v729 = vmul.f32 %v603, %v717
        %v730 = vmul.f32 %v608, %v717
        %v731 = vmul.f32 %v613, %v717
        %v732 = vmul.f32 %v618, %v717
        %v733 = vmul.f32 %v623, %v717
        %v734 = vmul.f32 %v628, %v717
        %v735 = vmul.f32 %v633, %v717
        %v736 = vmul.f32 %v638, %v717
        %v737 = vmul.f32 %v643, %v717
        %v738 = vmul.f32 %v648, %v717
        %v739 = vmul.f32 %v653, %v717
        %v740 = vmul.f32 %v658, %v717
        %v741 = vmul.f32 %v663, %v717
        %v742 = vmul.f32 %v668, %v717
        %v743 = vmul.f32 %v673, %v717
        %v744 = vmul.f32 %v678, %v717
        %v745 = vmul.f32 %v683, %v717
        %v746 = vmul.f32 %v688, %v717
        %v747 = vmul.f32 %v693, %v717
        %v748 = vmul.f32 %v698, %v717
        %v749 = vmul.f32 %v703, %v717
        %v750 = vmul.f32 %v708, %v717
        %v752 = vlaneseq
        %v753 = vshrl.u32 %v752, 7
        %v754 = vsub.s32 0, %v753
        %v755 = vrot.slane %v712, %v754
        %v757 = vadd.f32 %v719, %v755
        %v758 = vadd.f32 %v720, %v755
        %v759 = vadd.f32 %v721, %v755
        %v760 = vadd.f32 %v722, %v755
        %v761 = vadd.f32 %v723, %v755
        %v762 = vadd.f32 %v724, %v755
        %v763 = vadd.f32 %v725, %v755
        %v764 = vadd.f32 %v726, %v755
        %v765 = vadd.f32 %v727, %v755
        %v766 = vadd.f32 %v728, %v755
        %v767 = vadd.f32 %v729, %v755
        %v768 = vadd.f32 %v730, %v755
        %v769 = vadd.f32 %v731, %v755
        %v770 = vadd.f32 %v732, %v755
        %v771 = vadd.f32 %v733, %v755
        %v772 = vadd.f32 %v734, %v755
        %v773 = vadd.f32 %v735, %v755
        %v774 = vadd.f32 %v736, %v755
        %v775 = vadd.f32 %v737, %v755
        %v776 = vadd.f32 %v738, %v755
        %v777 = vadd.f32 %v739, %v755
        %v778 = vadd.f32 %v740, %v755
        %v779 = vadd.f32 %v741, %v755
        %v780 = vadd.f32 %v742, %v755
        %v781 = vadd.f32 %v743, %v755
        %v782 = vadd.f32 %v744, %v755
        %v783 = vadd.f32 %v745, %v755
        %v784 = vadd.f32 %v746, %v755
        %v785 = vadd.f32 %v747, %v755
        %v786 = vadd.f32 %v748, %v755
        %v787 = vadd.f32 %v749, %v755
        %v788 = vadd.f32 %v750, %v755
        %v789 = vmax.f32 %v757, 0.0
        %v790 = vmax.f32 %v758, 0.0
        %v791 = vmax.f32 %v759, 0.0
        %v792 = vmax.f32 %v760, 0.0
        %v793 = vmax.f32 %v761, 0.0
        %v794 = vmax.f32 %v762, 0.0
        %v795 = vmax.f32 %v763, 0.0
        %v796 = vmax.f32 %v764, 0.0
        %v797 = vmax.f32 %v765, 0.0
        %v798 = vmax.f32 %v766, 0.0
        %v799 = vmax.f32 %v767, 0.0
        %v800 = vmax.f32 %v768, 0.0
        %v801 = vmax.f32 %v769, 0.0
        %v802 = vmax.f32 %v770, 0.0
        %v803 = vmax.f32 %v771, 0.0
        %v804 = vmax.f32 %v772, 0.0
        %v805 = vmax.f32 %v773, 0.0
        %v806 = vmax.f32 %v774, 0.0
        %v807 = vmax.f32 %v775, 0.0
        %v808 = vmax.f32 %v776, 0.0
        %v809 = vmax.f32 %v777, 0.0
        %v810 = vmax.f32 %v778, 0.0
        %v811 = vmax.f32 %v779, 0.0
        %v812 = vmax.f32 %v780, 0.0
        %v813 = vmax.f32 %v781, 0.0
        %v814 = vmax.f32 %v782, 0.0
        %v815 = vmax.f32 %v783, 0.0
        %v816 = vmax.f32 %v784, 0.0
        %v817 = vmax.f32 %v785, 0.0
        %v818 = vmax.f32 %v786, 0.0
        %v819 = vmax.f32 %v787, 0.0
        %v820 = vmax.f32 %v788, 0.0
        %v853 = vcombine.high %v789, %v789
        %v855 = vunpack.c.l.s4 1983009808
        %v856 = vunpack.c.0.s8 %v855
        %v857 = vlaneseq
        %v858 = vshrl.u32 %v857, 7
        %v859 = vsub.s32 %v856, %v858
        %v860 = vrot.slane %v789, %v859
        %v862 = vunpack.c.l.s4 1983009808
        %v863 = vunpack.c.0.s8 %v862
        %v864 = vlaneseq
        %v865 = vshrl.u32 %v864, 7
        %v866 = vsub.s32 %v863, %v865
        %v867 = vrot.slane %v853, %v866
        %v868 = vcombine.high %v860, %v860
        %v869 = vcombine.high %v867, %v867
        %v870 = vcombine.high %v790, %v790
        %v872 = vunpack.c.l.s4 1983009808
        %v873 = vunpack.c.0.s8 %v872
        %v874 = vlaneseq
        %v875 = vshrl.u32 %v874, 7
        %v876 = vsub.s32 %v873, %v875
        %v877 = vrot.slane %v790, %v876
        %v879 = vunpack.c.l.s4 1983009808
        %v880 = vunpack.c.0.s8 %v879
        %v881 = vlaneseq
        %v882 = vshrl.u32 %v881, 7
        %v883 = vsub.s32 %v880, %v882
        %v884 = vrot.slane %v870, %v883
        %v885 = vcombine.high %v877, %v877
        %v886 = vcombine.high %v884, %v884
        %v887 = vcombine.high %v791, %v791
        %v889 = vunpack.c.l.s4 1983009808
        %v890 = vunpack.c.0.s8 %v889
        %v891 = vlaneseq
        %v892 = vshrl.u32 %v891, 7
        %v893 = vsub.s32 %v890, %v892
        %v894 = vrot.slane %v791, %v893
        %v896 = vunpack.c.l.s4 1983009808
        %v897 = vunpack.c.0.s8 %v896
        %v898 = vlaneseq
        %v899 = vshrl.u32 %v898, 7
        %v900 = vsub.s32 %v897, %v899
        %v901 = vrot.slane %v887, %v900
        %v902 = vcombine.high %v894, %v894
        %v903 = vcombine.high %v901, %v901
        %v904 = vcombine.high %v792, %v792
        %v906 = vunpack.c.l.s4 1983009808
        %v907 = vunpack.c.0.s8 %v906
        %v908 = vlaneseq
        %v909 = vshrl.u32 %v908, 7
        %v910 = vsub.s32 %v907, %v909
        %v911 = vrot.slane %v792, %v910
        %v913 = vunpack.c.l.s4 1983009808
        %v914 = vunpack.c.0.s8 %v913
        %v915 = vlaneseq
        %v916 = vshrl.u32 %v915, 7
        %v917 = vsub.s32 %v914, %v916
        %v918 = vrot.slane %v904, %v917
        %v919 = vcombine.high %v911, %v911
        %v920 = vcombine.high %v918, %v918
        %v921 = vcombine.high %v793, %v793
        %v923 = vunpack.c.l.s4 1983009808
        %v924 = vunpack.c.0.s8 %v923
        %v925 = vlaneseq
        %v926 = vshrl.u32 %v925, 7
        %v927 = vsub.s32 %v924, %v926
        %v928 = vrot.slane %v793, %v927
        %v930 = vunpack.c.l.s4 1983009808
        %v931 = vunpack.c.0.s8 %v930
        %v932 = vlaneseq
        %v933 = vshrl.u32 %v932, 7
        %v934 = vsub.s32 %v931, %v933
        %v935 = vrot.slane %v921, %v934
        %v936 = vcombine.high %v928, %v928
        %v937 = vcombine.high %v935, %v935
        %v938 = vcombine.high %v794, %v794
        %v940 = vunpack.c.l.s4 1983009808
        %v941 = vunpack.c.0.s8 %v940
        %v942 = vlaneseq
        %v943 = vshrl.u32 %v942, 7
        %v944 = vsub.s32 %v941, %v943
        %v945 = vrot.slane %v794, %v944
        %v947 = vunpack.c.l.s4 1983009808
        %v948 = vunpack.c.0.s8 %v947
        %v949 = vlaneseq
        %v950 = vshrl.u32 %v949, 7
        %v951 = vsub.s32 %v948, %v950
        %v952 = vrot.slane %v938, %v951
        %v953 = vcombine.high %v945, %v945
        %v954 = vcombine.high %v952, %v952
        %v955 = vcombine.high %v795, %v795
        %v957 = vunpack.c.l.s4 1983009808
        %v958 = vunpack.c.0.s8 %v957
        %v959 = vlaneseq
        %v960 = vshrl.u32 %v959, 7
        %v961 = vsub.s32 %v958, %v960
        %v962 = vrot.slane %v795, %v961
        %v964 = vunpack.c.l.s4 1983009808
        %v965 = vunpack.c.0.s8 %v964
        %v966 = vlaneseq
        %v967 = vshrl.u32 %v966, 7
        %v968 = vsub.s32 %v965, %v967
        %v969 = vrot.slane %v955, %v968
        %v970 = vcombine.high %v962, %v962
        %v971 = vcombine.high %v969, %v969
        %v972 = vcombine.high %v796, %v796
        %v974 = vunpack.c.l.s4 1983009808
        %v975 = vunpack.c.0.s8 %v974
        %v976 = vlaneseq
        %v977 = vshrl.u32 %v976, 7
        %v978 = vsub.s32 %v975, %v977
        %v979 = vrot.slane %v796, %v978
        %v981 = vunpack.c.l.s4 1983009808
        %v982 = vunpack.c.0.s8 %v981
        %v983 = vlaneseq
        %v984 = vshrl.u32 %v983, 7
        %v985 = vsub.s32 %v982, %v984
        %v986 = vrot.slane %v972, %v985
        %v987 = vcombine.high %v979, %v979
        %v988 = vcombine.high %v986, %v986
        %v989 = vcombine.high %v797, %v797
        %v991 = vunpack.c.l.s4 1983009808
        %v992 = vunpack.c.0.s8 %v991
        %v993 = vlaneseq
        %v994 = vshrl.u32 %v993, 7
        %v995 = vsub.s32 %v992, %v994
        %v996 = vrot.slane %v797, %v995
        %v998 = vunpack.c.l.s4 1983009808
        %v999 = vunpack.c.0.s8 %v998
        %v1000 = vlaneseq
        %v1001 = vshrl.u32 %v1000, 7
        %v1002 = vsub.s32 %v999, %v1001
        %v1003 = vrot.slane %v989, %v1002
        %v1004 = vcombine.high %v996, %v996
        %v1005 = vcombine.high %v1003, %v1003
        %v1006 = vcombine.high %v798, %v798
        %v1008 = vunpack.c.l.s4 1983009808
        %v1009 = vunpack.c.0.s8 %v1008
        %v1010 = vlaneseq
        %v1011 = vshrl.u32 %v1010, 7
        %v1012 = vsub.s32 %v1009, %v1011
        %v1013 = vrot.slane %v798, %v1012
        %v1015 = vunpack.c.l.s4 1983009808
        %v1016 = vunpack.c.0.s8 %v1015
        %v1017 = vlaneseq
        %v1018 = vshrl.u32 %v1017, 7
        %v1019 = vsub.s32 %v1016, %v1018
        %v1020 = vrot.slane %v1006, %v1019
        %v1021 = vcombine.high %v1013, %v1013
        %v1022 = vcombine.high %v1020, %v1020
        %v1023 = vcombine.high %v799, %v799
        %v1025 = vunpack.c.l.s4 1983009808
        %v1026 = vunpack.c.0.s8 %v1025
        %v1027 = vlaneseq
        %v1028 = vshrl.u32 %v1027, 7
        %v1029 = vsub.s32 %v1026, %v1028
        %v1030 = vrot.slane %v799, %v1029
        %v1032 = vunpack.c.l.s4 1983009808
        %v1033 = vunpack.c.0.s8 %v1032
        %v1034 = vlaneseq
        %v1035 = vshrl.u32 %v1034, 7
        %v1036 = vsub.s32 %v1033, %v1035
        %v1037 = vrot.slane %v1023, %v1036
        %v1038 = vcombine.high %v1030, %v1030
        %v1039 = vcombine.high %v1037, %v1037
        %v1040 = vcombine.high %v800, %v800
        %v1042 = vunpack.c.l.s4 1983009808
        %v1043 = vunpack.c.0.s8 %v1042
        %v1044 = vlaneseq
        %v1045 = vshrl.u32 %v1044, 7
        %v1046 = vsub.s32 %v1043, %v1045
        %v1047 = vrot.slane %v800, %v1046
        %v1049 = vunpack.c.l.s4 1983009808
        %v1050 = vunpack.c.0.s8 %v1049
        %v1051 = vlaneseq
        %v1052 = vshrl.u32 %v1051, 7
        %v1053 = vsub.s32 %v1050, %v1052
        %v1054 = vrot.slane %v1040, %v1053
        %v1055 = vcombine.high %v1047, %v1047
        %v1056 = vcombine.high %v1054, %v1054
        %v1057 = vcombine.high %v801, %v801
        %v1059 = vunpack.c.l.s4 1983009808
        %v1060 = vunpack.c.0.s8 %v1059
        %v1061 = vlaneseq
        %v1062 = vshrl.u32 %v1061, 7
        %v1063 = vsub.s32 %v1060, %v1062
        %v1064 = vrot.slane %v801, %v1063
        %v1066 = vunpack.c.l.s4 1983009808
        %v1067 = vunpack.c.0.s8 %v1066
        %v1068 = vlaneseq
        %v1069 = vshrl.u32 %v1068, 7
        %v1070 = vsub.s32 %v1067, %v1069
        %v1071 = vrot.slane %v1057, %v1070
        %v1072 = vcombine.high %v1064, %v1064
        %v1073 = vcombine.high %v1071, %v1071
        %v1074 = vcombine.high %v802, %v802
        %v1076 = vunpack.c.l.s4 1983009808
        %v1077 = vunpack.c.0.s8 %v1076
        %v1078 = vlaneseq
        %v1079 = vshrl.u32 %v1078, 7
        %v1080 = vsub.s32 %v1077, %v1079
        %v1081 = vrot.slane %v802, %v1080
        %v1083 = vunpack.c.l.s4 1983009808
        %v1084 = vunpack.c.0.s8 %v1083
        %v1085 = vlaneseq
        %v1086 = vshrl.u32 %v1085, 7
        %v1087 = vsub.s32 %v1084, %v1086
        %v1088 = vrot.slane %v1074, %v1087
        %v1089 = vcombine.high %v1081, %v1081
        %v1090 = vcombine.high %v1088, %v1088
        %v1091 = vcombine.high %v803, %v803
        %v1093 = vunpack.c.l.s4 1983009808
        %v1094 = vunpack.c.0.s8 %v1093
        %v1095 = vlaneseq
        %v1096 = vshrl.u32 %v1095, 7
        %v1097 = vsub.s32 %v1094, %v1096
        %v1098 = vrot.slane %v803, %v1097
        %v1100 = vunpack.c.l.s4 1983009808
        %v1101 = vunpack.c.0.s8 %v1100
        %v1102 = vlaneseq
        %v1103 = vshrl.u32 %v1102, 7
        %v1104 = vsub.s32 %v1101, %v1103
        %v1105 = vrot.slane %v1091, %v1104
        %v1106 = vcombine.high %v1098, %v1098
        %v1107 = vcombine.high %v1105, %v1105
        %v1108 = vcombine.high %v804, %v804
        %v1110 = vunpack.c.l.s4 1983009808
        %v1111 = vunpack.c.0.s8 %v1110
        %v1112 = vlaneseq
        %v1113 = vshrl.u32 %v1112, 7
        %v1114 = vsub.s32 %v1111, %v1113
        %v1115 = vrot.slane %v804, %v1114
        %v1117 = vunpack.c.l.s4 1983009808
        %v1118 = vunpack.c.0.s8 %v1117
        %v1119 = vlaneseq
        %v1120 = vshrl.u32 %v1119, 7
        %v1121 = vsub.s32 %v1118, %v1120
        %v1122 = vrot.slane %v1108, %v1121
        %v1123 = vcombine.high %v1115, %v1115
        %v1124 = vcombine.high %v1122, %v1122
        %v1125 = vcombine.high %v805, %v805
        %v1127 = vunpack.c.l.s4 1983009808
        %v1128 = vunpack.c.0.s8 %v1127
        %v1129 = vlaneseq
        %v1130 = vshrl.u32 %v1129, 7
        %v1131 = vsub.s32 %v1128, %v1130
        %v1132 = vrot.slane %v805, %v1131
        %v1134 = vunpack.c.l.s4 1983009808
        %v1135 = vunpack.c.0.s8 %v1134
        %v1136 = vlaneseq
        %v1137 = vshrl.u32 %v1136, 7
        %v1138 = vsub.s32 %v1135, %v1137
        %v1139 = vrot.slane %v1125, %v1138
        %v1140 = vcombine.high %v1132, %v1132
        %v1141 = vcombine.high %v1139, %v1139
        %v1142 = vcombine.high %v806, %v806
        %v1144 = vunpack.c.l.s4 1983009808
        %v1145 = vunpack.c.0.s8 %v1144
        %v1146 = vlaneseq
        %v1147 = vshrl.u32 %v1146, 7
        %v1148 = vsub.s32 %v1145, %v1147
        %v1149 = vrot.slane %v806, %v1148
        %v1151 = vunpack.c.l.s4 1983009808
        %v1152 = vunpack.c.0.s8 %v1151
        %v1153 = vlaneseq
        %v1154 = vshrl.u32 %v1153, 7
        %v1155 = vsub.s32 %v1152, %v1154
        %v1156 = vrot.slane %v1142, %v1155
        %v1157 = vcombine.high %v1149, %v1149
        %v1158 = vcombine.high %v1156, %v1156
        %v1159 = vcombine.high %v807, %v807
        %v1161 = vunpack.c.l.s4 1983009808
        %v1162 = vunpack.c.0.s8 %v1161
        %v1163 = vlaneseq
        %v1164 = vshrl.u32 %v1163, 7
        %v1165 = vsub.s32 %v1162, %v1164
        %v1166 = vrot.slane %v807, %v1165
        %v1168 = vunpack.c.l.s4 1983009808
        %v1169 = vunpack.c.0.s8 %v1168
        %v1170 = vlaneseq
        %v1171 = vshrl.u32 %v1170, 7
        %v1172 = vsub.s32 %v1169, %v1171
        %v1173 = vrot.slane %v1159, %v1172
        %v1174 = vcombine.high %v1166, %v1166
        %v1175 = vcombine.high %v1173, %v1173
        %v1176 = vcombine.high %v808, %v808
        %v1178 = vunpack.c.l.s4 1983009808
        %v1179 = vunpack.c.0.s8 %v1178
        %v1180 = vlaneseq
        %v1181 = vshrl.u32 %v1180, 7
        %v1182 = vsub.s32 %v1179, %v1181
        %v1183 = vrot.slane %v808, %v1182
        %v1185 = vunpack.c.l.s4 1983009808
        %v1186 = vunpack.c.0.s8 %v1185
        %v1187 = vlaneseq
        %v1188 = vshrl.u32 %v1187, 7
        %v1189 = vsub.s32 %v1186, %v1188
        %v1190 = vrot.slane %v1176, %v1189
        %v1191 = vcombine.high %v1183, %v1183
        %v1192 = vcombine.high %v1190, %v1190
        %v1193 = vcombine.high %v809, %v809
        %v1195 = vunpack.c.l.s4 1983009808
        %v1196 = vunpack.c.0.s8 %v1195
        %v1197 = vlaneseq
        %v1198 = vshrl.u32 %v1197, 7
        %v1199 = vsub.s32 %v1196, %v1198
        %v1200 = vrot.slane %v809, %v1199
        %v1202 = vunpack.c.l.s4 1983009808
        %v1203 = vunpack.c.0.s8 %v1202
        %v1204 = vlaneseq
        %v1205 = vshrl.u32 %v1204, 7
        %v1206 = vsub.s32 %v1203, %v1205
        %v1207 = vrot.slane %v1193, %v1206
        %v1208 = vcombine.high %v1200, %v1200
        %v1209 = vcombine.high %v1207, %v1207
        %v1210 = vcombine.high %v810, %v810
        %v1212 = vunpack.c.l.s4 1983009808
        %v1213 = vunpack.c.0.s8 %v1212
        %v1214 = vlaneseq
        %v1215 = vshrl.u32 %v1214, 7
        %v1216 = vsub.s32 %v1213, %v1215
        %v1217 = vrot.slane %v810, %v1216
        %v1219 = vunpack.c.l.s4 1983009808
        %v1220 = vunpack.c.0.s8 %v1219
        %v1221 = vlaneseq
        %v1222 = vshrl.u32 %v1221, 7
        %v1223 = vsub.s32 %v1220, %v1222
        %v1224 = vrot.slane %v1210, %v1223
        %v1225 = vcombine.high %v1217, %v1217
        %v1226 = vcombine.high %v1224, %v1224
        %v1227 = vcombine.high %v811, %v811
        %v1229 = vunpack.c.l.s4 1983009808
        %v1230 = vunpack.c.0.s8 %v1229
        %v1231 = vlaneseq
        %v1232 = vshrl.u32 %v1231, 7
        %v1233 = vsub.s32 %v1230, %v1232
        %v1234 = vrot.slane %v811, %v1233
        %v1236 = vunpack.c.l.s4 1983009808
        %v1237 = vunpack.c.0.s8 %v1236
        %v1238 = vlaneseq
        %v1239 = vshrl.u32 %v1238, 7
        %v1240 = vsub.s32 %v1237, %v1239
        %v1241 = vrot.slane %v1227, %v1240
        %v1242 = vcombine.high %v1234, %v1234
        %v1243 = vcombine.high %v1241, %v1241
        %v1244 = vcombine.high %v812, %v812
        %v1246 = vunpack.c.l.s4 1983009808
        %v1247 = vunpack.c.0.s8 %v1246
        %v1248 = vlaneseq
        %v1249 = vshrl.u32 %v1248, 7
        %v1250 = vsub.s32 %v1247, %v1249
        %v1251 = vrot.slane %v812, %v1250
        %v1253 = vunpack.c.l.s4 1983009808
        %v1254 = vunpack.c.0.s8 %v1253
        %v1255 = vlaneseq
        %v1256 = vshrl.u32 %v1255, 7
        %v1257 = vsub.s32 %v1254, %v1256
        %v1258 = vrot.slane %v1244, %v1257
        %v1259 = vcombine.high %v1251, %v1251
        %v1260 = vcombine.high %v1258, %v1258
        %v1261 = vcombine.high %v813, %v813
        %v1263 = vunpack.c.l.s4 1983009808
        %v1264 = vunpack.c.0.s8 %v1263
        %v1265 = vlaneseq
        %v1266 = vshrl.u32 %v1265, 7
        %v1267 = vsub.s32 %v1264, %v1266
        %v1268 = vrot.slane %v813, %v1267
        %v1270 = vunpack.c.l.s4 1983009808
        %v1271 = vunpack.c.0.s8 %v1270
        %v1272 = vlaneseq
        %v1273 = vshrl.u32 %v1272, 7
        %v1274 = vsub.s32 %v1271, %v1273
        %v1275 = vrot.slane %v1261, %v1274
        %v1276 = vcombine.high %v1268, %v1268
        %v1277 = vcombine.high %v1275, %v1275
        %v1278 = vcombine.high %v814, %v814
        %v1280 = vunpack.c.l.s4 1983009808
        %v1281 = vunpack.c.0.s8 %v1280
        %v1282 = vlaneseq
        %v1283 = vshrl.u32 %v1282, 7
        %v1284 = vsub.s32 %v1281, %v1283
        %v1285 = vrot.slane %v814, %v1284
        %v1287 = vunpack.c.l.s4 1983009808
        %v1288 = vunpack.c.0.s8 %v1287
        %v1289 = vlaneseq
        %v1290 = vshrl.u32 %v1289, 7
        %v1291 = vsub.s32 %v1288, %v1290
        %v1292 = vrot.slane %v1278, %v1291
        %v1293 = vcombine.high %v1285, %v1285
        %v1294 = vcombine.high %v1292, %v1292
        %v1295 = vcombine.high %v815, %v815
        %v1297 = vunpack.c.l.s4 1983009808
        %v1298 = vunpack.c.0.s8 %v1297
        %v1299 = vlaneseq
        %v1300 = vshrl.u32 %v1299, 7
        %v1301 = vsub.s32 %v1298, %v1300
        %v1302 = vrot.slane %v815, %v1301
        %v1304 = vunpack.c.l.s4 1983009808
        %v1305 = vunpack.c.0.s8 %v1304
        %v1306 = vlaneseq
        %v1307 = vshrl.u32 %v1306, 7
        %v1308 = vsub.s32 %v1305, %v1307
        %v1309 = vrot.slane %v1295, %v1308
        %v1310 = vcombine.high %v1302, %v1302
        %v1311 = vcombine.high %v1309, %v1309
        %v1312 = vcombine.high %v816, %v816
        %v1314 = vunpack.c.l.s4 1983009808
        %v1315 = vunpack.c.0.s8 %v1314
        %v1316 = vlaneseq
        %v1317 = vshrl.u32 %v1316, 7
        %v1318 = vsub.s32 %v1315, %v1317
        %v1319 = vrot.slane %v816, %v1318
        %v1321 = vunpack.c.l.s4 1983009808
        %v1322 = vunpack.c.0.s8 %v1321
        %v1323 = vlaneseq
        %v1324 = vshrl.u32 %v1323, 7
        %v1325 = vsub.s32 %v1322, %v1324
        %v1326 = vrot.slane %v1312, %v1325
        %v1327 = vcombine.high %v1319, %v1319
        %v1328 = vcombine.high %v1326, %v1326
        %v1329 = vcombine.high %v817, %v817
        %v1331 = vunpack.c.l.s4 1983009808
        %v1332 = vunpack.c.0.s8 %v1331
        %v1333 = vlaneseq
        %v1334 = vshrl.u32 %v1333, 7
        %v1335 = vsub.s32 %v1332, %v1334
        %v1336 = vrot.slane %v817, %v1335
        %v1338 = vunpack.c.l.s4 1983009808
        %v1339 = vunpack.c.0.s8 %v1338
        %v1340 = vlaneseq
        %v1341 = vshrl.u32 %v1340, 7
        %v1342 = vsub.s32 %v1339, %v1341
        %v1343 = vrot.slane %v1329, %v1342
        %v1344 = vcombine.high %v1336, %v1336
        %v1345 = vcombine.high %v1343, %v1343
        %v1346 = vcombine.high %v818, %v818
        %v1348 = vunpack.c.l.s4 1983009808
        %v1349 = vunpack.c.0.s8 %v1348
        %v1350 = vlaneseq
        %v1351 = vshrl.u32 %v1350, 7
        %v1352 = vsub.s32 %v1349, %v1351
        %v1353 = vrot.slane %v818, %v1352
        %v1355 = vunpack.c.l.s4 1983009808
        %v1356 = vunpack.c.0.s8 %v1355
        %v1357 = vlaneseq
        %v1358 = vshrl.u32 %v1357, 7
        %v1359 = vsub.s32 %v1356, %v1358
        %v1360 = vrot.slane %v1346, %v1359
        %v1361 = vcombine.high %v1353, %v1353
        %v1362 = vcombine.high %v1360, %v1360
        %v1363 = vcombine.high %v819, %v819
        %v1365 = vunpack.c.l.s4 1983009808
        %v1366 = vunpack.c.0.s8 %v1365
        %v1367 = vlaneseq
        %v1368 = vshrl.u32 %v1367, 7
        %v1369 = vsub.s32 %v1366, %v1368
        %v1370 = vrot.slane %v819, %v1369
        %v1372 = vunpack.c.l.s4 1983009808
        %v1373 = vunpack.c.0.s8 %v1372
        %v1374 = vlaneseq
        %v1375 = vshrl.u32 %v1374, 7
        %v1376 = vsub.s32 %v1373, %v1375
        %v1377 = vrot.slane %v1363, %v1376
        %v1378 = vcombine.high %v1370, %v1370
        %v1379 = vcombine.high %v1377, %v1377
        %v1380 = vcombine.high %v820, %v820
        %v1382 = vunpack.c.l.s4 1983009808
        %v1383 = vunpack.c.0.s8 %v1382
        %v1384 = vlaneseq
        %v1385 = vshrl.u32 %v1384, 7
        %v1386 = vsub.s32 %v1383, %v1385
        %v1387 = vrot.slane %v820, %v1386
        %v1389 = vunpack.c.l.s4 1983009808
        %v1390 = vunpack.c.0.s8 %v1389
        %v1391 = vlaneseq
        %v1392 = vshrl.u32 %v1391, 7
        %v1393 = vsub.s32 %v1390, %v1392
        %v1394 = vrot.slane %v1380, %v1393
        %v1395 = vcombine.high %v1387, %v1387
        %v1396 = vcombine.high %v1394, %v1394
        %vm1525 = vcmask 254976
        %v1526 = vsel %vm1525, %v860, -inf
        %v1527 = vrot.slane %v1526, 4
        %v1528 = vmax.f32 %v1526, %v1527
        %v1529 = vrot.slane %v1528, 2
        %v1530 = vmax.f32 %v1528, %v1529
        %v1531 = vrot.slane %v1530, 1
        %v1532 = vmax.f32 %v1530, %v1531
        %v1533 = vsel %vm1525, %v868, -inf
        %v1534 = vrot.slane %v1533, 4
        %v1535 = vmax.f32 %v1533, %v1534
        %v1536 = vrot.slane %v1535, 2
        %v1537 = vmax.f32 %v1535, %v1536
        %v1538 = vrot.slane %v1537, 1
        %v1539 = vmax.f32 %v1537, %v1538
        %v1540 = vsel %vm1525, %v867, -inf
        %v1541 = vrot.slane %v1540, 4
        %v1542 = vmax.f32 %v1540, %v1541
        %v1543 = vrot.slane %v1542, 2
        %v1544 = vmax.f32 %v1542, %v1543
        %v1545 = vrot.slane %v1544, 1
        %v1546 = vmax.f32 %v1544, %v1545
        %v1547 = vsel %vm1525, %v869, -inf
        %v1548 = vrot.slane %v1547, 4
        %v1549 = vmax.f32 %v1547, %v1548
        %v1550 = vrot.slane %v1549, 2
        %v1551 = vmax.f32 %v1549, %v1550
        %v1552 = vrot.slane %v1551, 1
        %v1553 = vmax.f32 %v1551, %v1552
        %v1554 = vsel %vm1525, %v877, -inf
        %v1555 = vrot.slane %v1554, 4
        %v1556 = vmax.f32 %v1554, %v1555
        %v1557 = vrot.slane %v1556, 2
        %v1558 = vmax.f32 %v1556, %v1557
        %v1559 = vrot.slane %v1558, 1
        %v1560 = vmax.f32 %v1558, %v1559
        %v1561 = vsel %vm1525, %v885, -inf
        %v1562 = vrot.slane %v1561, 4
        %v1563 = vmax.f32 %v1561, %v1562
        %v1564 = vrot.slane %v1563, 2
        %v1565 = vmax.f32 %v1563, %v1564
        %v1566 = vrot.slane %v1565, 1
        %v1567 = vmax.f32 %v1565, %v1566
        %v1568 = vsel %vm1525, %v884, -inf
        %v1569 = vrot.slane %v1568, 4
        %v1570 = vmax.f32 %v1568, %v1569
        %v1571 = vrot.slane %v1570, 2
        %v1572 = vmax.f32 %v1570, %v1571
        %v1573 = vrot.slane %v1572, 1
        %v1574 = vmax.f32 %v1572, %v1573
        %v1575 = vsel %vm1525, %v886, -inf
        %v1576 = vrot.slane %v1575, 4
        %v1577 = vmax.f32 %v1575, %v1576
        %v1578 = vrot.slane %v1577, 2
        %v1579 = vmax.f32 %v1577, %v1578
        %v1580 = vrot.slane %v1579, 1
        %v1581 = vmax.f32 %v1579, %v1580
        %v1582 = vsel %vm1525, %v894, -inf
        %v1583 = vrot.slane %v1582, 4
        %v1584 = vmax.f32 %v1582, %v1583
        %v1585 = vrot.slane %v1584, 2
        %v1586 = vmax.f32 %v1584, %v1585
        %v1587 = vrot.slane %v1586, 1
        %v1588 = vmax.f32 %v1586, %v1587
        %v1589 = vsel %vm1525, %v902, -inf
        %v1590 = vrot.slane %v1589, 4
        %v1591 = vmax.f32 %v1589, %v1590
        %v1592 = vrot.slane %v1591, 2
        %v1593 = vmax.f32 %v1591, %v1592
        %v1594 = vrot.slane %v1593, 1
        %v1595 = vmax.f32 %v1593, %v1594
        %v1596 = vsel %vm1525, %v901, -inf
        %v1597 = vrot.slane %v1596, 4
        %v1598 = vmax.f32 %v1596, %v1597
        %v1599 = vrot.slane %v1598, 2
        %v1600 = vmax.f32 %v1598, %v1599
        %v1601 = vrot.slane %v1600, 1
        %v1602 = vmax.f32 %v1600, %v1601
        %v1603 = vsel %vm1525, %v903, -inf
        %v1604 = vrot.slane %v1603, 4
        %v1605 = vmax.f32 %v1603, %v1604
        %v1606 = vrot.slane %v1605, 2
        %v1607 = vmax.f32 %v1605, %v1606
        %v1608 = vrot.slane %v1607, 1
        %v1609 = vmax.f32 %v1607, %v1608
        %v1610 = vsel %vm1525, %v911, -inf
        %v1611 = vrot.slane %v1610, 4
        %v1612 = vmax.f32 %v1610, %v1611
        %v1613 = vrot.slane %v1612, 2
        %v1614 = vmax.f32 %v1612, %v1613
        %v1615 = vrot.slane %v1614, 1
        %v1616 = vmax.f32 %v1614, %v1615
        %v1617 = vsel %vm1525, %v919, -inf
        %v1618 = vrot.slane %v1617, 4
        %v1619 = vmax.f32 %v1617, %v1618
        %v1620 = vrot.slane %v1619, 2
        %v1621 = vmax.f32 %v1619, %v1620
        %v1622 = vrot.slane %v1621, 1
        %v1623 = vmax.f32 %v1621, %v1622
        %v1624 = vsel %vm1525, %v918, -inf
        %v1625 = vrot.slane %v1624, 4
        %v1626 = vmax.f32 %v1624, %v1625
        %v1627 = vrot.slane %v1626, 2
        %v1628 = vmax.f32 %v1626, %v1627
        %v1629 = vrot.slane %v1628, 1
        %v1630 = vmax.f32 %v1628, %v1629
        %v1631 = vsel %vm1525, %v920, -inf
        %v1632 = vrot.slane %v1631, 4
        %v1633 = vmax.f32 %v1631, %v1632
        %v1634 = vrot.slane %v1633, 2
        %v1635 = vmax.f32 %v1633, %v1634
        %v1636 = vrot.slane %v1635, 1
        %v1637 = vmax.f32 %v1635, %v1636
        %v1638 = vsel %vm1525, %v928, -inf
        %v1639 = vrot.slane %v1638, 4
        %v1640 = vmax.f32 %v1638, %v1639
        %v1641 = vrot.slane %v1640, 2
        %v1642 = vmax.f32 %v1640, %v1641
        %v1643 = vrot.slane %v1642, 1
        %v1644 = vmax.f32 %v1642, %v1643
        %v1645 = vsel %vm1525, %v936, -inf
        %v1646 = vrot.slane %v1645, 4
        %v1647 = vmax.f32 %v1645, %v1646
        %v1648 = vrot.slane %v1647, 2
        %v1649 = vmax.f32 %v1647, %v1648
        %v1650 = vrot.slane %v1649, 1
        %v1651 = vmax.f32 %v1649, %v1650
        %v1652 = vsel %vm1525, %v935, -inf
        %v1653 = vrot.slane %v1652, 4
        %v1654 = vmax.f32 %v1652, %v1653
        %v1655 = vrot.slane %v1654, 2
        %v1656 = vmax.f32 %v1654, %v1655
        %v1657 = vrot.slane %v1656, 1
        %v1658 = vmax.f32 %v1656, %v1657
        %v1659 = vsel %vm1525, %v937, -inf
        %v1660 = vrot.slane %v1659, 4
        %v1661 = vmax.f32 %v1659, %v1660
        %v1662 = vrot.slane %v1661, 2
        %v1663 = vmax.f32 %v1661, %v1662
        %v1664 = vrot.slane %v1663, 1
        %v1665 = vmax.f32 %v1663, %v1664
        %v1666 = vsel %vm1525, %v945, -inf
        %v1667 = vrot.slane %v1666, 4
        %v1668 = vmax.f32 %v1666, %v1667
        %v1669 = vrot.slane %v1668, 2
        %v1670 = vmax.f32 %v1668, %v1669
        %v1671 = vrot.slane %v1670, 1
        %v1672 = vmax.f32 %v1670, %v1671
        %v1673 = vsel %vm1525, %v953, -inf
        %v1674 = vrot.slane %v1673, 4
        %v1675 = vmax.f32 %v1673, %v1674
        %v1676 = vrot.slane %v1675, 2
        %v1677 = vmax.f32 %v1675, %v1676
        %v1678 = vrot.slane %v1677, 1
        %v1679 = vmax.f32 %v1677, %v1678
        %v1680 = vsel %vm1525, %v952, -inf
        %v1681 = vrot.slane %v1680, 4
        %v1682 = vmax.f32 %v1680, %v1681
        %v1683 = vrot.slane %v1682, 2
        %v1684 = vmax.f32 %v1682, %v1683
        %v1685 = vrot.slane %v1684, 1
        %v1686 = vmax.f32 %v1684, %v1685
        %v1687 = vsel %vm1525, %v954, -inf
        %v1688 = vrot.slane %v1687, 4
        %v1689 = vmax.f32 %v1687, %v1688
        %v1690 = vrot.slane %v1689, 2
        %v1691 = vmax.f32 %v1689, %v1690
        %v1692 = vrot.slane %v1691, 1
        %v1693 = vmax.f32 %v1691, %v1692
        %v1694 = vsel %vm1525, %v962, -inf
        %v1695 = vrot.slane %v1694, 4
        %v1696 = vmax.f32 %v1694, %v1695
        %v1697 = vrot.slane %v1696, 2
        %v1698 = vmax.f32 %v1696, %v1697
        %v1699 = vrot.slane %v1698, 1
        %v1700 = vmax.f32 %v1698, %v1699
        %v1701 = vsel %vm1525, %v970, -inf
        %v1702 = vrot.slane %v1701, 4
        %v1703 = vmax.f32 %v1701, %v1702
        %v1704 = vrot.slane %v1703, 2
        %v1705 = vmax.f32 %v1703, %v1704
        %v1706 = vrot.slane %v1705, 1
        %v1707 = vmax.f32 %v1705, %v1706
        %v1708 = vsel %vm1525, %v969, -inf
        %v1709 = vrot.slane %v1708, 4
        %v1710 = vmax.f32 %v1708, %v1709
        %v1711 = vrot.slane %v1710, 2
        %v1712 = vmax.f32 %v1710, %v1711
        %v1713 = vrot.slane %v1712, 1
        %v1714 = vmax.f32 %v1712, %v1713
        %v1715 = vsel %vm1525, %v971, -inf
        %v1716 = vrot.slane %v1715, 4
        %v1717 = vmax.f32 %v1715, %v1716
        %v1718 = vrot.slane %v1717, 2
        %v1719 = vmax.f32 %v1717, %v1718
        %v1720 = vrot.slane %v1719, 1
        %v1721 = vmax.f32 %v1719, %v1720
        %v1722 = vsel %vm1525, %v979, -inf
        %v1723 = vrot.slane %v1722, 4
        %v1724 = vmax.f32 %v1722, %v1723
        %v1725 = vrot.slane %v1724, 2
        %v1726 = vmax.f32 %v1724, %v1725
        %v1727 = vrot.slane %v1726, 1
        %v1728 = vmax.f32 %v1726, %v1727
        %v1729 = vsel %vm1525, %v987, -inf
        %v1730 = vrot.slane %v1729, 4
        %v1731 = vmax.f32 %v1729, %v1730
        %v1732 = vrot.slane %v1731, 2
        %v1733 = vmax.f32 %v1731, %v1732
        %v1734 = vrot.slane %v1733, 1
        %v1735 = vmax.f32 %v1733, %v1734
        %v1736 = vsel %vm1525, %v986, -inf
        %v1737 = vrot.slane %v1736, 4
        %v1738 = vmax.f32 %v1736, %v1737
        %v1739 = vrot.slane %v1738, 2
        %v1740 = vmax.f32 %v1738, %v1739
        %v1741 = vrot.slane %v1740, 1
        %v1742 = vmax.f32 %v1740, %v1741
        %v1743 = vsel %vm1525, %v988, -inf
        %v1744 = vrot.slane %v1743, 4
        %v1745 = vmax.f32 %v1743, %v1744
        %v1746 = vrot.slane %v1745, 2
        %v1747 = vmax.f32 %v1745, %v1746
        %v1748 = vrot.slane %v1747, 1
        %v1749 = vmax.f32 %v1747, %v1748
        %v1750 = vsel %vm1525, %v996, -inf
        %v1751 = vrot.slane %v1750, 4
        %v1752 = vmax.f32 %v1750, %v1751
        %v1753 = vrot.slane %v1752, 2
        %v1754 = vmax.f32 %v1752, %v1753
        %v1755 = vrot.slane %v1754, 1
        %v1756 = vmax.f32 %v1754, %v1755
        %v1757 = vsel %vm1525, %v1004, -inf
        %v1758 = vrot.slane %v1757, 4
        %v1759 = vmax.f32 %v1757, %v1758
        %v1760 = vrot.slane %v1759, 2
        %v1761 = vmax.f32 %v1759, %v1760
        %v1762 = vrot.slane %v1761, 1
        %v1763 = vmax.f32 %v1761, %v1762
        %v1764 = vsel %vm1525, %v1003, -inf
        %v1765 = vrot.slane %v1764, 4
        %v1766 = vmax.f32 %v1764, %v1765
        %v1767 = vrot.slane %v1766, 2
        %v1768 = vmax.f32 %v1766, %v1767
        %v1769 = vrot.slane %v1768, 1
        %v1770 = vmax.f32 %v1768, %v1769
        %v1771 = vsel %vm1525, %v1005, -inf
        %v1772 = vrot.slane %v1771, 4
        %v1773 = vmax.f32 %v1771, %v1772
        %v1774 = vrot.slane %v1773, 2
        %v1775 = vmax.f32 %v1773, %v1774
        %v1776 = vrot.slane %v1775, 1
        %v1777 = vmax.f32 %v1775, %v1776
        %v1778 = vsel %vm1525, %v1013, -inf
        %v1779 = vrot.slane %v1778, 4
        %v1780 = vmax.f32 %v1778, %v1779
        %v1781 = vrot.slane %v1780, 2
        %v1782 = vmax.f32 %v1780, %v1781
        %v1783 = vrot.slane %v1782, 1
        %v1784 = vmax.f32 %v1782, %v1783
        %v1785 = vsel %vm1525, %v1021, -inf
        %v1786 = vrot.slane %v1785, 4
        %v1787 = vmax.f32 %v1785, %v1786
        %v1788 = vrot.slane %v1787, 2
        %v1789 = vmax.f32 %v1787, %v1788
        %v1790 = vrot.slane %v1789, 1
        %v1791 = vmax.f32 %v1789, %v1790
        %v1792 = vsel %vm1525, %v1020, -inf
        %v1793 = vrot.slane %v1792, 4
        %v1794 = vmax.f32 %v1792, %v1793
        %v1795 = vrot.slane %v1794, 2
        %v1796 = vmax.f32 %v1794, %v1795
        %v1797 = vrot.slane %v1796, 1
        %v1798 = vmax.f32 %v1796, %v1797
        %v1799 = vsel %vm1525, %v1022, -inf
        %v1800 = vrot.slane %v1799, 4
        %v1801 = vmax.f32 %v1799, %v1800
        %v1802 = vrot.slane %v1801, 2
        %v1803 = vmax.f32 %v1801, %v1802
        %v1804 = vrot.slane %v1803, 1
        %v1805 = vmax.f32 %v1803, %v1804
        %v1806 = vsel %vm1525, %v1030, -inf
        %v1807 = vrot.slane %v1806, 4
        %v1808 = vmax.f32 %v1806, %v1807
        %v1809 = vrot.slane %v1808, 2
        %v1810 = vmax.f32 %v1808, %v1809
        %v1811 = vrot.slane %v1810, 1
        %v1812 = vmax.f32 %v1810, %v1811
        %v1813 = vsel %vm1525, %v1038, -inf
        %v1814 = vrot.slane %v1813, 4
        %v1815 = vmax.f32 %v1813, %v1814
        %v1816 = vrot.slane %v1815, 2
        %v1817 = vmax.f32 %v1815, %v1816
        %v1818 = vrot.slane %v1817, 1
        %v1819 = vmax.f32 %v1817, %v1818
        %v1820 = vsel %vm1525, %v1037, -inf
        %v1821 = vrot.slane %v1820, 4
        %v1822 = vmax.f32 %v1820, %v1821
        %v1823 = vrot.slane %v1822, 2
        %v1824 = vmax.f32 %v1822, %v1823
        %v1825 = vrot.slane %v1824, 1
        %v1826 = vmax.f32 %v1824, %v1825
        %v1827 = vsel %vm1525, %v1039, -inf
        %v1828 = vrot.slane %v1827, 4
        %v1829 = vmax.f32 %v1827, %v1828
        %v1830 = vrot.slane %v1829, 2
        %v1831 = vmax.f32 %v1829, %v1830
        %v1832 = vrot.slane %v1831, 1
        %v1833 = vmax.f32 %v1831, %v1832
        %v1834 = vsel %vm1525, %v1047, -inf
        %v1835 = vrot.slane %v1834, 4
        %v1836 = vmax.f32 %v1834, %v1835
        %v1837 = vrot.slane %v1836, 2
        %v1838 = vmax.f32 %v1836, %v1837
        %v1839 = vrot.slane %v1838, 1
        %v1840 = vmax.f32 %v1838, %v1839
        %v1841 = vsel %vm1525, %v1055, -inf
        %v1842 = vrot.slane %v1841, 4
        %v1843 = vmax.f32 %v1841, %v1842
        %v1844 = vrot.slane %v1843, 2
        %v1845 = vmax.f32 %v1843, %v1844
        %v1846 = vrot.slane %v1845, 1
        %v1847 = vmax.f32 %v1845, %v1846
        %v1848 = vsel %vm1525, %v1054, -inf
        %v1849 = vrot.slane %v1848, 4
        %v1850 = vmax.f32 %v1848, %v1849
        %v1851 = vrot.slane %v1850, 2
        %v1852 = vmax.f32 %v1850, %v1851
        %v1853 = vrot.slane %v1852, 1
        %v1854 = vmax.f32 %v1852, %v1853
        %v1855 = vsel %vm1525, %v1056, -inf
        %v1856 = vrot.slane %v1855, 4
        %v1857 = vmax.f32 %v1855, %v1856
        %v1858 = vrot.slane %v1857, 2
        %v1859 = vmax.f32 %v1857, %v1858
        %v1860 = vrot.slane %v1859, 1
        %v1861 = vmax.f32 %v1859, %v1860
        %v1862 = vsel %vm1525, %v1064, -inf
        %v1863 = vrot.slane %v1862, 4
        %v1864 = vmax.f32 %v1862, %v1863
        %v1865 = vrot.slane %v1864, 2
        %v1866 = vmax.f32 %v1864, %v1865
        %v1867 = vrot.slane %v1866, 1
        %v1868 = vmax.f32 %v1866, %v1867
        %v1869 = vsel %vm1525, %v1072, -inf
        %v1870 = vrot.slane %v1869, 4
        %v1871 = vmax.f32 %v1869, %v1870
        %v1872 = vrot.slane %v1871, 2
        %v1873 = vmax.f32 %v1871, %v1872
        %v1874 = vrot.slane %v1873, 1
        %v1875 = vmax.f32 %v1873, %v1874
        %v1876 = vsel %vm1525, %v1071, -inf
        %v1877 = vrot.slane %v1876, 4
        %v1878 = vmax.f32 %v1876, %v1877
        %v1879 = vrot.slane %v1878, 2
        %v1880 = vmax.f32 %v1878, %v1879
        %v1881 = vrot.slane %v1880, 1
        %v1882 = vmax.f32 %v1880, %v1881
        %v1883 = vsel %vm1525, %v1073, -inf
        %v1884 = vrot.slane %v1883, 4
        %v1885 = vmax.f32 %v1883, %v1884
        %v1886 = vrot.slane %v1885, 2
        %v1887 = vmax.f32 %v1885, %v1886
        %v1888 = vrot.slane %v1887, 1
        %v1889 = vmax.f32 %v1887, %v1888
        %v1890 = vsel %vm1525, %v1081, -inf
        %v1891 = vrot.slane %v1890, 4
        %v1892 = vmax.f32 %v1890, %v1891
        %v1893 = vrot.slane %v1892, 2
        %v1894 = vmax.f32 %v1892, %v1893
        %v1895 = vrot.slane %v1894, 1
        %v1896 = vmax.f32 %v1894, %v1895
        %v1897 = vsel %vm1525, %v1089, -inf
        %v1898 = vrot.slane %v1897, 4
        %v1899 = vmax.f32 %v1897, %v1898
        %v1900 = vrot.slane %v1899, 2
        %v1901 = vmax.f32 %v1899, %v1900
        %v1902 = vrot.slane %v1901, 1
        %v1903 = vmax.f32 %v1901, %v1902
        %v1904 = vsel %vm1525, %v1088, -inf
        %v1905 = vrot.slane %v1904, 4
        %v1906 = vmax.f32 %v1904, %v1905
        %v1907 = vrot.slane %v1906, 2
        %v1908 = vmax.f32 %v1906, %v1907
        %v1909 = vrot.slane %v1908, 1
        %v1910 = vmax.f32 %v1908, %v1909
        %v1911 = vsel %vm1525, %v1090, -inf
        %v1912 = vrot.slane %v1911, 4
        %v1913 = vmax.f32 %v1911, %v1912
        %v1914 = vrot.slane %v1913, 2
        %v1915 = vmax.f32 %v1913, %v1914
        %v1916 = vrot.slane %v1915, 1
        %v1917 = vmax.f32 %v1915, %v1916
        %v1918 = vsel %vm1525, %v1098, -inf
        %v1919 = vrot.slane %v1918, 4
        %v1920 = vmax.f32 %v1918, %v1919
        %v1921 = vrot.slane %v1920, 2
        %v1922 = vmax.f32 %v1920, %v1921
        %v1923 = vrot.slane %v1922, 1
        %v1924 = vmax.f32 %v1922, %v1923
        %v1925 = vsel %vm1525, %v1106, -inf
        %v1926 = vrot.slane %v1925, 4
        %v1927 = vmax.f32 %v1925, %v1926
        %v1928 = vrot.slane %v1927, 2
        %v1929 = vmax.f32 %v1927, %v1928
        %v1930 = vrot.slane %v1929, 1
        %v1931 = vmax.f32 %v1929, %v1930
        %v1932 = vsel %vm1525, %v1105, -inf
        %v1933 = vrot.slane %v1932, 4
        %v1934 = vmax.f32 %v1932, %v1933
        %v1935 = vrot.slane %v1934, 2
        %v1936 = vmax.f32 %v1934, %v1935
        %v1937 = vrot.slane %v1936, 1
        %v1938 = vmax.f32 %v1936, %v1937
        %v1939 = vsel %vm1525, %v1107, -inf
        %v1940 = vrot.slane %v1939, 4
        %v1941 = vmax.f32 %v1939, %v1940
        %v1942 = vrot.slane %v1941, 2
        %v1943 = vmax.f32 %v1941, %v1942
        %v1944 = vrot.slane %v1943, 1
        %v1945 = vmax.f32 %v1943, %v1944
        %v1946 = vsel %vm1525, %v1115, -inf
        %v1947 = vrot.slane %v1946, 4
        %v1948 = vmax.f32 %v1946, %v1947
        %v1949 = vrot.slane %v1948, 2
        %v1950 = vmax.f32 %v1948, %v1949
        %v1951 = vrot.slane %v1950, 1
        %v1952 = vmax.f32 %v1950, %v1951
        %v1953 = vsel %vm1525, %v1123, -inf
        %v1954 = vrot.slane %v1953, 4
        %v1955 = vmax.f32 %v1953, %v1954
        %v1956 = vrot.slane %v1955, 2
        %v1957 = vmax.f32 %v1955, %v1956
        %v1958 = vrot.slane %v1957, 1
        %v1959 = vmax.f32 %v1957, %v1958
        %v1960 = vsel %vm1525, %v1122, -inf
        %v1961 = vrot.slane %v1960, 4
        %v1962 = vmax.f32 %v1960, %v1961
        %v1963 = vrot.slane %v1962, 2
        %v1964 = vmax.f32 %v1962, %v1963
        %v1965 = vrot.slane %v1964, 1
        %v1966 = vmax.f32 %v1964, %v1965
        %v1967 = vsel %vm1525, %v1124, -inf
        %v1968 = vrot.slane %v1967, 4
        %v1969 = vmax.f32 %v1967, %v1968
        %v1970 = vrot.slane %v1969, 2
        %v1971 = vmax.f32 %v1969, %v1970
        %v1972 = vrot.slane %v1971, 1
        %v1973 = vmax.f32 %v1971, %v1972
        %v1974 = vsel %vm1525, %v1132, -inf
        %v1975 = vrot.slane %v1974, 4
        %v1976 = vmax.f32 %v1974, %v1975
        %v1977 = vrot.slane %v1976, 2
        %v1978 = vmax.f32 %v1976, %v1977
        %v1979 = vrot.slane %v1978, 1
        %v1980 = vmax.f32 %v1978, %v1979
        %v1981 = vsel %vm1525, %v1140, -inf
        %v1982 = vrot.slane %v1981, 4
        %v1983 = vmax.f32 %v1981, %v1982
        %v1984 = vrot.slane %v1983, 2
        %v1985 = vmax.f32 %v1983, %v1984
        %v1986 = vrot.slane %v1985, 1
        %v1987 = vmax.f32 %v1985, %v1986
        %v1988 = vsel %vm1525, %v1139, -inf
        %v1989 = vrot.slane %v1988, 4
        %v1990 = vmax.f32 %v1988, %v1989
        %v1991 = vrot.slane %v1990, 2
        %v1992 = vmax.f32 %v1990, %v1991
        %v1993 = vrot.slane %v1992, 1
        %v1994 = vmax.f32 %v1992, %v1993
        %v1995 = vsel %vm1525, %v1141, -inf
        %v1996 = vrot.slane %v1995, 4
        %v1997 = vmax.f32 %v1995, %v1996
        %v1998 = vrot.slane %v1997, 2
        %v1999 = vmax.f32 %v1997, %v1998
        %v2000 = vrot.slane %v1999, 1
        %v2001 = vmax.f32 %v1999, %v2000
        %v2002 = vsel %vm1525, %v1149, -inf
        %v2003 = vrot.slane %v2002, 4
        %v2004 = vmax.f32 %v2002, %v2003
        %v2005 = vrot.slane %v2004, 2
        %v2006 = vmax.f32 %v2004, %v2005
        %v2007 = vrot.slane %v2006, 1
        %v2008 = vmax.f32 %v2006, %v2007
        %v2009 = vsel %vm1525, %v1157, -inf
        %v2010 = vrot.slane %v2009, 4
        %v2011 = vmax.f32 %v2009, %v2010
        %v2012 = vrot.slane %v2011, 2
        %v2013 = vmax.f32 %v2011, %v2012
        %v2014 = vrot.slane %v2013, 1
        %v2015 = vmax.f32 %v2013, %v2014
        %v2016 = vsel %vm1525, %v1156, -inf
        %v2017 = vrot.slane %v2016, 4
        %v2018 = vmax.f32 %v2016, %v2017
        %v2019 = vrot.slane %v2018, 2
        %v2020 = vmax.f32 %v2018, %v2019
        %v2021 = vrot.slane %v2020, 1
        %v2022 = vmax.f32 %v2020, %v2021
        %v2023 = vsel %vm1525, %v1158, -inf
        %v2024 = vrot.slane %v2023, 4
        %v2025 = vmax.f32 %v2023, %v2024
        %v2026 = vrot.slane %v2025, 2
        %v2027 = vmax.f32 %v2025, %v2026
        %v2028 = vrot.slane %v2027, 1
        %v2029 = vmax.f32 %v2027, %v2028
        %v2030 = vsel %vm1525, %v1166, -inf
        %v2031 = vrot.slane %v2030, 4
        %v2032 = vmax.f32 %v2030, %v2031
        %v2033 = vrot.slane %v2032, 2
        %v2034 = vmax.f32 %v2032, %v2033
        %v2035 = vrot.slane %v2034, 1
        %v2036 = vmax.f32 %v2034, %v2035
        %v2037 = vsel %vm1525, %v1174, -inf
        %v2038 = vrot.slane %v2037, 4
        %v2039 = vmax.f32 %v2037, %v2038
        %v2040 = vrot.slane %v2039, 2
        %v2041 = vmax.f32 %v2039, %v2040
        %v2042 = vrot.slane %v2041, 1
        %v2043 = vmax.f32 %v2041, %v2042
        %v2044 = vsel %vm1525, %v1173, -inf
        %v2045 = vrot.slane %v2044, 4
        %v2046 = vmax.f32 %v2044, %v2045
        %v2047 = vrot.slane %v2046, 2
        %v2048 = vmax.f32 %v2046, %v2047
        %v2049 = vrot.slane %v2048, 1
        %v2050 = vmax.f32 %v2048, %v2049
        %v2051 = vsel %vm1525, %v1175, -inf
        %v2052 = vrot.slane %v2051, 4
        %v2053 = vmax.f32 %v2051, %v2052
        %v2054 = vrot.slane %v2053, 2
        %v2055 = vmax.f32 %v2053, %v2054
        %v2056 = vrot.slane %v2055, 1
        %v2057 = vmax.f32 %v2055, %v2056
        %v2058 = vsel %vm1525, %v1183, -inf
        %v2059 = vrot.slane %v2058, 4
        %v2060 = vmax.f32 %v2058, %v2059
        %v2061 = vrot.slane %v2060, 2
        %v2062 = vmax.f32 %v2060, %v2061
        %v2063 = vrot.slane %v2062, 1
        %v2064 = vmax.f32 %v2062, %v2063
        %v2065 = vsel %vm1525, %v1191, -inf
        %v2066 = vrot.slane %v2065, 4
        %v2067 = vmax.f32 %v2065, %v2066
        %v2068 = vrot.slane %v2067, 2
        %v2069 = vmax.f32 %v2067, %v2068
        %v2070 = vrot.slane %v2069, 1
        %v2071 = vmax.f32 %v2069, %v2070
        %v2072 = vsel %vm1525, %v1190, -inf
        %v2073 = vrot.slane %v2072, 4
        %v2074 = vmax.f32 %v2072, %v2073
        %v2075 = vrot.slane %v2074, 2
        %v2076 = vmax.f32 %v2074, %v2075
        %v2077 = vrot.slane %v2076, 1
        %v2078 = vmax.f32 %v2076, %v2077
        %v2079 = vsel %vm1525, %v1192, -inf
        %v2080 = vrot.slane %v2079, 4
        %v2081 = vmax.f32 %v2079, %v2080
        %v2082 = vrot.slane %v2081, 2
        %v2083 = vmax.f32 %v2081, %v2082
        %v2084 = vrot.slane %v2083, 1
        %v2085 = vmax.f32 %v2083, %v2084
        %v2086 = vsel %vm1525, %v1200, -inf
        %v2087 = vrot.slane %v2086, 4
        %v2088 = vmax.f32 %v2086, %v2087
        %v2089 = vrot.slane %v2088, 2
        %v2090 = vmax.f32 %v2088, %v2089
        %v2091 = vrot.slane %v2090, 1
        %v2092 = vmax.f32 %v2090, %v2091
        %v2093 = vsel %vm1525, %v1208, -inf
        %v2094 = vrot.slane %v2093, 4
        %v2095 = vmax.f32 %v2093, %v2094
        %v2096 = vrot.slane %v2095, 2
        %v2097 = vmax.f32 %v2095, %v2096
        %v2098 = vrot.slane %v2097, 1
        %v2099 = vmax.f32 %v2097, %v2098
        %v2100 = vsel %vm1525, %v1207, -inf
        %v2101 = vrot.slane %v2100, 4
        %v2102 = vmax.f32 %v2100, %v2101
        %v2103 = vrot.slane %v2102, 2
        %v2104 = vmax.f32 %v2102, %v2103
        %v2105 = vrot.slane %v2104, 1
        %v2106 = vmax.f32 %v2104, %v2105
        %v2107 = vsel %vm1525, %v1209, -inf
        %v2108 = vrot.slane %v2107, 4
        %v2109 = vmax.f32 %v2107, %v2108
        %v2110 = vrot.slane %v2109, 2
        %v2111 = vmax.f32 %v2109, %v2110
        %v2112 = vrot.slane %v2111, 1
        %v2113 = vmax.f32 %v2111, %v2112
        %v2114 = vsel %vm1525, %v1217, -inf
        %v2115 = vrot.slane %v2114, 4
        %v2116 = vmax.f32 %v2114, %v2115
        %v2117 = vrot.slane %v2116, 2
        %v2118 = vmax.f32 %v2116, %v2117
        %v2119 = vrot.slane %v2118, 1
        %v2120 = vmax.f32 %v2118, %v2119
        %v2121 = vsel %vm1525, %v1225, -inf
        %v2122 = vrot.slane %v2121, 4
        %v2123 = vmax.f32 %v2121, %v2122
        %v2124 = vrot.slane %v2123, 2
        %v2125 = vmax.f32 %v2123, %v2124
        %v2126 = vrot.slane %v2125, 1
        %v2127 = vmax.f32 %v2125, %v2126
        %v2128 = vsel %vm1525, %v1224, -inf
        %v2129 = vrot.slane %v2128, 4
        %v2130 = vmax.f32 %v2128, %v2129
        %v2131 = vrot.slane %v2130, 2
        %v2132 = vmax.f32 %v2130, %v2131
        %v2133 = vrot.slane %v2132, 1
        %v2134 = vmax.f32 %v2132, %v2133
        %v2135 = vsel %vm1525, %v1226, -inf
        %v2136 = vrot.slane %v2135, 4
        %v2137 = vmax.f32 %v2135, %v2136
        %v2138 = vrot.slane %v2137, 2
        %v2139 = vmax.f32 %v2137, %v2138
        %v2140 = vrot.slane %v2139, 1
        %v2141 = vmax.f32 %v2139, %v2140
        %v2142 = vsel %vm1525, %v1234, -inf
        %v2143 = vrot.slane %v2142, 4
        %v2144 = vmax.f32 %v2142, %v2143
        %v2145 = vrot.slane %v2144, 2
        %v2146 = vmax.f32 %v2144, %v2145
        %v2147 = vrot.slane %v2146, 1
        %v2148 = vmax.f32 %v2146, %v2147
        %v2149 = vsel %vm1525, %v1242, -inf
        %v2150 = vrot.slane %v2149, 4
        %v2151 = vmax.f32 %v2149, %v2150
        %v2152 = vrot.slane %v2151, 2
        %v2153 = vmax.f32 %v2151, %v2152
        %v2154 = vrot.slane %v2153, 1
        %v2155 = vmax.f32 %v2153, %v2154
        %v2156 = vsel %vm1525, %v1241, -inf
        %v2157 = vrot.slane %v2156, 4
        %v2158 = vmax.f32 %v2156, %v2157
        %v2159 = vrot.slane %v2158, 2
        %v2160 = vmax.f32 %v2158, %v2159
        %v2161 = vrot.slane %v2160, 1
        %v2162 = vmax.f32 %v2160, %v2161
        %v2163 = vsel %vm1525, %v1243, -inf
        %v2164 = vrot.slane %v2163, 4
        %v2165 = vmax.f32 %v2163, %v2164
        %v2166 = vrot.slane %v2165, 2
        %v2167 = vmax.f32 %v2165, %v2166
        %v2168 = vrot.slane %v2167, 1
        %v2169 = vmax.f32 %v2167, %v2168
        %v2170 = vsel %vm1525, %v1251, -inf
        %v2171 = vrot.slane %v2170, 4
        %v2172 = vmax.f32 %v2170, %v2171
        %v2173 = vrot.slane %v2172, 2
        %v2174 = vmax.f32 %v2172, %v2173
        %v2175 = vrot.slane %v2174, 1
        %v2176 = vmax.f32 %v2174, %v2175
        %v2177 = vsel %vm1525, %v1259, -inf
        %v2178 = vrot.slane %v2177, 4
        %v2179 = vmax.f32 %v2177, %v2178
        %v2180 = vrot.slane %v2179, 2
        %v2181 = vmax.f32 %v2179, %v2180
        %v2182 = vrot.slane %v2181, 1
        %v2183 = vmax.f32 %v2181, %v2182
        %v2184 = vsel %vm1525, %v1258, -inf
        %v2185 = vrot.slane %v2184, 4
        %v2186 = vmax.f32 %v2184, %v2185
        %v2187 = vrot.slane %v2186, 2
        %v2188 = vmax.f32 %v2186, %v2187
        %v2189 = vrot.slane %v2188, 1
        %v2190 = vmax.f32 %v2188, %v2189
        %v2191 = vsel %vm1525, %v1260, -inf
        %v2192 = vrot.slane %v2191, 4
        %v2193 = vmax.f32 %v2191, %v2192
        %v2194 = vrot.slane %v2193, 2
        %v2195 = vmax.f32 %v2193, %v2194
        %v2196 = vrot.slane %v2195, 1
        %v2197 = vmax.f32 %v2195, %v2196
        %v2198 = vsel %vm1525, %v1268, -inf
        %v2199 = vrot.slane %v2198, 4
        %v2200 = vmax.f32 %v2198, %v2199
        %v2201 = vrot.slane %v2200, 2
        %v2202 = vmax.f32 %v2200, %v2201
        %v2203 = vrot.slane %v2202, 1
        %v2204 = vmax.f32 %v2202, %v2203
        %v2205 = vsel %vm1525, %v1276, -inf
        %v2206 = vrot.slane %v2205, 4
        %v2207 = vmax.f32 %v2205, %v2206
        %v2208 = vrot.slane %v2207, 2
        %v2209 = vmax.f32 %v2207, %v2208
        %v2210 = vrot.slane %v2209, 1
        %v2211 = vmax.f32 %v2209, %v2210
        %v2212 = vsel %vm1525, %v1275, -inf
        %v2213 = vrot.slane %v2212, 4
        %v2214 = vmax.f32 %v2212, %v2213
        %v2215 = vrot.slane %v2214, 2
        %v2216 = vmax.f32 %v2214, %v2215
        %v2217 = vrot.slane %v2216, 1
        %v2218 = vmax.f32 %v2216, %v2217
        %v2219 = vsel %vm1525, %v1277, -inf
        %v2220 = vrot.slane %v2219, 4
        %v2221 = vmax.f32 %v2219, %v2220
        %v2222 = vrot.slane %v2221, 2
        %v2223 = vmax.f32 %v2221, %v2222
        %v2224 = vrot.slane %v2223, 1
        %v2225 = vmax.f32 %v2223, %v2224
        %v2226 = vsel %vm1525, %v1285, -inf
        %v2227 = vrot.slane %v2226, 4
        %v2228 = vmax.f32 %v2226, %v2227
        %v2229 = vrot.slane %v2228, 2
        %v2230 = vmax.f32 %v2228, %v2229
        %v2231 = vrot.slane %v2230, 1
        %v2232 = vmax.f32 %v2230, %v2231
        %v2233 = vsel %vm1525, %v1293, -inf
        %v2234 = vrot.slane %v2233, 4
        %v2235 = vmax.f32 %v2233, %v2234
        %v2236 = vrot.slane %v2235, 2
        %v2237 = vmax.f32 %v2235, %v2236
        %v2238 = vrot.slane %v2237, 1
        %v2239 = vmax.f32 %v2237, %v2238
        %v2240 = vsel %vm1525, %v1292, -inf
        %v2241 = vrot.slane %v2240, 4
        %v2242 = vmax.f32 %v2240, %v2241
        %v2243 = vrot.slane %v2242, 2
        %v2244 = vmax.f32 %v2242, %v2243
        %v2245 = vrot.slane %v2244, 1
        %v2246 = vmax.f32 %v2244, %v2245
        %v2247 = vsel %vm1525, %v1294, -inf
        %v2248 = vrot.slane %v2247, 4
        %v2249 = vmax.f32 %v2247, %v2248
        %v2250 = vrot.slane %v2249, 2
        %v2251 = vmax.f32 %v2249, %v2250
        %v2252 = vrot.slane %v2251, 1
        %v2253 = vmax.f32 %v2251, %v2252
        %v2254 = vsel %vm1525, %v1302, -inf
        %v2255 = vrot.slane %v2254, 4
        %v2256 = vmax.f32 %v2254, %v2255
        %v2257 = vrot.slane %v2256, 2
        %v2258 = vmax.f32 %v2256, %v2257
        %v2259 = vrot.slane %v2258, 1
        %v2260 = vmax.f32 %v2258, %v2259
        %v2261 = vsel %vm1525, %v1310, -inf
        %v2262 = vrot.slane %v2261, 4
        %v2263 = vmax.f32 %v2261, %v2262
        %v2264 = vrot.slane %v2263, 2
        %v2265 = vmax.f32 %v2263, %v2264
        %v2266 = vrot.slane %v2265, 1
        %v2267 = vmax.f32 %v2265, %v2266
        %v2268 = vsel %vm1525, %v1309, -inf
        %v2269 = vrot.slane %v2268, 4
        %v2270 = vmax.f32 %v2268, %v2269
        %v2271 = vrot.slane %v2270, 2
        %v2272 = vmax.f32 %v2270, %v2271
        %v2273 = vrot.slane %v2272, 1
        %v2274 = vmax.f32 %v2272, %v2273
        %v2275 = vsel %vm1525, %v1311, -inf
        %v2276 = vrot.slane %v2275, 4
        %v2277 = vmax.f32 %v2275, %v2276
        %v2278 = vrot.slane %v2277, 2
        %v2279 = vmax.f32 %v2277, %v2278
        %v2280 = vrot.slane %v2279, 1
        %v2281 = vmax.f32 %v2279, %v2280
        %v2282 = vsel %vm1525, %v1319, -inf
        %v2283 = vrot.slane %v2282, 4
        %v2284 = vmax.f32 %v2282, %v2283
        %v2285 = vrot.slane %v2284, 2
        %v2286 = vmax.f32 %v2284, %v2285
        %v2287 = vrot.slane %v2286, 1
        %v2288 = vmax.f32 %v2286, %v2287
        %v2289 = vsel %vm1525, %v1327, -inf
        %v2290 = vrot.slane %v2289, 4
        %v2291 = vmax.f32 %v2289, %v2290
        %v2292 = vrot.slane %v2291, 2
        %v2293 = vmax.f32 %v2291, %v2292
        %v2294 = vrot.slane %v2293, 1
        %v2295 = vmax.f32 %v2293, %v2294
        %v2296 = vsel %vm1525, %v1326, -inf
        %v2297 = vrot.slane %v2296, 4
        %v2298 = vmax.f32 %v2296, %v2297
        %v2299 = vrot.slane %v2298, 2
        %v2300 = vmax.f32 %v2298, %v2299
        %v2301 = vrot.slane %v2300, 1
        %v2302 = vmax.f32 %v2300, %v2301
        %v2303 = vsel %vm1525, %v1328, -inf
        %v2304 = vrot.slane %v2303, 4
        %v2305 = vmax.f32 %v2303, %v2304
        %v2306 = vrot.slane %v2305, 2
        %v2307 = vmax.f32 %v2305, %v2306
        %v2308 = vrot.slane %v2307, 1
        %v2309 = vmax.f32 %v2307, %v2308
        %v2310 = vsel %vm1525, %v1336, -inf
        %v2311 = vrot.slane %v2310, 4
        %v2312 = vmax.f32 %v2310, %v2311
        %v2313 = vrot.slane %v2312, 2
        %v2314 = vmax.f32 %v2312, %v2313
        %v2315 = vrot.slane %v2314, 1
        %v2316 = vmax.f32 %v2314, %v2315
        %v2317 = vsel %vm1525, %v1344, -inf
        %v2318 = vrot.slane %v2317, 4
        %v2319 = vmax.f32 %v2317, %v2318
        %v2320 = vrot.slane %v2319, 2
        %v2321 = vmax.f32 %v2319, %v2320
        %v2322 = vrot.slane %v2321, 1
        %v2323 = vmax.f32 %v2321, %v2322
        %v2324 = vsel %vm1525, %v1343, -inf
        %v2325 = vrot.slane %v2324, 4
        %v2326 = vmax.f32 %v2324, %v2325
        %v2327 = vrot.slane %v2326, 2
        %v2328 = vmax.f32 %v2326, %v2327
        %v2329 = vrot.slane %v2328, 1
        %v2330 = vmax.f32 %v2328, %v2329
        %v2331 = vsel %vm1525, %v1345, -inf
        %v2332 = vrot.slane %v2331, 4
        %v2333 = vmax.f32 %v2331, %v2332
        %v2334 = vrot.slane %v2333, 2
        %v2335 = vmax.f32 %v2333, %v2334
        %v2336 = vrot.slane %v2335, 1
        %v2337 = vmax.f32 %v2335, %v2336
        %v2338 = vsel %vm1525, %v1353, -inf
        %v2339 = vrot.slane %v2338, 4
        %v2340 = vmax.f32 %v2338, %v2339
        %v2341 = vrot.slane %v2340, 2
        %v2342 = vmax.f32 %v2340, %v2341
        %v2343 = vrot.slane %v2342, 1
        %v2344 = vmax.f32 %v2342, %v2343
        %v2345 = vsel %vm1525, %v1361, -inf
        %v2346 = vrot.slane %v2345, 4
        %v2347 = vmax.f32 %v2345, %v2346
        %v2348 = vrot.slane %v2347, 2
        %v2349 = vmax.f32 %v2347, %v2348
        %v2350 = vrot.slane %v2349, 1
        %v2351 = vmax.f32 %v2349, %v2350
        %v2352 = vsel %vm1525, %v1360, -inf
        %v2353 = vrot.slane %v2352, 4
        %v2354 = vmax.f32 %v2352, %v2353
        %v2355 = vrot.slane %v2354, 2
        %v2356 = vmax.f32 %v2354, %v2355
        %v2357 = vrot.slane %v2356, 1
        %v2358 = vmax.f32 %v2356, %v2357
        %v2359 = vsel %vm1525, %v1362, -inf
        %v2360 = vrot.slane %v2359, 4
        %v2361 = vmax.f32 %v2359, %v2360
        %v2362 = vrot.slane %v2361, 2
        %v2363 = vmax.f32 %v2361, %v2362
        %v2364 = vrot.slane %v2363, 1
        %v2365 = vmax.f32 %v2363, %v2364
        %v2366 = vsel %vm1525, %v1370, -inf
        %v2367 = vrot.slane %v2366, 4
        %v2368 = vmax.f32 %v2366, %v2367
        %v2369 = vrot.slane %v2368, 2
        %v2370 = vmax.f32 %v2368, %v2369
        %v2371 = vrot.slane %v2370, 1
        %v2372 = vmax.f32 %v2370, %v2371
        %v2373 = vsel %vm1525, %v1378, -inf
        %v2374 = vrot.slane %v2373, 4
        %v2375 = vmax.f32 %v2373, %v2374
        %v2376 = vrot.slane %v2375, 2
        %v2377 = vmax.f32 %v2375, %v2376
        %v2378 = vrot.slane %v2377, 1
        %v2379 = vmax.f32 %v2377, %v2378
        %v2380 = vsel %vm1525, %v1377, -inf
        %v2381 = vrot.slane %v2380, 4
        %v2382 = vmax.f32 %v2380, %v2381
        %v2383 = vrot.slane %v2382, 2
        %v2384 = vmax.f32 %v2382, %v2383
        %v2385 = vrot.slane %v2384, 1
        %v2386 = vmax.f32 %v2384, %v2385
        %v2387 = vsel %vm1525, %v1379, -inf
        %v2388 = vrot.slane %v2387, 4
        %v2389 = vmax.f32 %v2387, %v2388
        %v2390 = vrot.slane %v2389, 2
        %v2391 = vmax.f32 %v2389, %v2390
        %v2392 = vrot.slane %v2391, 1
        %v2393 = vmax.f32 %v2391, %v2392
        %v2394 = vsel %vm1525, %v1387, -inf
        %v2395 = vrot.slane %v2394, 4
        %v2396 = vmax.f32 %v2394, %v2395
        %v2397 = vrot.slane %v2396, 2
        %v2398 = vmax.f32 %v2396, %v2397
        %v2399 = vrot.slane %v2398, 1
        %v2400 = vmax.f32 %v2398, %v2399
        %v2401 = vsel %vm1525, %v1395, -inf
        %v2402 = vrot.slane %v2401, 4
        %v2403 = vmax.f32 %v2401, %v2402
        %v2404 = vrot.slane %v2403, 2
        %v2405 = vmax.f32 %v2403, %v2404
        %v2406 = vrot.slane %v2405, 1
        %v2407 = vmax.f32 %v2405, %v2406
        %v2408 = vsel %vm1525, %v1394, -inf
        %v2409 = vrot.slane %v2408, 4
        %v2410 = vmax.f32 %v2408, %v2409
        %v2411 = vrot.slane %v2410, 2
        %v2412 = vmax.f32 %v2410, %v2411
        %v2413 = vrot.slane %v2412, 1
        %v2414 = vmax.f32 %v2412, %v2413
        %v2415 = vsel %vm1525, %v1396, -inf
        %v2416 = vrot.slane %v2415, 4
        %v2417 = vmax.f32 %v2415, %v2416
        %v2418 = vrot.slane %v2417, 2
        %v2419 = vmax.f32 %v2417, %v2418
        %v2420 = vrot.slane %v2419, 1
        %v2421 = vmax.f32 %v2419, %v2420
        %vm2422 = vcmask 261120
        %v2423 = vsel %vm2422, %v1532, -inf
        %v2424 = vsel %vm2422, %v1588, -inf
        %v2425 = vmax.f32 %v2423, %v2424
        %v2426 = vsel %vm2422, %v1539, -inf
        %v2427 = vsel %vm2422, %v1595, -inf
        %v2428 = vmax.f32 %v2426, %v2427
        %v2429 = vsel %vm2422, %v1546, -inf
        %v2430 = vsel %vm2422, %v1602, -inf
        %v2431 = vmax.f32 %v2429, %v2430
        %v2432 = vsel %vm2422, %v1553, -inf
        %v2433 = vsel %vm2422, %v1609, -inf
        %v2434 = vmax.f32 %v2432, %v2433
        %v2435 = vsel %vm2422, %v1560, -inf
        %v2436 = vsel %vm2422, %v1616, -inf
        %v2437 = vmax.f32 %v2435, %v2436
        %v2438 = vsel %vm2422, %v1567, -inf
        %v2439 = vsel %vm2422, %v1623, -inf
        %v2440 = vmax.f32 %v2438, %v2439
        %v2441 = vsel %vm2422, %v1574, -inf
        %v2442 = vsel %vm2422, %v1630, -inf
        %v2443 = vmax.f32 %v2441, %v2442
        %v2444 = vsel %vm2422, %v1581, -inf
        %v2445 = vsel %vm2422, %v1637, -inf
        %v2446 = vmax.f32 %v2444, %v2445
        %v2447 = vsel %vm2422, %v1644, -inf
        %v2448 = vsel %vm2422, %v1700, -inf
        %v2449 = vmax.f32 %v2447, %v2448
        %v2450 = vsel %vm2422, %v1651, -inf
        %v2451 = vsel %vm2422, %v1707, -inf
        %v2452 = vmax.f32 %v2450, %v2451
        %v2453 = vsel %vm2422, %v1658, -inf
        %v2454 = vsel %vm2422, %v1714, -inf
        %v2455 = vmax.f32 %v2453, %v2454
        %v2456 = vsel %vm2422, %v1665, -inf
        %v2457 = vsel %vm2422, %v1721, -inf
        %v2458 = vmax.f32 %v2456, %v2457
        %v2459 = vsel %vm2422, %v1672, -inf
        %v2460 = vsel %vm2422, %v1728, -inf
        %v2461 = vmax.f32 %v2459, %v2460
        %v2462 = vsel %vm2422, %v1679, -inf
        %v2463 = vsel %vm2422, %v1735, -inf
        %v2464 = vmax.f32 %v2462, %v2463
        %v2465 = vsel %vm2422, %v1686, -inf
        %v2466 = vsel %vm2422, %v1742, -inf
        %v2467 = vmax.f32 %v2465, %v2466
        %v2468 = vsel %vm2422, %v1693, -inf
        %v2469 = vsel %vm2422, %v1749, -inf
        %v2470 = vmax.f32 %v2468, %v2469
        %v2471 = vsel %vm2422, %v1756, -inf
        %v2472 = vsel %vm2422, %v1812, -inf
        %v2473 = vmax.f32 %v2471, %v2472
        %v2474 = vsel %vm2422, %v1763, -inf
        %v2475 = vsel %vm2422, %v1819, -inf
        %v2476 = vmax.f32 %v2474, %v2475
        %v2477 = vsel %vm2422, %v1770, -inf
        %v2478 = vsel %vm2422, %v1826, -inf
        %v2479 = vmax.f32 %v2477, %v2478
        %v2480 = vsel %vm2422, %v1777, -inf
        %v2481 = vsel %vm2422, %v1833, -inf
        %v2482 = vmax.f32 %v2480, %v2481
        %v2483 = vsel %vm2422, %v1784, -inf
        %v2484 = vsel %vm2422, %v1840, -inf
        %v2485 = vmax.f32 %v2483, %v2484
        %v2486 = vsel %vm2422, %v1791, -inf
        %v2487 = vsel %vm2422, %v1847, -inf
        %v2488 = vmax.f32 %v2486, %v2487
        %v2489 = vsel %vm2422, %v1798, -inf
        %v2490 = vsel %vm2422, %v1854, -inf
        %v2491 = vmax.f32 %v2489, %v2490
        %v2492 = vsel %vm2422, %v1805, -inf
        %v2493 = vsel %vm2422, %v1861, -inf
        %v2494 = vmax.f32 %v2492, %v2493
        %v2495 = vsel %vm2422, %v1868, -inf
        %v2496 = vsel %vm2422, %v1924, -inf
        %v2497 = vmax.f32 %v2495, %v2496
        %v2498 = vsel %vm2422, %v1875, -inf
        %v2499 = vsel %vm2422, %v1931, -inf
        %v2500 = vmax.f32 %v2498, %v2499
        %v2501 = vsel %vm2422, %v1882, -inf
        %v2502 = vsel %vm2422, %v1938, -inf
        %v2503 = vmax.f32 %v2501, %v2502
        %v2504 = vsel %vm2422, %v1889, -inf
        %v2505 = vsel %vm2422, %v1945, -inf
        %v2506 = vmax.f32 %v2504, %v2505
        %v2507 = vsel %vm2422, %v1896, -inf
        %v2508 = vsel %vm2422, %v1952, -inf
        %v2509 = vmax.f32 %v2507, %v2508
        %v2510 = vsel %vm2422, %v1903, -inf
        %v2511 = vsel %vm2422, %v1959, -inf
        %v2512 = vmax.f32 %v2510, %v2511
        %v2513 = vsel %vm2422, %v1910, -inf
        %v2514 = vsel %vm2422, %v1966, -inf
        %v2515 = vmax.f32 %v2513, %v2514
        %v2516 = vsel %vm2422, %v1917, -inf
        %v2517 = vsel %vm2422, %v1973, -inf
        %v2518 = vmax.f32 %v2516, %v2517
        %v2519 = vsel %vm2422, %v1980, -inf
        %v2520 = vsel %vm2422, %v2036, -inf
        %v2521 = vmax.f32 %v2519, %v2520
        %v2522 = vsel %vm2422, %v1987, -inf
        %v2523 = vsel %vm2422, %v2043, -inf
        %v2524 = vmax.f32 %v2522, %v2523
        %v2525 = vsel %vm2422, %v1994, -inf
        %v2526 = vsel %vm2422, %v2050, -inf
        %v2527 = vmax.f32 %v2525, %v2526
        %v2528 = vsel %vm2422, %v2001, -inf
        %v2529 = vsel %vm2422, %v2057, -inf
        %v2530 = vmax.f32 %v2528, %v2529
        %v2531 = vsel %vm2422, %v2008, -inf
        %v2532 = vsel %vm2422, %v2064, -inf
        %v2533 = vmax.f32 %v2531, %v2532
        %v2534 = vsel %vm2422, %v2015, -inf
        %v2535 = vsel %vm2422, %v2071, -inf
        %v2536 = vmax.f32 %v2534, %v2535
        %v2537 = vsel %vm2422, %v2022, -inf
        %v2538 = vsel %vm2422, %v2078, -inf
        %v2539 = vmax.f32 %v2537, %v2538
        %v2540 = vsel %vm2422, %v2029, -inf
        %v2541 = vsel %vm2422, %v2085, -inf
        %v2542 = vmax.f32 %v2540, %v2541
        %v2543 = vsel %vm2422, %v2092, -inf
        %v2544 = vsel %vm2422, %v2148, -inf
        %v2545 = vmax.f32 %v2543, %v2544
        %v2546 = vsel %vm2422, %v2099, -inf
        %v2547 = vsel %vm2422, %v2155, -inf
        %v2548 = vmax.f32 %v2546, %v2547
        %v2549 = vsel %vm2422, %v2106, -inf
        %v2550 = vsel %vm2422, %v2162, -inf
        %v2551 = vmax.f32 %v2549, %v2550
        %v2552 = vsel %vm2422, %v2113, -inf
        %v2553 = vsel %vm2422, %v2169, -inf
        %v2554 = vmax.f32 %v2552, %v2553
        %v2555 = vsel %vm2422, %v2120, -inf
        %v2556 = vsel %vm2422, %v2176, -inf
        %v2557 = vmax.f32 %v2555, %v2556
        %v2558 = vsel %vm2422, %v2127, -inf
        %v2559 = vsel %vm2422, %v2183, -inf
        %v2560 = vmax.f32 %v2558, %v2559
        %v2561 = vsel %vm2422, %v2134, -inf
        %v2562 = vsel %vm2422, %v2190, -inf
        %v2563 = vmax.f32 %v2561, %v2562
        %v2564 = vsel %vm2422, %v2141, -inf
        %v2565 = vsel %vm2422, %v2197, -inf
        %v2566 = vmax.f32 %v2564, %v2565
        %v2567 = vsel %vm2422, %v2204, -inf
        %v2568 = vsel %vm2422, %v2260, -inf
        %v2569 = vmax.f32 %v2567, %v2568
        %v2570 = vsel %vm2422, %v2211, -inf
        %v2571 = vsel %vm2422, %v2267, -inf
        %v2572 = vmax.f32 %v2570, %v2571
        %v2573 = vsel %vm2422, %v2218, -inf
        %v2574 = vsel %vm2422, %v2274, -inf
        %v2575 = vmax.f32 %v2573, %v2574
        %v2576 = vsel %vm2422, %v2225, -inf
        %v2577 = vsel %vm2422, %v2281, -inf
        %v2578 = vmax.f32 %v2576, %v2577
        %v2579 = vsel %vm2422, %v2232, -inf
        %v2580 = vsel %vm2422, %v2288, -inf
        %v2581 = vmax.f32 %v2579, %v2580
        %v2582 = vsel %vm2422, %v2239, -inf
        %v2583 = vsel %vm2422, %v2295, -inf
        %v2584 = vmax.f32 %v2582, %v2583
        %v2585 = vsel %vm2422, %v2246, -inf
        %v2586 = vsel %vm2422, %v2302, -inf
        %v2587 = vmax.f32 %v2585, %v2586
        %v2588 = vsel %vm2422, %v2253, -inf
        %v2589 = vsel %vm2422, %v2309, -inf
        %v2590 = vmax.f32 %v2588, %v2589
        %v2591 = vsel %vm2422, %v2316, -inf
        %v2592 = vsel %vm2422, %v2372, -inf
        %v2593 = vmax.f32 %v2591, %v2592
        %v2594 = vsel %vm2422, %v2323, -inf
        %v2595 = vsel %vm2422, %v2379, -inf
        %v2596 = vmax.f32 %v2594, %v2595
        %v2597 = vsel %vm2422, %v2330, -inf
        %v2598 = vsel %vm2422, %v2386, -inf
        %v2599 = vmax.f32 %v2597, %v2598
        %v2600 = vsel %vm2422, %v2337, -inf
        %v2601 = vsel %vm2422, %v2393, -inf
        %v2602 = vmax.f32 %v2600, %v2601
        %v2603 = vsel %vm2422, %v2344, -inf
        %v2604 = vsel %vm2422, %v2400, -inf
        %v2605 = vmax.f32 %v2603, %v2604
        %v2606 = vsel %vm2422, %v2351, -inf
        %v2607 = vsel %vm2422, %v2407, -inf
        %v2608 = vmax.f32 %v2606, %v2607
        %v2609 = vsel %vm2422, %v2358, -inf
        %v2610 = vsel %vm2422, %v2414, -inf
        %v2611 = vmax.f32 %v2609, %v2610
        %v2612 = vsel %vm2422, %v2365, -inf
        %v2613 = vsel %vm2422, %v2421, -inf
        %v2614 = vmax.f32 %v2612, %v2613
        %vm2615 = vcmask 253952
        %2616 = vst.msk [vmem:[#allocation2] sm:$0x1] %vm2615, 0.0
        %2617 = vst.msk [vmem:[#allocation2 + $0x10] sm:$0x1] %vm2615, 0.0
        %2618 = vst.msk [vmem:[#allocation2 + $0x20] sm:$0x1] %vm2615, 0.0
        %2619 = vst.msk [vmem:[#allocation2 + $0x30] sm:$0x1] %vm2615, 0.0
        %2620 = vst.msk [vmem:[#allocation2 + $0x40] sm:$0x1] %vm2615, 0.0
        %2621 = vst.msk [vmem:[#allocation2 + $0x50] sm:$0x1] %vm2615, 0.0
        %2622 = vst.msk [vmem:[#allocation2 + $0x60] sm:$0x1] %vm2615, 0.0
        %2623 = vst.msk [vmem:[#allocation2 + $0x70] sm:$0x1] %vm2615, 0.0
        %2624 = vst.msk [vmem:[#allocation2 + $0x9] sm:$0x1] %vm2615, 0.0
        %2625 = vst.msk [vmem:[#allocation2 + $0x19] sm:$0x1] %vm2615, 0.0
        %2626 = vst.msk [vmem:[#allocation2 + $0x29] sm:$0x1] %vm2615, 0.0
        %2627 = vst.msk [vmem:[#allocation2 + $0x39] sm:$0x1] %vm2615, 0.0
        %2628 = vst.msk [vmem:[#allocation2 + $0x49] sm:$0x1] %vm2615, 0.0
        %2629 = vst.msk [vmem:[#allocation2 + $0x59] sm:$0x1] %vm2615, 0.0
        %2630 = vst.msk [vmem:[#allocation2 + $0x69] sm:$0x1] %vm2615, 0.0
        %2631 = vst.msk [vmem:[#allocation2 + $0x79] sm:$0x1] %vm2615, 0.0
        %vm2696 = vcmask 1041409
        %v2697 = vsel %vm2696, %v2428, %v2425
        %vm2698 = vcmask 1042434
        %v2699 = vsel %vm2698, %v2431, %v2697
        %vm2700 = vcmask 1043459
        %v2701 = vsel %vm2700, %v2434, %v2699
        %vm2702 = vcmask 1044484
        %v2703 = vsel %vm2702, %v2437, %v2701
        %vm2704 = vcmask 1045509
        %v2705 = vsel %vm2704, %v2440, %v2703
        %vm2706 = vcmask 1046534
        %v2707 = vsel %vm2706, %v2443, %v2705
        %vm2708 = vcmask 1047559
        %v2709 = vsel %vm2708, %v2446, %v2707
        %v2710 = vsel %vm2696, %v2452, %v2449
        %v2711 = vsel %vm2698, %v2455, %v2710
        %v2712 = vsel %vm2700, %v2458, %v2711
        %v2713 = vsel %vm2702, %v2461, %v2712
        %v2714 = vsel %vm2704, %v2464, %v2713
        %v2715 = vsel %vm2706, %v2467, %v2714
        %v2716 = vsel %vm2708, %v2470, %v2715
        %v2717 = vsel %vm2696, %v2476, %v2473
        %v2718 = vsel %vm2698, %v2479, %v2717
        %v2719 = vsel %vm2700, %v2482, %v2718
        %v2720 = vsel %vm2702, %v2485, %v2719
        %v2721 = vsel %vm2704, %v2488, %v2720
        %v2722 = vsel %vm2706, %v2491, %v2721
        %v2723 = vsel %vm2708, %v2494, %v2722
        %v2724 = vsel %vm2696, %v2500, %v2497
        %v2725 = vsel %vm2698, %v2503, %v2724
        %v2726 = vsel %vm2700, %v2506, %v2725
        %v2727 = vsel %vm2702, %v2509, %v2726
        %v2728 = vsel %vm2704, %v2512, %v2727
        %v2729 = vsel %vm2706, %v2515, %v2728
        %v2730 = vsel %vm2708, %v2518, %v2729
        %v2731 = vsel %vm2696, %v2524, %v2521
        %v2732 = vsel %vm2698, %v2527, %v2731
        %v2733 = vsel %vm2700, %v2530, %v2732
        %v2734 = vsel %vm2702, %v2533, %v2733
        %v2735 = vsel %vm2704, %v2536, %v2734
        %v2736 = vsel %vm2706, %v2539, %v2735
        %v2737 = vsel %vm2708, %v2542, %v2736
        %v2738 = vsel %vm2696, %v2548, %v2545
        %v2739 = vsel %vm2698, %v2551, %v2738
        %v2740 = vsel %vm2700, %v2554, %v2739
        %v2741 = vsel %vm2702, %v2557, %v2740
        %v2742 = vsel %vm2704, %v2560, %v2741
        %v2743 = vsel %vm2706, %v2563, %v2742
        %v2744 = vsel %vm2708, %v2566, %v2743
        %v2745 = vsel %vm2696, %v2572, %v2569
        %v2746 = vsel %vm2698, %v2575, %v2745
        %v2747 = vsel %vm2700, %v2578, %v2746
        %v2748 = vsel %vm2702, %v2581, %v2747
        %v2749 = vsel %vm2704, %v2584, %v2748
        %v2750 = vsel %vm2706, %v2587, %v2749
        %v2751 = vsel %vm2708, %v2590, %v2750
        %v2752 = vsel %vm2696, %v2596, %v2593
        %v2753 = vsel %vm2698, %v2599, %v2752
        %v2754 = vsel %vm2700, %v2602, %v2753
        %v2755 = vsel %vm2702, %v2605, %v2754
        %v2756 = vsel %vm2704, %v2608, %v2755
        %v2757 = vsel %vm2706, %v2611, %v2756
        %v2758 = vsel %vm2708, %v2614, %v2757
        %2767 = vst.msk [vmem:[#allocation2 + $0x1] sm:$0xff] %vm2422, %v2709
        %2768 = vst.msk [vmem:[#allocation2 + $0x11] sm:$0xff] %vm2422, %v2716
        %2769 = vst.msk [vmem:[#allocation2 + $0x21] sm:$0xff] %vm2422, %v2723
        %2770 = vst.msk [vmem:[#allocation2 + $0x31] sm:$0xff] %vm2422, %v2730
        %2771 = vst.msk [vmem:[#allocation2 + $0x41] sm:$0xff] %vm2422, %v2737
        %2772 = vst.msk [vmem:[#allocation2 + $0x51] sm:$0xff] %vm2422, %v2744
        %2773 = vst.msk [vmem:[#allocation2 + $0x61] sm:$0xff] %vm2422, %v2751
        %2774 = vst.msk [vmem:[#allocation2 + $0x71] sm:$0xff] %vm2422, %v2758
        %v2775 = vld [vmem:[#allocation2] sm:$0xff]
        %v2776 = vld [vmem:[#allocation2 + $0x10] sm:$0xff]
        %v2777 = vld [vmem:[#allocation2 + $0x20] sm:$0xff]
        %v2778 = vld [vmem:[#allocation2 + $0x30] sm:$0xff]
        %v2779 = vld [vmem:[#allocation2 + $0x40] sm:$0xff]
        %v2780 = vld [vmem:[#allocation2 + $0x50] sm:$0xff]
        %v2781 = vld [vmem:[#allocation2 + $0x60] sm:$0xff]
        %v2782 = vld [vmem:[#allocation2 + $0x70] sm:$0xff]
        %v2783 = vld [vmem:[#allocation2 + $0x1] sm:$0xff]
        %v2784 = vld [vmem:[#allocation2 + $0x11] sm:$0xff]
        %v2785 = vld [vmem:[#allocation2 + $0x21] sm:$0xff]
        %v2786 = vld [vmem:[#allocation2 + $0x31] sm:$0xff]
        %v2787 = vld [vmem:[#allocation2 + $0x41] sm:$0xff]
        %v2788 = vld [vmem:[#allocation2 + $0x51] sm:$0xff]
        %v2789 = vld [vmem:[#allocation2 + $0x61] sm:$0xff]
        %v2790 = vld [vmem:[#allocation2 + $0x71] sm:$0xff]
        %v2791 = vld [vmem:[#allocation2 + $0x2] sm:$0xff]
        %v2792 = vld [vmem:[#allocation2 + $0x12] sm:$0xff]
        %v2793 = vld [vmem:[#allocation2 + $0x22] sm:$0xff]
        %v2794 = vld [vmem:[#allocation2 + $0x32] sm:$0xff]
        %v2795 = vld [vmem:[#allocation2 + $0x42] sm:$0xff]
        %v2796 = vld [vmem:[#allocation2 + $0x52] sm:$0xff]
        %v2797 = vld [vmem:[#allocation2 + $0x62] sm:$0xff]
        %v2798 = vld [vmem:[#allocation2 + $0x72] sm:$0xff]
        %2807 = vrot.lane.b32.xlu0 0.0, 32
        %v2808 = vpop.permute.xlu0 %2807
        %2809 = vrot.lane.b32.xlu0 %v2783, 32
        %v2810 = vpop.permute.xlu0 %2809
        %2811 = vrot.lane.b32.xlu0 %v2784, 32
        %v2812 = vpop.permute.xlu0 %2811
        %2813 = vrot.lane.b32.xlu0 %v2785, 32
        %v2814 = vpop.permute.xlu0 %2813
        %2815 = vrot.lane.b32.xlu0 %v2786, 32
        %v2816 = vpop.permute.xlu0 %2815
        %2817 = vrot.lane.b32.xlu0 %v2787, 32
        %v2818 = vpop.permute.xlu0 %2817
        %2819 = vrot.lane.b32.xlu0 %v2788, 32
        %v2820 = vpop.permute.xlu0 %2819
        %2821 = vrot.lane.b32.xlu0 %v2789, 32
        %v2822 = vpop.permute.xlu0 %2821
        %2838 = vrot.lane.b32.xlu0 0.0, 64
        %v2839 = vpop.permute.xlu0 %2838
        %2840 = vrot.lane.b32.xlu0 %v2791, 64
        %v2841 = vpop.permute.xlu0 %2840
        %2842 = vrot.lane.b32.xlu0 %v2792, 64
        %v2843 = vpop.permute.xlu0 %2842
        %2844 = vrot.lane.b32.xlu0 %v2793, 64
        %v2845 = vpop.permute.xlu0 %2844
        %2846 = vrot.lane.b32.xlu0 %v2794, 64
        %v2847 = vpop.permute.xlu0 %2846
        %2848 = vrot.lane.b32.xlu0 %v2795, 64
        %v2849 = vpop.permute.xlu0 %2848
        %2850 = vrot.lane.b32.xlu0 %v2796, 64
        %v2851 = vpop.permute.xlu0 %2850
        %2852 = vrot.lane.b32.xlu0 %v2797, 64
        %v2853 = vpop.permute.xlu0 %2852
        %2870 = vrot.lane.b32.xlu0 %v2775, 96
        %v2871 = vpop.permute.xlu0 %2870
        %2872 = vrot.lane.b32.xlu0 %v2776, 96
        %v2873 = vpop.permute.xlu0 %2872
        %2874 = vrot.lane.b32.xlu0 %v2777, 96
        %v2875 = vpop.permute.xlu0 %2874
        %2876 = vrot.lane.b32.xlu0 %v2778, 96
        %v2877 = vpop.permute.xlu0 %2876
        %2878 = vrot.lane.b32.xlu0 %v2779, 96
        %v2879 = vpop.permute.xlu0 %2878
        %2880 = vrot.lane.b32.xlu0 %v2780, 96
        %v2881 = vpop.permute.xlu0 %2880
        %2882 = vrot.lane.b32.xlu0 %v2781, 96
        %v2883 = vpop.permute.xlu0 %2882
        %2884 = vrot.lane.b32.xlu0 %v2782, 96
        %v2885 = vpop.permute.xlu0 %2884
        %2895 = vrot.lane.b32.xlu0 %v2791, 32
        %v2896 = vpop.permute.xlu0 %2895
        %2897 = vrot.lane.b32.xlu0 %v2792, 32
        %v2898 = vpop.permute.xlu0 %2897
        %2899 = vrot.lane.b32.xlu0 %v2793, 32
        %v2900 = vpop.permute.xlu0 %2899
        %2901 = vrot.lane.b32.xlu0 %v2794, 32
        %v2902 = vpop.permute.xlu0 %2901
        %2903 = vrot.lane.b32.xlu0 %v2795, 32
        %v2904 = vpop.permute.xlu0 %2903
        %2905 = vrot.lane.b32.xlu0 %v2796, 32
        %v2906 = vpop.permute.xlu0 %2905
        %2907 = vrot.lane.b32.xlu0 %v2797, 32
        %v2908 = vpop.permute.xlu0 %2907
        %2909 = vrot.lane.b32.xlu0 %v2798, 32
        %v2910 = vpop.permute.xlu0 %2909
        %2919 = vrot.lane.b32.xlu0 %v2776, 64
        %v2920 = vpop.permute.xlu0 %2919
        %2921 = vrot.lane.b32.xlu0 %v2777, 64
        %v2922 = vpop.permute.xlu0 %2921
        %2923 = vrot.lane.b32.xlu0 %v2778, 64
        %v2924 = vpop.permute.xlu0 %2923
        %2925 = vrot.lane.b32.xlu0 %v2779, 64
        %v2926 = vpop.permute.xlu0 %2925
        %2927 = vrot.lane.b32.xlu0 %v2780, 64
        %v2928 = vpop.permute.xlu0 %2927
        %2929 = vrot.lane.b32.xlu0 %v2781, 64
        %v2930 = vpop.permute.xlu0 %2929
        %2931 = vrot.lane.b32.xlu0 %v2782, 64
        %v2932 = vpop.permute.xlu0 %2931
        %2941 = vrot.lane.b32.xlu0 %v2784, 96
        %v2942 = vpop.permute.xlu0 %2941
        %2943 = vrot.lane.b32.xlu0 %v2785, 96
        %v2944 = vpop.permute.xlu0 %2943
        %2945 = vrot.lane.b32.xlu0 %v2786, 96
        %v2946 = vpop.permute.xlu0 %2945
        %2947 = vrot.lane.b32.xlu0 %v2787, 96
        %v2948 = vpop.permute.xlu0 %2947
        %2949 = vrot.lane.b32.xlu0 %v2788, 96
        %v2950 = vpop.permute.xlu0 %2949
        %2951 = vrot.lane.b32.xlu0 %v2789, 96
        %v2952 = vpop.permute.xlu0 %2951
        %2953 = vrot.lane.b32.xlu0 %v2790, 96
        %v2954 = vpop.permute.xlu0 %2953
        %2955 = vrot.lane.b32.xlu0 0.0, 96
        %v2956 = vpop.permute.xlu0 %2955
        %v2965 = vsel %vm2422, 0.0, %v2808
        %v2966 = vsel %vm2422, %v2775, %v2810
        %v2967 = vsel %vm2422, %v2776, %v2812
        %v2968 = vsel %vm2422, %v2777, %v2814
        %v2969 = vsel %vm2422, %v2778, %v2816
        %v2970 = vsel %vm2422, %v2779, %v2818
        %v2971 = vsel %vm2422, %v2780, %v2820
        %v2972 = vsel %vm2422, %v2781, %v2822
        %vm2973 = vcmask 523264
        %v2974 = vsel %vm2973, %v2965, %v2839
        %v2975 = vsel %vm2973, %v2966, %v2841
        %v2976 = vsel %vm2973, %v2967, %v2843
        %v2977 = vsel %vm2973, %v2968, %v2845
        %v2978 = vsel %vm2973, %v2969, %v2847
        %v2979 = vsel %vm2973, %v2970, %v2849
        %v2980 = vsel %vm2973, %v2971, %v2851
        %v2981 = vsel %vm2973, %v2972, %v2853
        %vm2982 = vcmask 785408
        %v2983 = vsel %vm2982, %v2974, %v2871
        %v2984 = vsel %vm2982, %v2975, %v2873
        %v2985 = vsel %vm2982, %v2976, %v2875
        %v2986 = vsel %vm2982, %v2977, %v2877
        %v2987 = vsel %vm2982, %v2978, %v2879
        %v2988 = vsel %vm2982, %v2979, %v2881
        %v2989 = vsel %vm2982, %v2980, %v2883
        %v2990 = vsel %vm2982, %v2981, %v2885
        %v2991 = vsel %vm2422, %v2783, %v2896
        %v2992 = vsel %vm2422, %v2784, %v2898
        %v2993 = vsel %vm2422, %v2785, %v2900
        %v2994 = vsel %vm2422, %v2786, %v2902
        %v2995 = vsel %vm2422, %v2787, %v2904
        %v2996 = vsel %vm2422, %v2788, %v2906
        %v2997 = vsel %vm2422, %v2789, %v2908
        %v2998 = vsel %vm2422, %v2790, %v2910
        %v2999 = vsel %vm2973, %v2991, %v2920
        %v3000 = vsel %vm2973, %v2992, %v2922
        %v3001 = vsel %vm2973, %v2993, %v2924
        %v3002 = vsel %vm2973, %v2994, %v2926
        %v3003 = vsel %vm2973, %v2995, %v2928
        %v3004 = vsel %vm2973, %v2996, %v2930
        %v3005 = vsel %vm2973, %v2997, %v2932
        %v3006 = vsel %vm2973, %v2998, %v2839
        %v3007 = vsel %vm2982, %v2999, %v2942
        %v3008 = vsel %vm2982, %v3000, %v2944
        %v3009 = vsel %vm2982, %v3001, %v2946
        %v3010 = vsel %vm2982, %v3002, %v2948
        %v3011 = vsel %vm2982, %v3003, %v2950
        %v3012 = vsel %vm2982, %v3004, %v2952
        %v3013 = vsel %vm2982, %v3005, %v2954
        %v3014 = vsel %vm2982, %v3006, %v2956
        %v3015 = vld [vmem:[%s4] sm:$0xff]
        %v3016 = vld [vmem:[%s4 + $0x8] sm:$0xff]
        %v3017 = vld [vmem:[%s4 + $0x10] sm:$0xff]
        %v3018 = vld [vmem:[%s4 + $0x18] sm:$0xff]
        %v3019 = vld [vmem:[%s4 + $0x20] sm:$0xff]
        %v3020 = vld [vmem:[%s4 + $0x28] sm:$0xff]
        %v3021 = vld [vmem:[%s4 + $0x30] sm:$0xff]
        %v3022 = vld [vmem:[%s4 + $0x38] sm:$0xff]
        %v3023 = vld [vmem:[%s4 + $0x40] sm:$0xff]
        %v3024 = vld [vmem:[%s4 + $0x48] sm:$0xff]
        %v3025 = vld [vmem:[%s4 + $0x50] sm:$0xff]
        %v3026 = vld [vmem:[%s4 + $0x58] sm:$0xff]
        %v3027 = vld [vmem:[%s4 + $0x60] sm:$0xff]
        %v3028 = vld [vmem:[%s4 + $0x68] sm:$0xff]
        %v3029 = vld [vmem:[%s4 + $0x70] sm:$0xff]
        %v3030 = vld [vmem:[%s4 + $0x78] sm:$0xff]
        %v3031 = vld [vmem:[%s4 + $0x80] sm:$0xff]
        %v3032 = vld [vmem:[%s4 + $0x88] sm:$0xff]
        %v3033 = vld [vmem:[%s4 + $0x90] sm:$0xff]
        %v3034 = vld [vmem:[%s4 + $0x98] sm:$0xff]
        %v3035 = vld [vmem:[%s4 + $0xa0] sm:$0xff]
        %v3036 = vld [vmem:[%s4 + $0xa8] sm:$0xff]
        %v3037 = vld [vmem:[%s4 + $0xb0] sm:$0xff]
        %v3038 = vld [vmem:[%s4 + $0xb8] sm:$0xff]
        %v3039 = vld [vmem:[%s4 + $0xc0] sm:$0xff]
        %v3040 = vld [vmem:[%s4 + $0xc8] sm:$0xff]
        %v3041 = vld [vmem:[%s4 + $0xd0] sm:$0xff]
        %v3042 = vld [vmem:[%s4 + $0xd8] sm:$0xff]
        %v3043 = vld [vmem:[%s4 + $0xe0] sm:$0xff]
        %v3044 = vld [vmem:[%s4 + $0xe8] sm:$0xff]
        %v3045 = vld [vmem:[%s4 + $0xf0] sm:$0xff]
        %v3046 = vld [vmem:[%s4 + $0xf8] sm:$0xff]
        %v3047 = vld [vmem:[%s4 + $0x100] sm:$0xff]
        %v3048 = vld [vmem:[%s4 + $0x108] sm:$0xff]
        %v3049 = vld [vmem:[%s4 + $0x110] sm:$0xff]
        %v3050 = vld [vmem:[%s4 + $0x118] sm:$0xff]
        %v3051 = vsel %vm2422, %v2792, 0
        %v3053 = vsel %vm2422, %v2793, 0
        %v3055 = vsel %vm2422, %v2794, 0
        %v3057 = vsel %vm2422, %v2795, 0
        %v3059 = vsel %vm2422, %v2796, 0
        %v3061 = vsel %vm2422, %v2797, 0
        %v3063 = vsel %vm2422, %v2798, 0
        %v3065 = vsel %vm2422, 0.0, 0
        %3067 = vmatprep.subr.mxu0 0.0
        %3068 = vmatpush1.msra.mxu0 %v3015
        %3069 = vmatprep.subr.mxu0 0.0
        %3070 = vmatpush1.msra.mxu0 %v3016
        %3071 = vmatprep.subr.mxu0 0.0
        %3072 = vmatpush1.msra.mxu0 %v3017
        %3073 = vmatprep.subr.mxu0 0.0
        %3074 = vmatpush1.msra.mxu0 %v3018
        %3075 = vmatprep.subr.mxu0 0.0
        %3076 = vmatpush1.msra.mxu0 %v3019
        %3077 = vmatprep.subr.mxu0 0.0
        %3078 = vmatpush1.msra.mxu0 %v3020
        %3079 = vmatprep.subr.mxu0 0.0
        %3080 = vmatpush1.msra.mxu0 %v3021
        %3081 = vmatprep.subr.mxu0 0.0
        %3082 = vmatpush1.msra.mxu0 %v3022
        %3083 = vmatprep.subr.mxu0 0.0
        %3084 = vmatpush1.msra.mxu0 %v3023
        %3085 = vmatprep.subr.mxu0 0.0
        %3086 = vmatpush1.msra.mxu0 %v3024
        %3087 = vmatprep.subr.mxu0 0.0
        %3088 = vmatpush1.msra.mxu0 %v3025
        %3089 = vmatprep.subr.mxu0 0.0
        %3090 = vmatpush1.msra.mxu0 %v3026
        %3091 = vmatprep.subr.mxu0 0.0
        %3092 = vmatpush1.msra.mxu0 %v3027
        %3093 = vmatprep.subr.mxu0 0.0
        %3094 = vmatpush1.msra.mxu0 %v3028
        %3095 = vmatprep.subr.mxu0 0.0
        %3096 = vmatpush1.msra.mxu0 %v3029
        %3097 = vmatprep.subr.mxu0 0.0
        %3098 = vmatpush1.msra.mxu0 %v3030
        %3099 = vmatprep.subr.mxu0 0.0
        %3100 = vmatpush1.msra.mxu0 %v3031
        %3101 = vmatprep.subr.mxu0 0.0
        %3102 = vmatpush1.msra.mxu0 %v3032
        %3103 = vmatprep.subr.mxu0 0.0
        %3104 = vmatpush1.msra.mxu0 %v3033
        %3105 = vmatprep.subr.mxu0 0.0
        %3106 = vmatpush1.msra.mxu0 %v3034
        %3107 = vmatprep.subr.mxu0 0.0
        %3108 = vmatpush1.msra.mxu0 %v3035
        %3109 = vmatprep.subr.mxu0 0.0
        %3110 = vmatpush1.msra.mxu0 %v3036
        %3111 = vmatprep.subr.mxu0 0.0
        %3112 = vmatpush1.msra.mxu0 %v3037
        %3113 = vmatprep.subr.mxu0 0.0
        %3114 = vmatpush1.msra.mxu0 %v3038
        %3115 = vmatprep.subr.mxu0 0.0
        %3116 = vmatpush1.msra.mxu0 %v3039
        %3117 = vmatprep.subr.mxu0 0.0
        %3118 = vmatpush1.msra.mxu0 %v3040
        %3119 = vmatprep.subr.mxu0 0.0
        %3120 = vmatpush1.msra.mxu0 %v3041
        %3121 = vmatprep.subr.mxu0 0.0
        %3122 = vmatpush1.msra.mxu0 %v3042
        %3123 = vmatprep.subr.mxu0 0.0
        %3124 = vmatpush1.msra.mxu0 %v3043
        %3125 = vmatprep.subr.mxu0 0.0
        %3126 = vmatpush1.msra.mxu0 %v3044
        %3127 = vmatprep.subr.mxu0 0.0
        %3128 = vmatpush1.msra.mxu0 %v3045
        %3129 = vmatprep.subr.mxu0 0.0
        %3130 = vmatpush1.msra.mxu0 %v3046
        %3131 = vmatprep.mubr.f32.mxu0 %v3007
        %3132 = vmatmul.mubr.f32.gmra.mrb[0].mxu0 %v2983
        %v3133 = vpop.f32.mrb[0].mxu0
        %v3134 = vadd.f32 0.0, %v3133
        %v3135 = vpop.f32.mrb[0].mxu0
        %3136 = vmatprep.mubr.f32.mxu0 %v3008
        %3137 = vmatmul.mubr.f32.gmra.mrb[0].mxu0 %v2984
        %v3138 = vpop.f32.mrb[0].mxu0
        %v3139 = vadd.f32 0.0, %v3138
        %v3140 = vpop.f32.mrb[0].mxu0
        %3141 = vmatprep.mubr.f32.mxu0 %v3009
        %3142 = vmatmul.mubr.f32.gmra.mrb[0].mxu0 %v2985
        %v3143 = vpop.f32.mrb[0].mxu0
        %v3144 = vadd.f32 0.0, %v3143
        %v3145 = vpop.f32.mrb[0].mxu0
        %3146 = vmatprep.mubr.f32.mxu0 %v3010
        %3147 = vmatmul.mubr.f32.gmra.mrb[0].mxu0 %v2986
        %v3148 = vpop.f32.mrb[0].mxu0
        %v3149 = vadd.f32 0.0, %v3148
        %v3150 = vpop.f32.mrb[0].mxu0
        %3151 = vmatprep.mubr.f32.mxu0 %v3011
        %3152 = vmatmul.mubr.f32.gmra.mrb[0].mxu0 %v2987
        %v3153 = vpop.f32.mrb[0].mxu0
        %v3154 = vadd.f32 0.0, %v3153
        %v3155 = vpop.f32.mrb[0].mxu0
        %3156 = vmatprep.mubr.f32.mxu0 %v3012
        %3157 = vmatmul.mubr.f32.gmra.mrb[0].mxu0 %v2988
        %v3158 = vpop.f32.mrb[0].mxu0
        %v3159 = vadd.f32 0.0, %v3158
        %v3160 = vpop.f32.mrb[0].mxu0
        %3161 = vmatprep.mubr.f32.mxu0 %v3013
        %3162 = vmatmul.mubr.f32.gmra.mrb[0].mxu0 %v2989
        %v3163 = vpop.f32.mrb[0].mxu0
        %v3164 = vadd.f32 0.0, %v3163
        %v3165 = vpop.f32.mrb[0].mxu0
        %3166 = vmatprep.mubr.f32.mxu0 %v3014
        %3167 = vmatmul.mubr.f32.gmra.mrb[0].mxu0 %v2990
        %v3168 = vpop.f32.mrb[0].mxu0
        %v3169 = vadd.f32 0.0, %v3168
        %v3170 = vpop.f32.mrb[0].mxu0
        %3171 = vdwg.mxu0
        %3172 = vmatprep.subr.mxu0 0.0
        %3173 = vmatpush1.msra.mxu0 %v3047
        %3174 = vmatprep.subr.mxu0 0.0
        %3175 = vmatpush1.msra.mxu0 %v3048
        %3176 = vmatprep.subr.mxu0 0.0
        %3177 = vmatpush1.msra.mxu0 %v3049
        %3178 = vmatprep.subr.mxu0 0.0
        %3179 = vmatpush1.msra.mxu0 %v3050
        %3180 = vmatprep.subr.mxu0 0.0
        %3181 = vmatpush1.msra.mxu0 0.0
        %3182 = vmatprep.subr.mxu0 0.0
        %3183 = vmatpush1.msra.mxu0 0.0
        %3184 = vmatprep.subr.mxu0 0.0
        %3185 = vmatpush1.msra.mxu0 0.0
        %3186 = vmatprep.subr.mxu0 0.0
        %3187 = vmatpush1.msra.mxu0 0.0
        %3188 = vmatprep.subr.mxu0 0.0
        %3189 = vmatpush1.msra.mxu0 0.0
        %3190 = vmatprep.subr.mxu0 0.0
        %3191 = vmatpush1.msra.mxu0 0.0
        %3192 = vmatprep.subr.mxu0 0.0
        %3193 = vmatpush1.msra.mxu0 0.0
        %3194 = vmatprep.subr.mxu0 0.0
        %3195 = vmatpush1.msra.mxu0 0.0
        %3196 = vmatprep.subr.mxu0 0.0
        %3197 = vmatpush1.msra.mxu0 0.0
        %3198 = vmatprep.subr.mxu0 0.0
        %3199 = vmatpush1.msra.mxu0 0.0
        %3200 = vmatprep.subr.mxu0 0.0
        %3201 = vmatpush1.msra.mxu0 0.0
        %3202 = vmatprep.subr.mxu0 0.0
        %3203 = vmatpush1.msra.mxu0 0.0
        %3204 = vmatprep.subr.mxu0 0.0
        %3205 = vmatpush1.msra.mxu0 0.0
        %3206 = vmatprep.subr.mxu0 0.0
        %3207 = vmatpush1.msra.mxu0 0.0
        %3208 = vmatprep.subr.mxu0 0.0
        %3209 = vmatpush1.msra.mxu0 0.0
        %3210 = vmatprep.subr.mxu0 0.0
        %3211 = vmatpush1.msra.mxu0 0.0
        %3212 = vmatprep.subr.mxu0 0.0
        %3213 = vmatpush1.msra.mxu0 0.0
        %3214 = vmatprep.subr.mxu0 0.0
        %3215 = vmatpush1.msra.mxu0 0.0
        %3216 = vmatprep.subr.mxu0 0.0
        %3217 = vmatpush1.msra.mxu0 0.0
        %3218 = vmatprep.subr.mxu0 0.0
        %3219 = vmatpush1.msra.mxu0 0.0
        %3220 = vmatprep.subr.mxu0 0.0
        %3221 = vmatpush1.msra.mxu0 0.0
        %3222 = vmatprep.subr.mxu0 0.0
        %3223 = vmatpush1.msra.mxu0 0.0
        %3224 = vmatprep.subr.mxu0 0.0
        %3225 = vmatpush1.msra.mxu0 0.0
        %3226 = vmatprep.subr.mxu0 0.0
        %3227 = vmatpush1.msra.mxu0 0.0
        %3228 = vmatprep.subr.mxu0 0.0
        %3229 = vmatpush1.msra.mxu0 0.0
        %3230 = vmatprep.subr.mxu0 0.0
        %3231 = vmatpush1.msra.mxu0 0.0
        %3232 = vmatprep.subr.mxu0 0.0
        %3233 = vmatpush1.msra.mxu0 0.0
        %3234 = vmatprep.subr.mxu0 0.0
        %3235 = vmatpush1.msra.mxu0 0.0
        %3236 = vmatprep.mubr.f32.mxu0 0.0
        %3237 = vmatmul.mubr.f32.gmra.mrb[0].mxu0 %v3051
        %v3238 = vpop.f32.mrb[0].mxu0
        %v3239 = vadd.f32 %v3134, %v3238
        %v3240 = vpop.f32.mrb[0].mxu0
        %3241 = vmatprep.mubr.f32.mxu0 0.0
        %3242 = vmatmul.mubr.f32.gmra.mrb[0].mxu0 %v3053
        %v3243 = vpop.f32.mrb[0].mxu0
        %v3244 = vadd.f32 %v3139, %v3243
        %v3245 = vpop.f32.mrb[0].mxu0
        %3246 = vmatprep.mubr.f32.mxu0 0.0
        %3247 = vmatmul.mubr.f32.gmra.mrb[0].mxu0 %v3055
        %v3248 = vpop.f32.mrb[0].mxu0
        %v3249 = vadd.f32 %v3144, %v3248
        %v3250 = vpop.f32.mrb[0].mxu0
        %3251 = vmatprep.mubr.f32.mxu0 0.0
        %3252 = vmatmul.mubr.f32.gmra.mrb[0].mxu0 %v3057
        %v3253 = vpop.f32.mrb[0].mxu0
        %v3254 = vadd.f32 %v3149, %v3253
        %v3255 = vpop.f32.mrb[0].mxu0
        %3256 = vmatprep.mubr.f32.mxu0 0.0
        %3257 = vmatmul.mubr.f32.gmra.mrb[0].mxu0 %v3059
        %v3258 = vpop.f32.mrb[0].mxu0
        %v3259 = vadd.f32 %v3154, %v3258
        %v3260 = vpop.f32.mrb[0].mxu0
        %3261 = vmatprep.mubr.f32.mxu0 0.0
        %3262 = vmatmul.mubr.f32.gmra.mrb[0].mxu0 %v3061
        %v3263 = vpop.f32.mrb[0].mxu0
        %v3264 = vadd.f32 %v3159, %v3263
        %v3265 = vpop.f32.mrb[0].mxu0
        %3266 = vmatprep.mubr.f32.mxu0 0.0
        %3267 = vmatmul.mubr.f32.gmra.mrb[0].mxu0 %v3063
        %v3268 = vpop.f32.mrb[0].mxu0
        %v3269 = vadd.f32 %v3164, %v3268
        %v3270 = vpop.f32.mrb[0].mxu0
        %3271 = vmatprep.mubr.f32.mxu0 0.0
        %3272 = vmatmul.mubr.f32.gmra.mrb[0].mxu0 %v3065
        %v3273 = vpop.f32.mrb[0].mxu0
        %v3274 = vadd.f32 %v3169, %v3273
        %v3275 = vpop.f32.mrb[0].mxu0
        %3276 = vdwg.mxu0
        %v3277 = vld [vmem:[%s5] sm:$0x1]
        %v3278 = vld [vmem:[%s6] sm:$0x1]
        %v3280 = vlaneseq
        %v3281 = vshrl.u32 %v3280, 7
        %v3282 = vsub.s32 0, %v3281
        %v3283 = vrot.slane %v3277, %v3282
        %v3285 = vmul.f32 %v3239, %v3283
        %v3286 = vmul.f32 %v3244, %v3283
        %v3287 = vmul.f32 %v3249, %v3283
        %v3288 = vmul.f32 %v3254, %v3283
        %v3289 = vmul.f32 %v3259, %v3283
        %v3290 = vmul.f32 %v3264, %v3283
        %v3291 = vmul.f32 %v3269, %v3283
        %v3292 = vmul.f32 %v3274, %v3283
        %v3294 = vlaneseq
        %v3295 = vshrl.u32 %v3294, 7
        %v3296 = vsub.s32 0, %v3295
        %v3297 = vrot.slane %v3278, %v3296
        %v3299 = vadd.f32 %v3285, %v3297
        %v3300 = vadd.f32 %v3286, %v3297
        %v3301 = vadd.f32 %v3287, %v3297
        %v3302 = vadd.f32 %v3288, %v3297
        %v3303 = vadd.f32 %v3289, %v3297
        %v3304 = vadd.f32 %v3290, %v3297
        %v3305 = vadd.f32 %v3291, %v3297
        %v3306 = vadd.f32 %v3292, %v3297
        %v3307 = vmax.f32 %v3299, 0.0
        %v3308 = vmax.f32 %v3300, 0.0
        %v3309 = vmax.f32 %v3301, 0.0
        %v3310 = vmax.f32 %v3302, 0.0
        %v3311 = vmax.f32 %v3303, 0.0
        %v3312 = vmax.f32 %v3304, 0.0
        %v3313 = vmax.f32 %v3305, 0.0
        %v3314 = vmax.f32 %v3306, 0.0
        %v3323 = vcombine.high %v3307, %v3307
        %v3325 = vunpack.c.l.s4 1983009808
        %v3326 = vunpack.c.0.s8 %v3325
        %v3327 = vlaneseq
        %v3328 = vshrl.u32 %v3327, 7
        %v3329 = vsub.s32 %v3326, %v3328
        %v3330 = vrot.slane %v3307, %v3329
        %v3332 = vunpack.c.l.s4 1983009808
        %v3333 = vunpack.c.0.s8 %v3332
        %v3334 = vlaneseq
        %v3335 = vshrl.u32 %v3334, 7
        %v3336 = vsub.s32 %v3333, %v3335
        %v3337 = vrot.slane %v3323, %v3336
        %v3338 = vcombine.high %v3330, %v3330
        %v3339 = vcombine.high %v3337, %v3337
        %v3340 = vcombine.high %v3308, %v3308
        %v3342 = vunpack.c.l.s4 1983009808
        %v3343 = vunpack.c.0.s8 %v3342
        %v3344 = vlaneseq
        %v3345 = vshrl.u32 %v3344, 7
        %v3346 = vsub.s32 %v3343, %v3345
        %v3347 = vrot.slane %v3308, %v3346
        %v3349 = vunpack.c.l.s4 1983009808
        %v3350 = vunpack.c.0.s8 %v3349
        %v3351 = vlaneseq
        %v3352 = vshrl.u32 %v3351, 7
        %v3353 = vsub.s32 %v3350, %v3352
        %v3354 = vrot.slane %v3340, %v3353
        %v3355 = vcombine.high %v3347, %v3347
        %v3356 = vcombine.high %v3354, %v3354
        %v3357 = vcombine.high %v3309, %v3309
        %v3359 = vunpack.c.l.s4 1983009808
        %v3360 = vunpack.c.0.s8 %v3359
        %v3361 = vlaneseq
        %v3362 = vshrl.u32 %v3361, 7
        %v3363 = vsub.s32 %v3360, %v3362
        %v3364 = vrot.slane %v3309, %v3363
        %v3366 = vunpack.c.l.s4 1983009808
        %v3367 = vunpack.c.0.s8 %v3366
        %v3368 = vlaneseq
        %v3369 = vshrl.u32 %v3368, 7
        %v3370 = vsub.s32 %v3367, %v3369
        %v3371 = vrot.slane %v3357, %v3370
        %v3372 = vcombine.high %v3364, %v3364
        %v3373 = vcombine.high %v3371, %v3371
        %v3374 = vcombine.high %v3310, %v3310
        %v3376 = vunpack.c.l.s4 1983009808
        %v3377 = vunpack.c.0.s8 %v3376
        %v3378 = vlaneseq
        %v3379 = vshrl.u32 %v3378, 7
        %v3380 = vsub.s32 %v3377, %v3379
        %v3381 = vrot.slane %v3310, %v3380
        %v3383 = vunpack.c.l.s4 1983009808
        %v3384 = vunpack.c.0.s8 %v3383
        %v3385 = vlaneseq
        %v3386 = vshrl.u32 %v3385, 7
        %v3387 = vsub.s32 %v3384, %v3386
        %v3388 = vrot.slane %v3374, %v3387
        %v3389 = vcombine.high %v3381, %v3381
        %v3390 = vcombine.high %v3388, %v3388
        %v3391 = vcombine.high %v3311, %v3311
        %v3393 = vunpack.c.l.s4 1983009808
        %v3394 = vunpack.c.0.s8 %v3393
        %v3395 = vlaneseq
        %v3396 = vshrl.u32 %v3395, 7
        %v3397 = vsub.s32 %v3394, %v3396
        %v3398 = vrot.slane %v3311, %v3397
        %v3400 = vunpack.c.l.s4 1983009808
        %v3401 = vunpack.c.0.s8 %v3400
        %v3402 = vlaneseq
        %v3403 = vshrl.u32 %v3402, 7
        %v3404 = vsub.s32 %v3401, %v3403
        %v3405 = vrot.slane %v3391, %v3404
        %v3406 = vcombine.high %v3398, %v3398
        %v3407 = vcombine.high %v3405, %v3405
        %v3408 = vcombine.high %v3312, %v3312
        %v3410 = vunpack.c.l.s4 1983009808
        %v3411 = vunpack.c.0.s8 %v3410
        %v3412 = vlaneseq
        %v3413 = vshrl.u32 %v3412, 7
        %v3414 = vsub.s32 %v3411, %v3413
        %v3415 = vrot.slane %v3312, %v3414
        %v3417 = vunpack.c.l.s4 1983009808
        %v3418 = vunpack.c.0.s8 %v3417
        %v3419 = vlaneseq
        %v3420 = vshrl.u32 %v3419, 7
        %v3421 = vsub.s32 %v3418, %v3420
        %v3422 = vrot.slane %v3408, %v3421
        %v3423 = vcombine.high %v3415, %v3415
        %v3424 = vcombine.high %v3422, %v3422
        %v3425 = vcombine.high %v3313, %v3313
        %v3427 = vunpack.c.l.s4 1983009808
        %v3428 = vunpack.c.0.s8 %v3427
        %v3429 = vlaneseq
        %v3430 = vshrl.u32 %v3429, 7
        %v3431 = vsub.s32 %v3428, %v3430
        %v3432 = vrot.slane %v3313, %v3431
        %v3434 = vunpack.c.l.s4 1983009808
        %v3435 = vunpack.c.0.s8 %v3434
        %v3436 = vlaneseq
        %v3437 = vshrl.u32 %v3436, 7
        %v3438 = vsub.s32 %v3435, %v3437
        %v3439 = vrot.slane %v3425, %v3438
        %v3440 = vcombine.high %v3432, %v3432
        %v3441 = vcombine.high %v3439, %v3439
        %v3442 = vcombine.high %v3314, %v3314
        %v3444 = vunpack.c.l.s4 1983009808
        %v3445 = vunpack.c.0.s8 %v3444
        %v3446 = vlaneseq
        %v3447 = vshrl.u32 %v3446, 7
        %v3448 = vsub.s32 %v3445, %v3447
        %v3449 = vrot.slane %v3314, %v3448
        %v3451 = vunpack.c.l.s4 1983009808
        %v3452 = vunpack.c.0.s8 %v3451
        %v3453 = vlaneseq
        %v3454 = vshrl.u32 %v3453, 7
        %v3455 = vsub.s32 %v3452, %v3454
        %v3456 = vrot.slane %v3442, %v3455
        %v3457 = vcombine.high %v3449, %v3449
        %v3458 = vcombine.high %v3456, %v3456
        %vm3491 = vcmask 517120
        %v3492 = vsel %vm3491, %v3330, -inf
        %v3493 = vrot.slane %v3492, 4
        %v3494 = vmax.f32 %v3492, %v3493
        %v3495 = vrot.slane %v3494, 2
        %v3496 = vmax.f32 %v3494, %v3495
        %v3497 = vrot.slane %v3496, 1
        %v3498 = vmax.f32 %v3496, %v3497
        %v3499 = vsel %vm3491, %v3338, -inf
        %v3500 = vrot.slane %v3499, 4
        %v3501 = vmax.f32 %v3499, %v3500
        %v3502 = vrot.slane %v3501, 2
        %v3503 = vmax.f32 %v3501, %v3502
        %v3504 = vrot.slane %v3503, 1
        %v3505 = vmax.f32 %v3503, %v3504
        %v3506 = vsel %vm3491, %v3337, -inf
        %v3507 = vrot.slane %v3506, 4
        %v3508 = vmax.f32 %v3506, %v3507
        %v3509 = vrot.slane %v3508, 2
        %v3510 = vmax.f32 %v3508, %v3509
        %v3511 = vrot.slane %v3510, 1
        %v3512 = vmax.f32 %v3510, %v3511
        %v3513 = vsel %vm3491, %v3339, -inf
        %v3514 = vrot.slane %v3513, 4
        %v3515 = vmax.f32 %v3513, %v3514
        %v3516 = vrot.slane %v3515, 2
        %v3517 = vmax.f32 %v3515, %v3516
        %v3518 = vrot.slane %v3517, 1
        %v3519 = vmax.f32 %v3517, %v3518
        %v3520 = vsel %vm3491, %v3347, -inf
        %v3521 = vrot.slane %v3520, 4
        %v3522 = vmax.f32 %v3520, %v3521
        %v3523 = vrot.slane %v3522, 2
        %v3524 = vmax.f32 %v3522, %v3523
        %v3525 = vrot.slane %v3524, 1
        %v3526 = vmax.f32 %v3524, %v3525
        %v3527 = vsel %vm3491, %v3355, -inf
        %v3528 = vrot.slane %v3527, 4
        %v3529 = vmax.f32 %v3527, %v3528
        %v3530 = vrot.slane %v3529, 2
        %v3531 = vmax.f32 %v3529, %v3530
        %v3532 = vrot.slane %v3531, 1
        %v3533 = vmax.f32 %v3531, %v3532
        %v3534 = vsel %vm3491, %v3354, -inf
        %v3535 = vrot.slane %v3534, 4
        %v3536 = vmax.f32 %v3534, %v3535
        %v3537 = vrot.slane %v3536, 2
        %v3538 = vmax.f32 %v3536, %v3537
        %v3539 = vrot.slane %v3538, 1
        %v3540 = vmax.f32 %v3538, %v3539
        %v3541 = vsel %vm3491, %v3356, -inf
        %v3542 = vrot.slane %v3541, 4
        %v3543 = vmax.f32 %v3541, %v3542
        %v3544 = vrot.slane %v3543, 2
        %v3545 = vmax.f32 %v3543, %v3544
        %v3546 = vrot.slane %v3545, 1
        %v3547 = vmax.f32 %v3545, %v3546
        %v3548 = vsel %vm3491, %v3364, -inf
        %v3549 = vrot.slane %v3548, 4
        %v3550 = vmax.f32 %v3548, %v3549
        %v3551 = vrot.slane %v3550, 2
        %v3552 = vmax.f32 %v3550, %v3551
        %v3553 = vrot.slane %v3552, 1
        %v3554 = vmax.f32 %v3552, %v3553
        %v3555 = vsel %vm3491, %v3372, -inf
        %v3556 = vrot.slane %v3555, 4
        %v3557 = vmax.f32 %v3555, %v3556
        %v3558 = vrot.slane %v3557, 2
        %v3559 = vmax.f32 %v3557, %v3558
        %v3560 = vrot.slane %v3559, 1
        %v3561 = vmax.f32 %v3559, %v3560
        %v3562 = vsel %vm3491, %v3371, -inf
        %v3563 = vrot.slane %v3562, 4
        %v3564 = vmax.f32 %v3562, %v3563
        %v3565 = vrot.slane %v3564, 2
        %v3566 = vmax.f32 %v3564, %v3565
        %v3567 = vrot.slane %v3566, 1
        %v3568 = vmax.f32 %v3566, %v3567
        %v3569 = vsel %vm3491, %v3373, -inf
        %v3570 = vrot.slane %v3569, 4
        %v3571 = vmax.f32 %v3569, %v3570
        %v3572 = vrot.slane %v3571, 2
        %v3573 = vmax.f32 %v3571, %v3572
        %v3574 = vrot.slane %v3573, 1
        %v3575 = vmax.f32 %v3573, %v3574
        %v3576 = vsel %vm3491, %v3381, -inf
        %v3577 = vrot.slane %v3576, 4
        %v3578 = vmax.f32 %v3576, %v3577
        %v3579 = vrot.slane %v3578, 2
        %v3580 = vmax.f32 %v3578, %v3579
        %v3581 = vrot.slane %v3580, 1
        %v3582 = vmax.f32 %v3580, %v3581
        %v3583 = vsel %vm3491, %v3389, -inf
        %v3584 = vrot.slane %v3583, 4
        %v3585 = vmax.f32 %v3583, %v3584
        %v3586 = vrot.slane %v3585, 2
        %v3587 = vmax.f32 %v3585, %v3586
        %v3588 = vrot.slane %v3587, 1
        %v3589 = vmax.f32 %v3587, %v3588
        %v3590 = vsel %vm3491, %v3388, -inf
        %v3591 = vrot.slane %v3590, 4
        %v3592 = vmax.f32 %v3590, %v3591
        %v3593 = vrot.slane %v3592, 2
        %v3594 = vmax.f32 %v3592, %v3593
        %v3595 = vrot.slane %v3594, 1
        %v3596 = vmax.f32 %v3594, %v3595
        %v3597 = vsel %vm3491, %v3390, -inf
        %v3598 = vrot.slane %v3597, 4
        %v3599 = vmax.f32 %v3597, %v3598
        %v3600 = vrot.slane %v3599, 2
        %v3601 = vmax.f32 %v3599, %v3600
        %v3602 = vrot.slane %v3601, 1
        %v3603 = vmax.f32 %v3601, %v3602
        %v3604 = vsel %vm3491, %v3398, -inf
        %v3605 = vrot.slane %v3604, 4
        %v3606 = vmax.f32 %v3604, %v3605
        %v3607 = vrot.slane %v3606, 2
        %v3608 = vmax.f32 %v3606, %v3607
        %v3609 = vrot.slane %v3608, 1
        %v3610 = vmax.f32 %v3608, %v3609
        %v3611 = vsel %vm3491, %v3406, -inf
        %v3612 = vrot.slane %v3611, 4
        %v3613 = vmax.f32 %v3611, %v3612
        %v3614 = vrot.slane %v3613, 2
        %v3615 = vmax.f32 %v3613, %v3614
        %v3616 = vrot.slane %v3615, 1
        %v3617 = vmax.f32 %v3615, %v3616
        %v3618 = vsel %vm3491, %v3405, -inf
        %v3619 = vrot.slane %v3618, 4
        %v3620 = vmax.f32 %v3618, %v3619
        %v3621 = vrot.slane %v3620, 2
        %v3622 = vmax.f32 %v3620, %v3621
        %v3623 = vrot.slane %v3622, 1
        %v3624 = vmax.f32 %v3622, %v3623
        %v3625 = vsel %vm3491, %v3407, -inf
        %v3626 = vrot.slane %v3625, 4
        %v3627 = vmax.f32 %v3625, %v3626
        %v3628 = vrot.slane %v3627, 2
        %v3629 = vmax.f32 %v3627, %v3628
        %v3630 = vrot.slane %v3629, 1
        %v3631 = vmax.f32 %v3629, %v3630
        %v3632 = vsel %vm3491, %v3415, -inf
        %v3633 = vrot.slane %v3632, 4
        %v3634 = vmax.f32 %v3632, %v3633
        %v3635 = vrot.slane %v3634, 2
        %v3636 = vmax.f32 %v3634, %v3635
        %v3637 = vrot.slane %v3636, 1
        %v3638 = vmax.f32 %v3636, %v3637
        %v3639 = vsel %vm3491, %v3423, -inf
        %v3640 = vrot.slane %v3639, 4
        %v3641 = vmax.f32 %v3639, %v3640
        %v3642 = vrot.slane %v3641, 2
        %v3643 = vmax.f32 %v3641, %v3642
        %v3644 = vrot.slane %v3643, 1
        %v3645 = vmax.f32 %v3643, %v3644
        %v3646 = vsel %vm3491, %v3422, -inf
        %v3647 = vrot.slane %v3646, 4
        %v3648 = vmax.f32 %v3646, %v3647
        %v3649 = vrot.slane %v3648, 2
        %v3650 = vmax.f32 %v3648, %v3649
        %v3651 = vrot.slane %v3650, 1
        %v3652 = vmax.f32 %v3650, %v3651
        %v3653 = vsel %vm3491, %v3424, -inf
        %v3654 = vrot.slane %v3653, 4
        %v3655 = vmax.f32 %v3653, %v3654
        %v3656 = vrot.slane %v3655, 2
        %v3657 = vmax.f32 %v3655, %v3656
        %v3658 = vrot.slane %v3657, 1
        %v3659 = vmax.f32 %v3657, %v3658
        %v3660 = vsel %vm3491, %v3432, -inf
        %v3661 = vrot.slane %v3660, 4
        %v3662 = vmax.f32 %v3660, %v3661
        %v3663 = vrot.slane %v3662, 2
        %v3664 = vmax.f32 %v3662, %v3663
        %v3665 = vrot.slane %v3664, 1
        %v3666 = vmax.f32 %v3664, %v3665
        %v3667 = vsel %vm3491, %v3440, -inf
        %v3668 = vrot.slane %v3667, 4
        %v3669 = vmax.f32 %v3667, %v3668
        %v3670 = vrot.slane %v3669, 2
        %v3671 = vmax.f32 %v3669, %v3670
        %v3672 = vrot.slane %v3671, 1
        %v3673 = vmax.f32 %v3671, %v3672
        %v3674 = vsel %vm3491, %v3439, -inf
        %v3675 = vrot.slane %v3674, 4
        %v3676 = vmax.f32 %v3674, %v3675
        %v3677 = vrot.slane %v3676, 2
        %v3678 = vmax.f32 %v3676, %v3677
        %v3679 = vrot.slane %v3678, 1
        %v3680 = vmax.f32 %v3678, %v3679
        %v3681 = vsel %vm3491, %v3441, -inf
        %v3682 = vrot.slane %v3681, 4
        %v3683 = vmax.f32 %v3681, %v3682
        %v3684 = vrot.slane %v3683, 2
        %v3685 = vmax.f32 %v3683, %v3684
        %v3686 = vrot.slane %v3685, 1
        %v3687 = vmax.f32 %v3685, %v3686
        %v3688 = vsel %vm3491, %v3449, -inf
        %v3689 = vrot.slane %v3688, 4
        %v3690 = vmax.f32 %v3688, %v3689
        %v3691 = vrot.slane %v3690, 2
        %v3692 = vmax.f32 %v3690, %v3691
        %v3693 = vrot.slane %v3692, 1
        %v3694 = vmax.f32 %v3692, %v3693
        %v3695 = vsel %vm3491, %v3457, -inf
        %v3696 = vrot.slane %v3695, 4
        %v3697 = vmax.f32 %v3695, %v3696
        %v3698 = vrot.slane %v3697, 2
        %v3699 = vmax.f32 %v3697, %v3698
        %v3700 = vrot.slane %v3699, 1
        %v3701 = vmax.f32 %v3699, %v3700
        %v3702 = vsel %vm3491, %v3456, -inf
        %v3703 = vrot.slane %v3702, 4
        %v3704 = vmax.f32 %v3702, %v3703
        %v3705 = vrot.slane %v3704, 2
        %v3706 = vmax.f32 %v3704, %v3705
        %v3707 = vrot.slane %v3706, 1
        %v3708 = vmax.f32 %v3706, %v3707
        %v3709 = vsel %vm3491, %v3458, -inf
        %v3710 = vrot.slane %v3709, 4
        %v3711 = vmax.f32 %v3709, %v3710
        %v3712 = vrot.slane %v3711, 2
        %v3713 = vmax.f32 %v3711, %v3712
        %v3714 = vrot.slane %v3713, 1
        %v3715 = vmax.f32 %v3713, %v3714
        %v3716 = vsel %vm2973, %v3498, -inf
        %v3717 = vsel %vm2973, %v3526, -inf
        %v3718 = vmax.f32 %v3716, %v3717
        %v3719 = vsel %vm2973, %v3505, -inf
        %v3720 = vsel %vm2973, %v3533, -inf
        %v3721 = vmax.f32 %v3719, %v3720
        %v3722 = vsel %vm2973, %v3512, -inf
        %v3723 = vsel %vm2973, %v3540, -inf
        %v3724 = vmax.f32 %v3722, %v3723
        %v3725 = vsel %vm2973, %v3519, -inf
        %v3726 = vsel %vm2973, %v3547, -inf
        %v3727 = vmax.f32 %v3725, %v3726
        %v3728 = vsel %vm2973, %v3554, -inf
        %v3729 = vsel %vm2973, %v3582, -inf
        %v3730 = vmax.f32 %v3728, %v3729
        %v3731 = vsel %vm2973, %v3561, -inf
        %v3732 = vsel %vm2973, %v3589, -inf
        %v3733 = vmax.f32 %v3731, %v3732
        %v3734 = vsel %vm2973, %v3568, -inf
        %v3735 = vsel %vm2973, %v3596, -inf
        %v3736 = vmax.f32 %v3734, %v3735
        %v3737 = vsel %vm2973, %v3575, -inf
        %v3738 = vsel %vm2973, %v3603, -inf
        %v3739 = vmax.f32 %v3737, %v3738
        %v3740 = vsel %vm2973, %v3610, -inf
        %v3741 = vsel %vm2973, %v3638, -inf
        %v3742 = vmax.f32 %v3740, %v3741
        %v3743 = vsel %vm2973, %v3617, -inf
        %v3744 = vsel %vm2973, %v3645, -inf
        %v3745 = vmax.f32 %v3743, %v3744
        %v3746 = vsel %vm2973, %v3624, -inf
        %v3747 = vsel %vm2973, %v3652, -inf
        %v3748 = vmax.f32 %v3746, %v3747
        %v3749 = vsel %vm2973, %v3631, -inf
        %v3750 = vsel %vm2973, %v3659, -inf
        %v3751 = vmax.f32 %v3749, %v3750
        %v3752 = vsel %vm2973, %v3666, -inf
        %v3753 = vsel %vm2973, %v3694, -inf
        %v3754 = vmax.f32 %v3752, %v3753
        %v3755 = vsel %vm2973, %v3673, -inf
        %v3756 = vsel %vm2973, %v3701, -inf
        %v3757 = vmax.f32 %v3755, %v3756
        %v3758 = vsel %vm2973, %v3680, -inf
        %v3759 = vsel %vm2973, %v3708, -inf
        %v3760 = vmax.f32 %v3758, %v3759
        %v3761 = vsel %vm2973, %v3687, -inf
        %v3762 = vsel %vm2973, %v3715, -inf
        %v3763 = vmax.f32 %v3761, %v3762
        %vm3764 = vcmask 516096
        %3765 = vst.msk [vmem:[#allocation3] sm:$0x1] %vm3764, 0.0
        %3766 = vst.msk [vmem:[#allocation3 + $0x8] sm:$0x1] %vm3764, 0.0
        %3767 = vst.msk [vmem:[#allocation3 + $0x10] sm:$0x1] %vm3764, 0.0
        %3768 = vst.msk [vmem:[#allocation3 + $0x18] sm:$0x1] %vm3764, 0.0
        %3769 = vst.msk [vmem:[#allocation3 + $0x5] sm:$0x1] %vm3764, 0.0
        %3770 = vst.msk [vmem:[#allocation3 + $0xd] sm:$0x1] %vm3764, 0.0
        %3771 = vst.msk [vmem:[#allocation3 + $0x15] sm:$0x1] %vm3764, 0.0
        %3772 = vst.msk [vmem:[#allocation3 + $0x1d] sm:$0x1] %vm3764, 0.0
        %v3789 = vsel %vm2696, %v3721, %v3718
        %v3790 = vsel %vm2698, %v3724, %v3789
        %v3791 = vsel %vm2700, %v3727, %v3790
        %v3792 = vsel %vm2696, %v3733, %v3730
        %v3793 = vsel %vm2698, %v3736, %v3792
        %v3794 = vsel %vm2700, %v3739, %v3793
        %v3795 = vsel %vm2696, %v3745, %v3742
        %v3796 = vsel %vm2698, %v3748, %v3795
        %v3797 = vsel %vm2700, %v3751, %v3796
        %v3798 = vsel %vm2696, %v3757, %v3754
        %v3799 = vsel %vm2698, %v3760, %v3798
        %v3800 = vsel %vm2700, %v3763, %v3799
        %vm3805 = vcmask 519168
        %3806 = vst.msk [vmem:[#allocation3 + $0x1] sm:$0xf] %vm3805, %v3791
        %3807 = vst.msk [vmem:[#allocation3 + $0x9] sm:$0xf] %vm3805, %v3794
        %3808 = vst.msk [vmem:[#allocation3 + $0x11] sm:$0xf] %vm3805, %v3797
        %3809 = vst.msk [vmem:[#allocation3 + $0x19] sm:$0xf] %vm3805, %v3800
        %v3810 = vld [vmem:[#allocation3] sm:$0xf]
        %v3811 = vld [vmem:[#allocation3 + $0x8] sm:$0xf]
        %v3812 = vld [vmem:[#allocation3 + $0x10] sm:$0xf]
        %v3813 = vld [vmem:[#allocation3 + $0x18] sm:$0xf]
        %v3814 = vld [vmem:[#allocation3 + $0x1] sm:$0xf]
        %v3815 = vld [vmem:[#allocation3 + $0x9] sm:$0xf]
        %v3816 = vld [vmem:[#allocation3 + $0x11] sm:$0xf]
        %v3817 = vld [vmem:[#allocation3 + $0x19] sm:$0xf]
        %v3818 = vld [vmem:[#allocation3 + $0x2] sm:$0xf]
        %v3819 = vld [vmem:[#allocation3 + $0xa] sm:$0xf]
        %v3820 = vld [vmem:[#allocation3 + $0x12] sm:$0xf]
        %v3821 = vld [vmem:[#allocation3 + $0x1a] sm:$0xf]
        %3825 = vrot.lane.b32.xlu0 %v3814, 64
        %v3826 = vpop.permute.xlu0 %3825
        %3827 = vrot.lane.b32.xlu0 %v3815, 64
        %v3828 = vpop.permute.xlu0 %3827
        %3829 = vrot.lane.b32.xlu0 %v3816, 64
        %v3830 = vpop.permute.xlu0 %3829
        %3838 = vrot.lane.b32.xlu0 %v3810, 64
        %v3839 = vpop.permute.xlu0 %3838
        %3840 = vrot.lane.b32.xlu0 %v3811, 64
        %v3841 = vpop.permute.xlu0 %3840
        %3842 = vrot.lane.b32.xlu0 %v3812, 64
        %v3843 = vpop.permute.xlu0 %3842
        %3844 = vrot.lane.b32.xlu0 %v3813, 64
        %v3845 = vpop.permute.xlu0 %3844
        %3854 = vrot.lane.b32.xlu0 %v3818, 64
        %v3855 = vpop.permute.xlu0 %3854
        %3856 = vrot.lane.b32.xlu0 %v3819, 64
        %v3857 = vpop.permute.xlu0 %3856
        %3858 = vrot.lane.b32.xlu0 %v3820, 64
        %v3859 = vpop.permute.xlu0 %3858
        %3860 = vrot.lane.b32.xlu0 %v3821, 64
        %v3861 = vpop.permute.xlu0 %3860
        %3867 = vrot.lane.b32.xlu0 %v3817, 64
        %v3868 = vpop.permute.xlu0 %3867
        %v3870 = vsel %vm2973, 0.0, %v2839
        %v3871 = vsel %vm2973, %v3810, %v3826
        %v3872 = vsel %vm2973, %v3811, %v3828
        %v3873 = vsel %vm2973, %v3812, %v3830
        %v3874 = vsel %vm2973, 0.0, %v3839
        %v3875 = vsel %vm2973, %v3818, %v3841
        %v3876 = vsel %vm2973, %v3819, %v3843
        %v3877 = vsel %vm2973, %v3820, %v3845
        %v3878 = vsel %vm2973, %v3814, %v3855
        %v3879 = vsel %vm2973, %v3815, %v3857
        %v3880 = vsel %vm2973, %v3816, %v3859
        %v3881 = vsel %vm2973, %v3817, %v3861
        %v3882 = vsel %vm2973, %v3813, %v3868
        %v3896 = vcombine.low %v3870, %v3874
        %v3897 = vcombine.low %v3878, %v3872
        %v3898 = vcombine.low %v3871, %v3875
        %v3899 = vcombine.low %v3879, %v3873
        %v3900 = vcombine.low %v3872, %v3876
        %v3901 = vcombine.low %v3880, %v3882
        %v3902 = vcombine.low %v3873, %v3877
        %v3903 = vcombine.low %v3881, %v3870
        %v3904 = vld [vmem:[%s7] sm:$0xff]
        %v3905 = vld [vmem:[%s7 + $0x8] sm:$0xff]
        %v3906 = vld [vmem:[%s7 + $0x10] sm:$0xff]
        %v3907 = vld [vmem:[%s7 + $0x18] sm:$0xff]
        %v3908 = vld [vmem:[%s7 + $0x20] sm:$0xff]
        %v3909 = vld [vmem:[%s7 + $0x28] sm:$0xff]
        %v3910 = vld [vmem:[%s7 + $0x30] sm:$0xff]
        %v3911 = vld [vmem:[%s7 + $0x38] sm:$0xff]
        %v3912 = vld [vmem:[%s7 + $0x40] sm:$0xff]
        %v3913 = vld [vmem:[%s7 + $0x48] sm:$0xff]
        %v3914 = vld [vmem:[%s7 + $0x50] sm:$0xff]
        %v3915 = vld [vmem:[%s7 + $0x58] sm:$0xff]
        %v3916 = vld [vmem:[%s7 + $0x60] sm:$0xff]
        %v3917 = vld [vmem:[%s7 + $0x68] sm:$0xff]
        %v3918 = vld [vmem:[%s7 + $0x70] sm:$0xff]
        %v3919 = vld [vmem:[%s7 + $0x78] sm:$0xff]
        %v3920 = vld [vmem:[%s7 + $0x80] sm:$0xff]
        %v3921 = vld [vmem:[%s7 + $0x88] sm:$0xff]
        %v3922 = vld [vmem:[%s7 + $0x90] sm:$0xff]
        %v3923 = vld [vmem:[%s7 + $0x98] sm:$0xff]
        %v3924 = vld [vmem:[%s7 + $0xa0] sm:$0xff]
        %v3925 = vld [vmem:[%s7 + $0xa8] sm:$0xff]
        %v3926 = vld [vmem:[%s7 + $0xb0] sm:$0xff]
        %v3927 = vld [vmem:[%s7 + $0xb8] sm:$0xff]
        %v3928 = vld [vmem:[%s7 + $0xc0] sm:$0xff]
        %v3929 = vld [vmem:[%s7 + $0xc8] sm:$0xff]
        %v3930 = vld [vmem:[%s7 + $0xd0] sm:$0xff]
        %v3931 = vld [vmem:[%s7 + $0xd8] sm:$0xff]
        %v3932 = vld [vmem:[%s7 + $0xe0] sm:$0xff]
        %v3933 = vld [vmem:[%s7 + $0xe8] sm:$0xff]
        %v3934 = vld [vmem:[%s7 + $0xf0] sm:$0xff]
        %v3935 = vld [vmem:[%s7 + $0xf8] sm:$0xff]
        %v3936 = vld [vmem:[%s7 + $0x100] sm:$0xff]
        %v3937 = vld [vmem:[%s7 + $0x108] sm:$0xff]
        %v3938 = vld [vmem:[%s7 + $0x110] sm:$0xff]
        %v3939 = vld [vmem:[%s7 + $0x118] sm:$0xff]
        %v3940 = vld [vmem:[%s7 + $0x120] sm:$0xff]
        %v3941 = vld [vmem:[%s7 + $0x128] sm:$0xff]
        %v3942 = vld [vmem:[%s7 + $0x130] sm:$0xff]
        %v3943 = vld [vmem:[%s7 + $0x138] sm:$0xff]
        %v3944 = vld [vmem:[%s7 + $0x140] sm:$0xff]
        %v3945 = vld [vmem:[%s7 + $0x148] sm:$0xff]
        %v3946 = vld [vmem:[%s7 + $0x150] sm:$0xff]
        %v3947 = vld [vmem:[%s7 + $0x158] sm:$0xff]
        %v3948 = vld [vmem:[%s7 + $0x160] sm:$0xff]
        %v3949 = vld [vmem:[%s7 + $0x168] sm:$0xff]
        %v3950 = vld [vmem:[%s7 + $0x170] sm:$0xff]
        %v3951 = vld [vmem:[%s7 + $0x178] sm:$0xff]
        %v3952 = vld [vmem:[%s7 + $0x180] sm:$0xff]
        %v3953 = vld [vmem:[%s7 + $0x188] sm:$0xff]
        %v3954 = vld [vmem:[%s7 + $0x190] sm:$0xff]
        %v3955 = vld [vmem:[%s7 + $0x198] sm:$0xff]
        %v3956 = vld [vmem:[%s7 + $0x1a0] sm:$0xff]
        %v3957 = vld [vmem:[%s7 + $0x1a8] sm:$0xff]
        %v3958 = vld [vmem:[%s7 + $0x1b0] sm:$0xff]
        %v3959 = vld [vmem:[%s7 + $0x1b8] sm:$0xff]
        %v3960 = vld [vmem:[%s7 + $0x1c0] sm:$0xff]
        %v3961 = vld [vmem:[%s7 + $0x1c8] sm:$0xff]
        %v3962 = vld [vmem:[%s7 + $0x1d0] sm:$0xff]
        %v3963 = vld [vmem:[%s7 + $0x1d8] sm:$0xff]
        %v3964 = vld [vmem:[%s7 + $0x1e0] sm:$0xff]
        %v3965 = vld [vmem:[%s7 + $0x1e8] sm:$0xff]
        %v3966 = vld [vmem:[%s7 + $0x1f0] sm:$0xff]
        %v3967 = vld [vmem:[%s7 + $0x1f8] sm:$0xff]
        %v3968 = vld [vmem:[%s7 + $0x200] sm:$0xff]
        %v3969 = vld [vmem:[%s7 + $0x208] sm:$0xff]
        %v3970 = vld [vmem:[%s7 + $0x210] sm:$0xff]
        %v3971 = vld [vmem:[%s7 + $0x218] sm:$0xff]
        %v3972 = vld [vmem:[%s7 + $0x220] sm:$0xff]
        %v3973 = vld [vmem:[%s7 + $0x228] sm:$0xff]
        %v3974 = vld [vmem:[%s7 + $0x230] sm:$0xff]
        %v3975 = vld [vmem:[%s7 + $0x238] sm:$0xff]
        %v3976 = vcombine.low %v3896, %v3898
        %v3977 = vcombine.high %v3896, %v3898
        %v3978 = vcombine.low %v3897, %v3899
        %v3979 = vcombine.high %v3897, %v3899
        %v3980 = vcombine.low %v3819, %v3820
        %v3981 = vcombine.low %v3900, %v3902
        %v3982 = vcombine.high %v3900, %v3902
        %v3983 = vcombine.low %v3901, %v3903
        %v3984 = vcombine.high %v3901, %v3903
        %v3985 = vcombine.low %v3821, 0.0
        %v3994 = vsel %vm2973, %v3980, 0
        %v3996 = vsel %vm2973, %v3985, 0
        %3998 = vmatprep.subr.mxu0 0.0
        %3999 = vmatpush1.msra.mxu0 %v3904
        %4000 = vmatprep.subr.mxu0 0.0
        %4001 = vmatpush1.msra.mxu0 %v3905
        %4002 = vmatprep.subr.mxu0 0.0
        %4003 = vmatpush1.msra.mxu0 %v3906
        %4004 = vmatprep.subr.mxu0 0.0
        %4005 = vmatpush1.msra.mxu0 %v3907
        %4006 = vmatprep.subr.mxu0 0.0
        %4007 = vmatpush1.msra.mxu0 %v3908
        %4008 = vmatprep.subr.mxu0 0.0
        %4009 = vmatpush1.msra.mxu0 %v3909
        %4010 = vmatprep.subr.mxu0 0.0
        %4011 = vmatpush1.msra.mxu0 %v3910
        %4012 = vmatprep.subr.mxu0 0.0
        %4013 = vmatpush1.msra.mxu0 %v3911
        %4014 = vmatprep.subr.mxu0 0.0
        %4015 = vmatpush1.msra.mxu0 %v3912
        %4016 = vmatprep.subr.mxu0 0.0
        %4017 = vmatpush1.msra.mxu0 %v3913
        %4018 = vmatprep.subr.mxu0 0.0
        %4019 = vmatpush1.msra.mxu0 %v3914
        %4020 = vmatprep.subr.mxu0 0.0
        %4021 = vmatpush1.msra.mxu0 %v3915
        %4022 = vmatprep.subr.mxu0 0.0
        %4023 = vmatpush1.msra.mxu0 %v3916
        %4024 = vmatprep.subr.mxu0 0.0
        %4025 = vmatpush1.msra.mxu0 %v3917
        %4026 = vmatprep.subr.mxu0 0.0
        %4027 = vmatpush1.msra.mxu0 %v3918
        %4028 = vmatprep.subr.mxu0 0.0
        %4029 = vmatpush1.msra.mxu0 %v3919
        %4030 = vmatprep.subr.mxu0 0.0
        %4031 = vmatpush1.msra.mxu0 %v3920
        %4032 = vmatprep.subr.mxu0 0.0
        %4033 = vmatpush1.msra.mxu0 %v3921
        %4034 = vmatprep.subr.mxu0 0.0
        %4035 = vmatpush1.msra.mxu0 %v3922
        %4036 = vmatprep.subr.mxu0 0.0
        %4037 = vmatpush1.msra.mxu0 %v3923
        %4038 = vmatprep.subr.mxu0 0.0
        %4039 = vmatpush1.msra.mxu0 %v3924
        %4040 = vmatprep.subr.mxu0 0.0
        %4041 = vmatpush1.msra.mxu0 %v3925
        %4042 = vmatprep.subr.mxu0 0.0
        %4043 = vmatpush1.msra.mxu0 %v3926
        %4044 = vmatprep.subr.mxu0 0.0
        %4045 = vmatpush1.msra.mxu0 %v3927
        %4046 = vmatprep.subr.mxu0 0.0
        %4047 = vmatpush1.msra.mxu0 %v3928
        %4048 = vmatprep.subr.mxu0 0.0
        %4049 = vmatpush1.msra.mxu0 %v3929
        %4050 = vmatprep.subr.mxu0 0.0
        %4051 = vmatpush1.msra.mxu0 %v3930
        %4052 = vmatprep.subr.mxu0 0.0
        %4053 = vmatpush1.msra.mxu0 %v3931
        %4054 = vmatprep.subr.mxu0 0.0
        %4055 = vmatpush1.msra.mxu0 %v3932
        %4056 = vmatprep.subr.mxu0 0.0
        %4057 = vmatpush1.msra.mxu0 %v3933
        %4058 = vmatprep.subr.mxu0 0.0
        %4059 = vmatpush1.msra.mxu0 %v3934
        %4060 = vmatprep.subr.mxu0 0.0
        %4061 = vmatpush1.msra.mxu0 %v3935
        %4062 = vmatprep.mubr.f32.mxu0 %v3977
        %4063 = vmatmul.mubr.f32.gmra.mrb[0].mxu0 %v3976
        %v4064 = vpop.f32.mrb[0].mxu0
        %v4065 = vadd.f32 0.0, %v4064
        %v4066 = vpop.f32.mrb[0].mxu0
        %4067 = vmatprep.mubr.f32.mxu0 %v3982
        %4068 = vmatmul.mubr.f32.gmra.mrb[0].mxu0 %v3981
        %v4069 = vpop.f32.mrb[0].mxu0
        %v4070 = vadd.f32 0.0, %v4069
        %v4071 = vpop.f32.mrb[0].mxu0
        %4072 = vdwg.mxu0
        %4073 = vmatprep.subr.mxu0 0.0
        %4074 = vmatpush1.msra.mxu0 %v3936
        %4075 = vmatprep.subr.mxu0 0.0
        %4076 = vmatpush1.msra.mxu0 %v3937
        %4077 = vmatprep.subr.mxu0 0.0
        %4078 = vmatpush1.msra.mxu0 %v3938
        %4079 = vmatprep.subr.mxu0 0.0
        %4080 = vmatpush1.msra.mxu0 %v3939
        %4081 = vmatprep.subr.mxu0 0.0
        %4082 = vmatpush1.msra.mxu0 %v3940
        %4083 = vmatprep.subr.mxu0 0.0
        %4084 = vmatpush1.msra.mxu0 %v3941
        %4085 = vmatprep.subr.mxu0 0.0
        %4086 = vmatpush1.msra.mxu0 %v3942
        %4087 = vmatprep.subr.mxu0 0.0
        %4088 = vmatpush1.msra.mxu0 %v3943
        %4089 = vmatprep.subr.mxu0 0.0
        %4090 = vmatpush1.msra.mxu0 %v3944
        %4091 = vmatprep.subr.mxu0 0.0
        %4092 = vmatpush1.msra.mxu0 %v3945
        %4093 = vmatprep.subr.mxu0 0.0
        %4094 = vmatpush1.msra.mxu0 %v3946
        %4095 = vmatprep.subr.mxu0 0.0
        %4096 = vmatpush1.msra.mxu0 %v3947
        %4097 = vmatprep.subr.mxu0 0.0
        %4098 = vmatpush1.msra.mxu0 %v3948
        %4099 = vmatprep.subr.mxu0 0.0
        %4100 = vmatpush1.msra.mxu0 %v3949
        %4101 = vmatprep.subr.mxu0 0.0
        %4102 = vmatpush1.msra.mxu0 %v3950
        %4103 = vmatprep.subr.mxu0 0.0
        %4104 = vmatpush1.msra.mxu0 %v3951
        %4105 = vmatprep.subr.mxu0 0.0
        %4106 = vmatpush1.msra.mxu0 %v3952
        %4107 = vmatprep.subr.mxu0 0.0
        %4108 = vmatpush1.msra.mxu0 %v3953
        %4109 = vmatprep.subr.mxu0 0.0
        %4110 = vmatpush1.msra.mxu0 %v3954
        %4111 = vmatprep.subr.mxu0 0.0
        %4112 = vmatpush1.msra.mxu0 %v3955
        %4113 = vmatprep.subr.mxu0 0.0
        %4114 = vmatpush1.msra.mxu0 %v3956
        %4115 = vmatprep.subr.mxu0 0.0
        %4116 = vmatpush1.msra.mxu0 %v3957
        %4117 = vmatprep.subr.mxu0 0.0
        %4118 = vmatpush1.msra.mxu0 %v3958
        %4119 = vmatprep.subr.mxu0 0.0
        %4120 = vmatpush1.msra.mxu0 %v3959
        %4121 = vmatprep.subr.mxu0 0.0
        %4122 = vmatpush1.msra.mxu0 %v3960
        %4123 = vmatprep.subr.mxu0 0.0
        %4124 = vmatpush1.msra.mxu0 %v3961
        %4125 = vmatprep.subr.mxu0 0.0
        %4126 = vmatpush1.msra.mxu0 %v3962
        %4127 = vmatprep.subr.mxu0 0.0
        %4128 = vmatpush1.msra.mxu0 %v3963
        %4129 = vmatprep.subr.mxu0 0.0
        %4130 = vmatpush1.msra.mxu0 %v3964
        %4131 = vmatprep.subr.mxu0 0.0
        %4132 = vmatpush1.msra.mxu0 %v3965
        %4133 = vmatprep.subr.mxu0 0.0
        %4134 = vmatpush1.msra.mxu0 %v3966
        %4135 = vmatprep.subr.mxu0 0.0
        %4136 = vmatpush1.msra.mxu0 %v3967
        %4137 = vmatprep.mubr.f32.mxu0 %v3979
        %4138 = vmatmul.mubr.f32.gmra.mrb[0].mxu0 %v3978
        %v4139 = vpop.f32.mrb[0].mxu0
        %v4140 = vadd.f32 %v4065, %v4139
        %v4141 = vpop.f32.mrb[0].mxu0
        %4142 = vmatprep.mubr.f32.mxu0 %v3984
        %4143 = vmatmul.mubr.f32.gmra.mrb[0].mxu0 %v3983
        %v4144 = vpop.f32.mrb[0].mxu0
        %v4145 = vadd.f32 %v4070, %v4144
        %v4146 = vpop.f32.mrb[0].mxu0
        %4147 = vdwg.mxu0
        %4148 = vmatprep.subr.mxu0 0.0
        %4149 = vmatpush1.msra.mxu0 %v3968
        %4150 = vmatprep.subr.mxu0 0.0
        %4151 = vmatpush1.msra.mxu0 %v3969
        %4152 = vmatprep.subr.mxu0 0.0
        %4153 = vmatpush1.msra.mxu0 %v3970
        %4154 = vmatprep.subr.mxu0 0.0
        %4155 = vmatpush1.msra.mxu0 %v3971
        %4156 = vmatprep.subr.mxu0 0.0
        %4157 = vmatpush1.msra.mxu0 %v3972
        %4158 = vmatprep.subr.mxu0 0.0
        %4159 = vmatpush1.msra.mxu0 %v3973
        %4160 = vmatprep.subr.mxu0 0.0
        %4161 = vmatpush1.msra.mxu0 %v3974
        %4162 = vmatprep.subr.mxu0 0.0
        %4163 = vmatpush1.msra.mxu0 %v3975
        %4164 = vmatprep.subr.mxu0 0.0
        %4165 = vmatpush1.msra.mxu0 0.0
        %4166 = vmatprep.subr.mxu0 0.0
        %4167 = vmatpush1.msra.mxu0 0.0
        %4168 = vmatprep.subr.mxu0 0.0
        %4169 = vmatpush1.msra.mxu0 0.0
        %4170 = vmatprep.subr.mxu0 0.0
        %4171 = vmatpush1.msra.mxu0 0.0
        %4172 = vmatprep.subr.mxu0 0.0
        %4173 = vmatpush1.msra.mxu0 0.0
        %4174 = vmatprep.subr.mxu0 0.0
        %4175 = vmatpush1.msra.mxu0 0.0
        %4176 = vmatprep.subr.mxu0 0.0
        %4177 = vmatpush1.msra.mxu0 0.0
        %4178 = vmatprep.subr.mxu0 0.0
        %4179 = vmatpush1.msra.mxu0 0.0
        %4180 = vmatprep.subr.mxu0 0.0
        %4181 = vmatpush1.msra.mxu0 0.0
        %4182 = vmatprep.subr.mxu0 0.0
        %4183 = vmatpush1.msra.mxu0 0.0
        %4184 = vmatprep.subr.mxu0 0.0
        %4185 = vmatpush1.msra.mxu0 0.0
        %4186 = vmatprep.subr.mxu0 0.0
        %4187 = vmatpush1.msra.mxu0 0.0
        %4188 = vmatprep.subr.mxu0 0.0
        %4189 = vmatpush1.msra.mxu0 0.0
        %4190 = vmatprep.subr.mxu0 0.0
        %4191 = vmatpush1.msra.mxu0 0.0
        %4192 = vmatprep.subr.mxu0 0.0
        %4193 = vmatpush1.msra.mxu0 0.0
        %4194 = vmatprep.subr.mxu0 0.0
        %4195 = vmatpush1.msra.mxu0 0.0
        %4196 = vmatprep.subr.mxu0 0.0
        %4197 = vmatpush1.msra.mxu0 0.0
        %4198 = vmatprep.subr.mxu0 0.0
        %4199 = vmatpush1.msra.mxu0 0.0
        %4200 = vmatprep.subr.mxu0 0.0
        %4201 = vmatpush1.msra.mxu0 0.0
        %4202 = vmatprep.subr.mxu0 0.0
        %4203 = vmatpush1.msra.mxu0 0.0
        %4204 = vmatprep.subr.mxu0 0.0
        %4205 = vmatpush1.msra.mxu0 0.0
        %4206 = vmatprep.subr.mxu0 0.0
        %4207 = vmatpush1.msra.mxu0 0.0
        %4208 = vmatprep.subr.mxu0 0.0
        %4209 = vmatpush1.msra.mxu0 0.0
        %4210 = vmatprep.subr.mxu0 0.0
        %4211 = vmatpush1.msra.mxu0 0.0
        %4212 = vmatprep.mubr.f32.mxu0 0.0
        %4213 = vmatmul.mubr.f32.gmra.mrb[0].mxu0 %v3994
        %v4214 = vpop.f32.mrb[0].mxu0
        %v4215 = vadd.f32 %v4140, %v4214
        %v4216 = vpop.f32.mrb[0].mxu0
        %4217 = vmatprep.mubr.f32.mxu0 0.0
        %4218 = vmatmul.mubr.f32.gmra.mrb[0].mxu0 %v3996
        %v4219 = vpop.f32.mrb[0].mxu0
        %v4220 = vadd.f32 %v4145, %v4219
        %v4221 = vpop.f32.mrb[0].mxu0
        %4222 = vdwg.mxu0
        %v4223 = vld [vmem:[%s8] sm:$0x1]
        %v4224 = vld [vmem:[%s9] sm:$0x1]
        %v4226 = vlaneseq
        %v4227 = vshrl.u32 %v4226, 7
        %v4228 = vsub.s32 0, %v4227
        %v4229 = vrot.slane %v4223, %v4228
        %v4231 = vmul.f32 %v4215, %v4229
        %v4232 = vmul.f32 %v4220, %v4229
        %v4234 = vlaneseq
        %v4235 = vshrl.u32 %v4234, 7
        %v4236 = vsub.s32 0, %v4235
        %v4237 = vrot.slane %v4224, %v4236
        %v4239 = vadd.f32 %v4231, %v4237
        %v4240 = vadd.f32 %v4232, %v4237
        %v4241 = vmax.f32 %v4239, 0.0
        %v4242 = vmax.f32 %v4240, 0.0
        %v4245 = vcombine.high %v4241, %v4241
        %v4247 = vunpack.c.l.s4 1983009808
        %v4248 = vunpack.c.0.s8 %v4247
        %v4249 = vlaneseq
        %v4250 = vshrl.u32 %v4249, 7
        %v4251 = vsub.s32 %v4248, %v4250
        %v4252 = vrot.slane %v4241, %v4251
        %v4254 = vunpack.c.l.s4 1983009808
        %v4255 = vunpack.c.0.s8 %v4254
        %v4256 = vlaneseq
        %v4257 = vshrl.u32 %v4256, 7
        %v4258 = vsub.s32 %v4255, %v4257
        %v4259 = vrot.slane %v4245, %v4258
        %v4260 = vcombine.high %v4252, %v4252
        %v4261 = vcombine.high %v4259, %v4259
        %v4262 = vcombine.high %v4242, %v4242
        %v4264 = vunpack.c.l.s4 1983009808
        %v4265 = vunpack.c.0.s8 %v4264
        %v4266 = vlaneseq
        %v4267 = vshrl.u32 %v4266, 7
        %v4268 = vsub.s32 %v4265, %v4267
        %v4269 = vrot.slane %v4242, %v4268
        %v4271 = vunpack.c.l.s4 1983009808
        %v4272 = vunpack.c.0.s8 %v4271
        %v4273 = vlaneseq
        %v4274 = vshrl.u32 %v4273, 7
        %v4275 = vsub.s32 %v4272, %v4274
        %v4276 = vrot.slane %v4262, %v4275
        %v4277 = vcombine.high %v4269, %v4269
        %v4278 = vcombine.high %v4276, %v4276
        %v4287 = vsel %vm3491, %v4252, -inf
        %v4288 = vrot.slane %v4287, 4
        %v4289 = vmax.f32 %v4287, %v4288
        %v4290 = vrot.slane %v4289, 2
        %v4291 = vmax.f32 %v4289, %v4290
        %v4292 = vrot.slane %v4291, 1
        %v4293 = vmax.f32 %v4291, %v4292
        %v4294 = vsel %vm3491, %v4260, -inf
        %v4295 = vrot.slane %v4294, 4
        %v4296 = vmax.f32 %v4294, %v4295
        %v4297 = vrot.slane %v4296, 2
        %v4298 = vmax.f32 %v4296, %v4297
        %v4299 = vrot.slane %v4298, 1
        %v4300 = vmax.f32 %v4298, %v4299
        %v4301 = vsel %vm3491, %v4259, -inf
        %v4302 = vrot.slane %v4301, 4
        %v4303 = vmax.f32 %v4301, %v4302
        %v4304 = vrot.slane %v4303, 2
        %v4305 = vmax.f32 %v4303, %v4304
        %v4306 = vrot.slane %v4305, 1
        %v4307 = vmax.f32 %v4305, %v4306
        %v4308 = vsel %vm3491, %v4261, -inf
        %v4309 = vrot.slane %v4308, 4
        %v4310 = vmax.f32 %v4308, %v4309
        %v4311 = vrot.slane %v4310, 2
        %v4312 = vmax.f32 %v4310, %v4311
        %v4313 = vrot.slane %v4312, 1
        %v4314 = vmax.f32 %v4312, %v4313
        %v4315 = vsel %vm3491, %v4269, -inf
        %v4316 = vrot.slane %v4315, 4
        %v4317 = vmax.f32 %v4315, %v4316
        %v4318 = vrot.slane %v4317, 2
        %v4319 = vmax.f32 %v4317, %v4318
        %v4320 = vrot.slane %v4319, 1
        %v4321 = vmax.f32 %v4319, %v4320
        %v4322 = vsel %vm3491, %v4277, -inf
        %v4323 = vrot.slane %v4322, 4
        %v4324 = vmax.f32 %v4322, %v4323
        %v4325 = vrot.slane %v4324, 2
        %v4326 = vmax.f32 %v4324, %v4325
        %v4327 = vrot.slane %v4326, 1
        %v4328 = vmax.f32 %v4326, %v4327
        %v4329 = vsel %vm3491, %v4276, -inf
        %v4330 = vrot.slane %v4329, 4
        %v4331 = vmax.f32 %v4329, %v4330
        %v4332 = vrot.slane %v4331, 2
        %v4333 = vmax.f32 %v4331, %v4332
        %v4334 = vrot.slane %v4333, 1
        %v4335 = vmax.f32 %v4333, %v4334
        %v4336 = vsel %vm3491, %v4278, -inf
        %v4337 = vrot.slane %v4336, 4
        %v4338 = vmax.f32 %v4336, %v4337
        %v4339 = vrot.slane %v4338, 2
        %v4340 = vmax.f32 %v4338, %v4339
        %v4341 = vrot.slane %v4340, 1
        %v4342 = vmax.f32 %v4340, %v4341
        %v4343 = vsel %vm2973, %v4293, -inf
        %v4344 = vsel %vm2973, %v4307, -inf
        %v4345 = vmax.f32 %v4343, %v4344
        %v4346 = vsel %vm2973, %v4300, -inf
        %v4347 = vsel %vm2973, %v4314, -inf
        %v4348 = vmax.f32 %v4346, %v4347
        %v4349 = vsel %vm2973, %v4321, -inf
        %v4350 = vsel %vm2973, %v4335, -inf
        %v4351 = vmax.f32 %v4349, %v4350
        %v4352 = vsel %vm2973, %v4328, -inf
        %v4353 = vsel %vm2973, %v4342, -inf
        %v4354 = vmax.f32 %v4352, %v4353
        %4355 = vst.msk [vmem:[#allocation4] sm:$0x1] %vm3764, 0.0
        %4356 = vst.msk [vmem:[#allocation4 + $0x4] sm:$0x1] %vm3764, 0.0
        %4357 = vst.msk [vmem:[#allocation4 + $0x3] sm:$0x1] %vm3764, 0.0
        %4358 = vst.msk [vmem:[#allocation4 + $0x7] sm:$0x1] %vm3764, 0.0
        %v4363 = vsel %vm2696, %v4348, %v4345
        %v4364 = vsel %vm2696, %v4354, %v4351
        %4367 = vst.msk [vmem:[#allocation4 + $0x1] sm:$0x3] %vm3491, %v4363
        %4368 = vst.msk [vmem:[#allocation4 + $0x5] sm:$0x3] %vm3491, %v4364
        %v4369 = vld [vmem:[#allocation4] sm:$0x3]
        %v4370 = vld [vmem:[#allocation4 + $0x4] sm:$0x3]
        %v4371 = vld [vmem:[#allocation4 + $0x1] sm:$0x3]
        %v4372 = vld [vmem:[#allocation4 + $0x5] sm:$0x3]
        %v4373 = vld [vmem:[#allocation4 + $0x2] sm:$0x3]
        %v4374 = vld [vmem:[#allocation4 + $0x6] sm:$0x3]
        %4376 = vrot.lane.b32.xlu0 %v4371, 64
        %v4377 = vpop.permute.xlu0 %4376
        %4381 = vrot.lane.b32.xlu0 %v4369, 64
        %v4382 = vpop.permute.xlu0 %4381
        %4383 = vrot.lane.b32.xlu0 %v4370, 64
        %v4384 = vpop.permute.xlu0 %4383
        %4389 = vrot.lane.b32.xlu0 %v4373, 64
        %v4390 = vpop.permute.xlu0 %4389
        %4391 = vrot.lane.b32.xlu0 %v4374, 64
        %v4392 = vpop.permute.xlu0 %4391
        %4396 = vrot.lane.b32.xlu0 %v4372, 64
        %v4397 = vpop.permute.xlu0 %4396
        %v4399 = vsel %vm2973, %v4369, %v4377
        %v4400 = vsel %vm2973, 0.0, %v4382
        %v4401 = vsel %vm2973, %v4373, %v4384
        %v4402 = vsel %vm2973, %v4371, %v4390
        %v4403 = vsel %vm2973, %v4372, %v4392
        %v4404 = vsel %vm2973, %v4370, %v4397
        %v4411 = vcombine.low %v3870, %v4400
        %v4412 = vcombine.low %v4402, %v4404
        %v4414 = vunpack.c.l.s4 1983009808
        %v4415 = vunpack.c.0.s8 %v4414
        %v4416 = vlaneseq
        %v4417 = vshrl.u32 %v4416, 7
        %v4418 = vsub.s32 %v4415, %v4417
        %v4419 = vrot.slane %v4411, %v4418
        %v4421 = vunpack.c.l.s4 1983009808
        %v4422 = vunpack.c.0.s8 %v4421
        %v4423 = vlaneseq
        %v4424 = vshrl.u32 %v4423, 7
        %v4425 = vsub.s32 %v4422, %v4424
        %v4426 = vrot.slane %v4412, %v4425
        %v4427 = vcombine.low %v4419, %v4426
        %v4429 = vunpack.c.l.s4 1983009808
        %v4430 = vunpack.c.0.s8 %v4429
        %v4431 = vlaneseq
        %v4432 = vshrl.u32 %v4431, 7
        %v4433 = vsub.s32 %v4430, %v4432
        %v4434 = vrot.slane %v4374, %v4433
        %v4435 = vcombine.low %v4399, %v4401
        %v4436 = vcombine.low %v4403, %v3870
        %v4438 = vunpack.c.l.s4 1983009808
        %v4439 = vunpack.c.0.s8 %v4438
        %v4440 = vlaneseq
        %v4441 = vshrl.u32 %v4440, 7
        %v4442 = vsub.s32 %v4439, %v4441
        %v4443 = vrot.slane %v4435, %v4442
        %v4445 = vunpack.c.l.s4 1983009808
        %v4446 = vunpack.c.0.s8 %v4445
        %v4447 = vlaneseq
        %v4448 = vshrl.u32 %v4447, 7
        %v4449 = vsub.s32 %v4446, %v4448
        %v4450 = vrot.slane %v4436, %v4449
        %v4451 = vcombine.low %v4443, %v4450
        %v4453 = vunpack.c.l.s4 1983009808
        %v4454 = vunpack.c.0.s8 %v4453
        %v4455 = vlaneseq
        %v4456 = vshrl.u32 %v4455, 7
        %v4457 = vsub.s32 %v4454, %v4456
        %v4458 = vrot.slane 0.0, %v4457
        %v4459 = vld [vmem:[%s10] sm:$0xff]
        %v4460 = vld [vmem:[%s10 + $0x8] sm:$0xff]
        %v4461 = vld [vmem:[%s10 + $0x10] sm:$0xff]
        %v4462 = vld [vmem:[%s10 + $0x18] sm:$0xff]
        %v4463 = vld [vmem:[%s10 + $0x20] sm:$0xff]
        %v4464 = vld [vmem:[%s10 + $0x28] sm:$0xff]
        %v4465 = vld [vmem:[%s10 + $0x30] sm:$0xff]
        %v4466 = vld [vmem:[%s10 + $0x38] sm:$0xff]
        %v4467 = vld [vmem:[%s10 + $0x40] sm:$0xff]
        %v4468 = vld [vmem:[%s10 + $0x48] sm:$0xff]
        %v4469 = vld [vmem:[%s10 + $0x50] sm:$0xff]
        %v4470 = vld [vmem:[%s10 + $0x58] sm:$0xff]
        %v4471 = vld [vmem:[%s10 + $0x60] sm:$0xff]
        %v4472 = vld [vmem:[%s10 + $0x68] sm:$0xff]
        %v4473 = vld [vmem:[%s10 + $0x70] sm:$0xff]
        %v4474 = vld [vmem:[%s10 + $0x78] sm:$0xff]
        %v4475 = vld [vmem:[%s10 + $0x80] sm:$0xff]
        %v4476 = vld [vmem:[%s10 + $0x88] sm:$0xff]
        %v4477 = vld [vmem:[%s10 + $0x90] sm:$0xff]
        %v4478 = vld [vmem:[%s10 + $0x98] sm:$0xff]
        %v4479 = vld [vmem:[%s10 + $0xa0] sm:$0xff]
        %v4480 = vld [vmem:[%s10 + $0xa8] sm:$0xff]
        %v4481 = vld [vmem:[%s10 + $0xb0] sm:$0xff]
        %v4482 = vld [vmem:[%s10 + $0xb8] sm:$0xff]
        %v4483 = vld [vmem:[%s10 + $0xc0] sm:$0xff]
        %v4484 = vld [vmem:[%s10 + $0xc8] sm:$0xff]
        %v4485 = vld [vmem:[%s10 + $0xd0] sm:$0xff]
        %v4486 = vld [vmem:[%s10 + $0xd8] sm:$0xff]
        %v4487 = vld [vmem:[%s10 + $0xe0] sm:$0xff]
        %v4488 = vld [vmem:[%s10 + $0xe8] sm:$0xff]
        %v4489 = vld [vmem:[%s10 + $0xf0] sm:$0xff]
        %v4490 = vld [vmem:[%s10 + $0xf8] sm:$0xff]
        %v4491 = vld [vmem:[%s10 + $0x100] sm:$0xff]
        %v4492 = vld [vmem:[%s10 + $0x108] sm:$0xff]
        %v4493 = vld [vmem:[%s10 + $0x110] sm:$0xff]
        %v4494 = vld [vmem:[%s10 + $0x118] sm:$0xff]
        %v4495 = vld [vmem:[%s10 + $0x120] sm:$0xff]
        %v4496 = vld [vmem:[%s10 + $0x128] sm:$0xff]
        %v4497 = vld [vmem:[%s10 + $0x130] sm:$0xff]
        %v4498 = vld [vmem:[%s10 + $0x138] sm:$0xff]
        %v4499 = vld [vmem:[%s10 + $0x140] sm:$0xff]
        %v4500 = vld [vmem:[%s10 + $0x148] sm:$0xff]
        %v4501 = vld [vmem:[%s10 + $0x150] sm:$0xff]
        %v4502 = vld [vmem:[%s10 + $0x158] sm:$0xff]
        %v4503 = vld [vmem:[%s10 + $0x160] sm:$0xff]
        %v4504 = vld [vmem:[%s10 + $0x168] sm:$0xff]
        %v4505 = vld [vmem:[%s10 + $0x170] sm:$0xff]
        %v4506 = vld [vmem:[%s10 + $0x178] sm:$0xff]
        %v4507 = vld [vmem:[%s10 + $0x180] sm:$0xff]
        %v4508 = vld [vmem:[%s10 + $0x188] sm:$0xff]
        %v4509 = vld [vmem:[%s10 + $0x190] sm:$0xff]
        %v4510 = vld [vmem:[%s10 + $0x198] sm:$0xff]
        %v4511 = vld [vmem:[%s10 + $0x1a0] sm:$0xff]
        %v4512 = vld [vmem:[%s10 + $0x1a8] sm:$0xff]
        %v4513 = vld [vmem:[%s10 + $0x1b0] sm:$0xff]
        %v4514 = vld [vmem:[%s10 + $0x1b8] sm:$0xff]
        %v4515 = vld [vmem:[%s10 + $0x1c0] sm:$0xff]
        %v4516 = vld [vmem:[%s10 + $0x1c8] sm:$0xff]
        %v4517 = vld [vmem:[%s10 + $0x1d0] sm:$0xff]
        %v4518 = vld [vmem:[%s10 + $0x1d8] sm:$0xff]
        %v4519 = vld [vmem:[%s10 + $0x1e0] sm:$0xff]
        %v4520 = vld [vmem:[%s10 + $0x1e8] sm:$0xff]
        %v4521 = vld [vmem:[%s10 + $0x1f0] sm:$0xff]
        %v4522 = vld [vmem:[%s10 + $0x1f8] sm:$0xff]
        %v4523 = vld [vmem:[%s10 + $0x200] sm:$0xff]
        %v4524 = vld [vmem:[%s10 + $0x208] sm:$0xff]
        %v4525 = vld [vmem:[%s10 + $0x210] sm:$0xff]
        %v4526 = vld [vmem:[%s10 + $0x218] sm:$0xff]
        %v4527 = vld [vmem:[%s10 + $0x220] sm:$0xff]
        %v4528 = vld [vmem:[%s10 + $0x228] sm:$0xff]
        %v4529 = vld [vmem:[%s10 + $0x230] sm:$0xff]
        %v4530 = vld [vmem:[%s10 + $0x238] sm:$0xff]
        %v4531 = vcombine.low %v4427, %v4451
        %v4532 = vcombine.high %v4427, %v4451
        %v4534 = vunpack.c.l.s4 1983009808
        %v4535 = vunpack.c.0.s8 %v4534
        %v4536 = vlaneseq
        %v4537 = vshrl.u32 %v4536, 7
        %v4538 = vsub.s32 %v4535, %v4537
        %v4539 = vrot.slane %v4531, %v4538
        %v4541 = vunpack.c.l.s4 1983009808
        %v4542 = vunpack.c.0.s8 %v4541
        %v4543 = vlaneseq
        %v4544 = vshrl.u32 %v4543, 7
        %v4545 = vsub.s32 %v4542, %v4544
        %v4546 = vrot.slane %v4532, %v4545
        %v4547 = vcombine.high %v4539, %v4539
        %v4548 = vcombine.high %v4546, %v4546
        %v4549 = vcombine.low %v4434, %v4458
        %v4551 = vunpack.c.l.s4 1983009808
        %v4552 = vunpack.c.0.s8 %v4551
        %v4553 = vlaneseq
        %v4554 = vshrl.u32 %v4553, 7
        %v4555 = vsub.s32 %v4552, %v4554
        %v4556 = vrot.slane %v4549, %v4555
        %v4561 = vsel %vm2973, %v4556, 0
        %4563 = vmatprep.subr.mxu0 0.0
        %4564 = vmatpush1.msra.mxu0 %v4459
        %4565 = vmatprep.subr.mxu0 0.0
        %4566 = vmatpush1.msra.mxu0 %v4460
        %4567 = vmatprep.subr.mxu0 0.0
        %4568 = vmatpush1.msra.mxu0 %v4461
        %4569 = vmatprep.subr.mxu0 0.0
        %4570 = vmatpush1.msra.mxu0 %v4462
        %4571 = vmatprep.subr.mxu0 0.0
        %4572 = vmatpush1.msra.mxu0 %v4463
        %4573 = vmatprep.subr.mxu0 0.0
        %4574 = vmatpush1.msra.mxu0 %v4464
        %4575 = vmatprep.subr.mxu0 0.0
        %4576 = vmatpush1.msra.mxu0 %v4465
        %4577 = vmatprep.subr.mxu0 0.0
        %4578 = vmatpush1.msra.mxu0 %v4466
        %4579 = vmatprep.subr.mxu0 0.0
        %4580 = vmatpush1.msra.mxu0 %v4467
        %4581 = vmatprep.subr.mxu0 0.0
        %4582 = vmatpush1.msra.mxu0 %v4468
        %4583 = vmatprep.subr.mxu0 0.0
        %4584 = vmatpush1.msra.mxu0 %v4469
        %4585 = vmatprep.subr.mxu0 0.0
        %4586 = vmatpush1.msra.mxu0 %v4470
        %4587 = vmatprep.subr.mxu0 0.0
        %4588 = vmatpush1.msra.mxu0 %v4471
        %4589 = vmatprep.subr.mxu0 0.0
        %4590 = vmatpush1.msra.mxu0 %v4472
        %4591 = vmatprep.subr.mxu0 0.0
        %4592 = vmatpush1.msra.mxu0 %v4473
        %4593 = vmatprep.subr.mxu0 0.0
        %4594 = vmatpush1.msra.mxu0 %v4474
        %4595 = vmatprep.subr.mxu0 0.0
        %4596 = vmatpush1.msra.mxu0 %v4475
        %4597 = vmatprep.subr.mxu0 0.0
        %4598 = vmatpush1.msra.mxu0 %v4476
        %4599 = vmatprep.subr.mxu0 0.0
        %4600 = vmatpush1.msra.mxu0 %v4477
        %4601 = vmatprep.subr.mxu0 0.0
        %4602 = vmatpush1.msra.mxu0 %v4478
        %4603 = vmatprep.subr.mxu0 0.0
        %4604 = vmatpush1.msra.mxu0 %v4479
        %4605 = vmatprep.subr.mxu0 0.0
        %4606 = vmatpush1.msra.mxu0 %v4480
        %4607 = vmatprep.subr.mxu0 0.0
        %4608 = vmatpush1.msra.mxu0 %v4481
        %4609 = vmatprep.subr.mxu0 0.0
        %4610 = vmatpush1.msra.mxu0 %v4482
        %4611 = vmatprep.subr.mxu0 0.0
        %4612 = vmatpush1.msra.mxu0 %v4483
        %4613 = vmatprep.subr.mxu0 0.0
        %4614 = vmatpush1.msra.mxu0 %v4484
        %4615 = vmatprep.subr.mxu0 0.0
        %4616 = vmatpush1.msra.mxu0 %v4485
        %4617 = vmatprep.subr.mxu0 0.0
        %4618 = vmatpush1.msra.mxu0 %v4486
        %4619 = vmatprep.subr.mxu0 0.0
        %4620 = vmatpush1.msra.mxu0 %v4487
        %4621 = vmatprep.subr.mxu0 0.0
        %4622 = vmatpush1.msra.mxu0 %v4488
        %4623 = vmatprep.subr.mxu0 0.0
        %4624 = vmatpush1.msra.mxu0 %v4489
        %4625 = vmatprep.subr.mxu0 0.0
        %4626 = vmatpush1.msra.mxu0 %v4490
        %4627 = vmatprep.mubr.f32.mxu0 %v4547
        %4628 = vmatmul.mubr.f32.gmra.mrb[0].mxu0 %v4539
        %v4629 = vpop.f32.mrb[0].mxu0
        %v4630 = vadd.f32 0.0, %v4629
        %v4631 = vpop.f32.mrb[0].mxu0
        %4632 = vdwg.mxu0
        %4633 = vmatprep.subr.mxu0 0.0
        %4634 = vmatpush1.msra.mxu0 %v4491
        %4635 = vmatprep.subr.mxu0 0.0
        %4636 = vmatpush1.msra.mxu0 %v4492
        %4637 = vmatprep.subr.mxu0 0.0
        %4638 = vmatpush1.msra.mxu0 %v4493
        %4639 = vmatprep.subr.mxu0 0.0
        %4640 = vmatpush1.msra.mxu0 %v4494
        %4641 = vmatprep.subr.mxu0 0.0
        %4642 = vmatpush1.msra.mxu0 %v4495
        %4643 = vmatprep.subr.mxu0 0.0
        %4644 = vmatpush1.msra.mxu0 %v4496
        %4645 = vmatprep.subr.mxu0 0.0
        %4646 = vmatpush1.msra.mxu0 %v4497
        %4647 = vmatprep.subr.mxu0 0.0
        %4648 = vmatpush1.msra.mxu0 %v4498
        %4649 = vmatprep.subr.mxu0 0.0
        %4650 = vmatpush1.msra.mxu0 %v4499
        %4651 = vmatprep.subr.mxu0 0.0
        %4652 = vmatpush1.msra.mxu0 %v4500
        %4653 = vmatprep.subr.mxu0 0.0
        %4654 = vmatpush1.msra.mxu0 %v4501
        %4655 = vmatprep.subr.mxu0 0.0
        %4656 = vmatpush1.msra.mxu0 %v4502
        %4657 = vmatprep.subr.mxu0 0.0
        %4658 = vmatpush1.msra.mxu0 %v4503
        %4659 = vmatprep.subr.mxu0 0.0
        %4660 = vmatpush1.msra.mxu0 %v4504
        %4661 = vmatprep.subr.mxu0 0.0
        %4662 = vmatpush1.msra.mxu0 %v4505
        %4663 = vmatprep.subr.mxu0 0.0
        %4664 = vmatpush1.msra.mxu0 %v4506
        %4665 = vmatprep.subr.mxu0 0.0
        %4666 = vmatpush1.msra.mxu0 %v4507
        %4667 = vmatprep.subr.mxu0 0.0
        %4668 = vmatpush1.msra.mxu0 %v4508
        %4669 = vmatprep.subr.mxu0 0.0
        %4670 = vmatpush1.msra.mxu0 %v4509
        %4671 = vmatprep.subr.mxu0 0.0
        %4672 = vmatpush1.msra.mxu0 %v4510
        %4673 = vmatprep.subr.mxu0 0.0
        %4674 = vmatpush1.msra.mxu0 %v4511
        %4675 = vmatprep.subr.mxu0 0.0
        %4676 = vmatpush1.msra.mxu0 %v4512
        %4677 = vmatprep.subr.mxu0 0.0
        %4678 = vmatpush1.msra.mxu0 %v4513
        %4679 = vmatprep.subr.mxu0 0.0
        %4680 = vmatpush1.msra.mxu0 %v4514
        %4681 = vmatprep.subr.mxu0 0.0
        %4682 = vmatpush1.msra.mxu0 %v4515
        %4683 = vmatprep.subr.mxu0 0.0
        %4684 = vmatpush1.msra.mxu0 %v4516
        %4685 = vmatprep.subr.mxu0 0.0
        %4686 = vmatpush1.msra.mxu0 %v4517
        %4687 = vmatprep.subr.mxu0 0.0
        %4688 = vmatpush1.msra.mxu0 %v4518
        %4689 = vmatprep.subr.mxu0 0.0
        %4690 = vmatpush1.msra.mxu0 %v4519
        %4691 = vmatprep.subr.mxu0 0.0
        %4692 = vmatpush1.msra.mxu0 %v4520
        %4693 = vmatprep.subr.mxu0 0.0
        %4694 = vmatpush1.msra.mxu0 %v4521
        %4695 = vmatprep.subr.mxu0 0.0
        %4696 = vmatpush1.msra.mxu0 %v4522
        %4697 = vmatprep.mubr.f32.mxu0 %v4548
        %4698 = vmatmul.mubr.f32.gmra.mrb[0].mxu0 %v4546
        %v4699 = vpop.f32.mrb[0].mxu0
        %v4700 = vadd.f32 %v4630, %v4699
        %v4701 = vpop.f32.mrb[0].mxu0
        %4702 = vdwg.mxu0
        %4703 = vmatprep.subr.mxu0 0.0
        %4704 = vmatpush1.msra.mxu0 %v4523
        %4705 = vmatprep.subr.mxu0 0.0
        %4706 = vmatpush1.msra.mxu0 %v4524
        %4707 = vmatprep.subr.mxu0 0.0
        %4708 = vmatpush1.msra.mxu0 %v4525
        %4709 = vmatprep.subr.mxu0 0.0
        %4710 = vmatpush1.msra.mxu0 %v4526
        %4711 = vmatprep.subr.mxu0 0.0
        %4712 = vmatpush1.msra.mxu0 %v4527
        %4713 = vmatprep.subr.mxu0 0.0
        %4714 = vmatpush1.msra.mxu0 %v4528
        %4715 = vmatprep.subr.mxu0 0.0
        %4716 = vmatpush1.msra.mxu0 %v4529
        %4717 = vmatprep.subr.mxu0 0.0
        %4718 = vmatpush1.msra.mxu0 %v4530
        %4719 = vmatprep.subr.mxu0 0.0
        %4720 = vmatpush1.msra.mxu0 0.0
        %4721 = vmatprep.subr.mxu0 0.0
        %4722 = vmatpush1.msra.mxu0 0.0
        %4723 = vmatprep.subr.mxu0 0.0
        %4724 = vmatpush1.msra.mxu0 0.0
        %4725 = vmatprep.subr.mxu0 0.0
        %4726 = vmatpush1.msra.mxu0 0.0
        %4727 = vmatprep.subr.mxu0 0.0
        %4728 = vmatpush1.msra.mxu0 0.0
        %4729 = vmatprep.subr.mxu0 0.0
        %4730 = vmatpush1.msra.mxu0 0.0
        %4731 = vmatprep.subr.mxu0 0.0
        %4732 = vmatpush1.msra.mxu0 0.0
        %4733 = vmatprep.subr.mxu0 0.0
        %4734 = vmatpush1.msra.mxu0 0.0
        %4735 = vmatprep.subr.mxu0 0.0
        %4736 = vmatpush1.msra.mxu0 0.0
        %4737 = vmatprep.subr.mxu0 0.0
        %4738 = vmatpush1.msra.mxu0 0.0
        %4739 = vmatprep.subr.mxu0 0.0
        %4740 = vmatpush1.msra.mxu0 0.0
        %4741 = vmatprep.subr.mxu0 0.0
        %4742 = vmatpush1.msra.mxu0 0.0
        %4743 = vmatprep.subr.mxu0 0.0
        %4744 = vmatpush1.msra.mxu0 0.0
        %4745 = vmatprep.subr.mxu0 0.0
        %4746 = vmatpush1.msra.mxu0 0.0
        %4747 = vmatprep.subr.mxu0 0.0
        %4748 = vmatpush1.msra.mxu0 0.0
        %4749 = vmatprep.subr.mxu0 0.0
        %4750 = vmatpush1.msra.mxu0 0.0
        %4751 = vmatprep.subr.mxu0 0.0
        %4752 = vmatpush1.msra.mxu0 0.0
        %4753 = vmatprep.subr.mxu0 0.0
        %4754 = vmatpush1.msra.mxu0 0.0
        %4755 = vmatprep.subr.mxu0 0.0
        %4756 = vmatpush1.msra.mxu0 0.0
        %4757 = vmatprep.subr.mxu0 0.0
        %4758 = vmatpush1.msra.mxu0 0.0
        %4759 = vmatprep.subr.mxu0 0.0
        %4760 = vmatpush1.msra.mxu0 0.0
        %4761 = vmatprep.subr.mxu0 0.0
        %4762 = vmatpush1.msra.mxu0 0.0
        %4763 = vmatprep.subr.mxu0 0.0
        %4764 = vmatpush1.msra.mxu0 0.0
        %4765 = vmatprep.subr.mxu0 0.0
        %4766 = vmatpush1.msra.mxu0 0.0
        %4767 = vmatprep.mubr.f32.mxu0 0.0
        %4768 = vmatmul.mubr.f32.gmra.mrb[0].mxu0 %v4561
        %v4769 = vpop.f32.mrb[0].mxu0
        %v4770 = vadd.f32 %v4700, %v4769
        %v4771 = vpop.f32.mrb[0].mxu0
        %4772 = vdwg.mxu0
        %v4773 = vld [vmem:[%s11] sm:$0x1]
        %v4774 = vld [vmem:[%s12] sm:$0x1]
        %v4776 = vlaneseq
        %v4777 = vshrl.u32 %v4776, 7
        %v4778 = vsub.s32 0, %v4777
        %v4779 = vrot.slane %v4773, %v4778
        %v4781 = vmul.f32 %v4770, %v4779
        %v4783 = vlaneseq
        %v4784 = vshrl.u32 %v4783, 7
        %v4785 = vsub.s32 0, %v4784
        %v4786 = vrot.slane %v4774, %v4785
        %v4788 = vadd.f32 %v4781, %v4786
        %v4789 = vmax.f32 %v4788, 0.0
        %v4792 = vunpack.c.l.s4 1983009808
        %v4793 = vunpack.c.0.s8 %v4792
        %v4794 = vlaneseq
        %v4795 = vshrl.u32 %v4794, 7
        %v4796 = vsub.s32 %v4793, %v4795
        %v4797 = vrot.slane %v4789, %v4796
        %v4798 = vcombine.high %v4797, %v4797
        %vm4801 = vcmask 1041408
        %v4802 = vsel %vm4801, %v4797, -inf
        %v4803 = vrot.slane %v4802, 4
        %v4804 = vmax.f32 %v4802, %v4803
        %v4805 = vrot.slane %v4804, 2
        %v4806 = vmax.f32 %v4804, %v4805
        %v4807 = vrot.slane %v4806, 1
        %v4808 = vmax.f32 %v4806, %v4807
        %v4809 = vsel %vm4801, %v4798, -inf
        %v4810 = vrot.slane %v4809, 4
        %v4811 = vmax.f32 %v4809, %v4810
        %v4812 = vrot.slane %v4811, 2
        %v4813 = vmax.f32 %v4811, %v4812
        %v4814 = vrot.slane %v4813, 1
        %v4815 = vmax.f32 %v4813, %v4814
        %v4816 = vmax.f32 %v4808, %v4815
        %4817 = vst [vmem:[%s432] sm:$0x1] %v4816
        %s4818 = sand.u32 %s313, 1
        %s4819 = scalar_lea.sflag [#allocation6], %s4818
        %s4820 = sand.u32 %s313, 1
        %s4821 = scalar_lea.vmem [#allocation5], %s4820
        // Predicated region
        $region73: #{cnn_forward.1} parent=71 // pred_check
          %p4822 = pneg %p323
        $region74: #{cnn_forward.1} parent=71 // pred_check_branch
          %4824 = sbr.rel (%p4822) target = $region76
        $region75: #{cnn_forward.1} parent=71 // pred_region
          %s4826 = ssub.s32 16, 16
          %4827 = vsyncadd %s4819, %s4826
          %s4828 = smul.addr %s27, 16
          %s4829 = scalar_lea.hbm %s13, %s4828
          %s4831 = sshll.u32 %s4821, 4
          %s4832 = int_to_ptr.vmem [resolvable:$true] %s4831
          %4834 = dma.vmem_to_hbm [thread:$0]  %s4832, 16, %s4829, %s4819
        $region76: #{cnn_forward.1} parent=71 // pred_fallthru
          _
      $region72: #{cnn_forward.1} parent=5 // pred_fallthru
        _
      %p4835 = scmp.le.s32.totalorder 2, %s22
      // Predicated region
      $region77: #{cnn_forward.1} parent=5 // pred_check
        %p4836 = pneg %p4835
      $region78: #{cnn_forward.1} parent=5 // pred_check_branch
        %4838 = sbr.rel (%p4836) target = $region80
      $region79: #{cnn_forward.1} parent=5 // pred_region
        %s4839 = ssub.s32 %s22, 2
        // Predicated region
        $region81: #{cnn_forward.1} parent=79 // pred_check
          %p4840 = pneg %p329
        $region82: #{cnn_forward.1} parent=79 // pred_check_branch
          %4842 = sbr.rel (%p4840) target = $region84
        $region83: #{cnn_forward.1} parent=79 // pred_region
          %s4843 = sand.u32 %s314, 1
          %s4844 = scalar_lea.sflag [#allocation6], %s4843
          %s4845 = sand.u32 %s314, 1
          %s4846 = scalar_lea.vmem [#allocation5], %s4845
          %4847 = dma.done %s4844, 16
        $region84: #{cnn_forward.1} parent=79 // pred_fallthru
          _
      $region80: #{cnn_forward.1} parent=5 // pred_fallthru
        _
    $region6: #{cnn_forward.1} parent=1 // loop_footer
      %s26 = sadd.s32 1, %s22
    $region7: #{cnn_forward.1} parent=1 // loop_footer_branch
      %21 = sbr.rel target = $region3
    $region8: #{cnn_forward.1} parent=1 // loop_exit
      _
    %4848 = vsyncpa [#allocation6], 1
    %s4849 = scalar_lea.sflag [#allocation6], 1
    %4850 = vsyncpa %s4849, 1

</llo_original>
